<compile_context>
chip_gen: v7x
topology: tpu7x:2x2x1
jax: 0.10.0
libtpu: 0.0.40
codegen_flags: <defaults>
</compile_context>

<pallas_src>
import jax
import jax.numpy as jnp
from jax.experimental import pallas as pl
from jax.experimental.pallas import tpu as pltpu

IN_DIM = 28 * 28   # 784
HID = 512
OUT_DIM = 10
OUT_PAD = 128      # lane-dense padded output width


def _round_up(n: int, m: int) -> int:
    return ((n + m - 1) // m) * m


def mlp_kernel(x_ref, w1_ref, b12_ref, w2_ref, w3_ref, b3_ref, o_ref):
    # x tile: (TB, 784) f32; weights: bf16; biases: f32.
    b12 = b12_ref[...]                       # (2, HID) f32

    # layer_1: Dense + tanh  (MXU bf16 in, f32 accumulate)
    h1 = jnp.tanh(
        jnp.dot(x_ref[...].astype(jnp.bfloat16), w1_ref[...],
                preferred_element_type=jnp.float32)
        + b12[0:1, :]
    )
    # layer_2: Dense + tanh
    h2 = jnp.tanh(
        jnp.dot(h1.astype(jnp.bfloat16), w2_ref[...],
                preferred_element_type=jnp.float32)
        + b12[1:2, :]
    )
    # out: Dense + sigmoid (padded to 128 lanes; extra cols are zeros -> sliced away outside)
    logits = (
        jnp.dot(h2.astype(jnp.bfloat16), w3_ref[...],
                preferred_element_type=jnp.float32)
        + b3_ref[...]
    )
    o_ref[...] = jax.nn.sigmoid(logits)


def prepare_params(w1, b1, w2, b2, w3, b3):
    """One-time packing of f32 params into the kernel layout:
    bf16 weights, fused (2, HID) hidden biases, lane-padded output layer."""
    w1b = w1.astype(jnp.bfloat16)
    w2b = w2.astype(jnp.bfloat16)
    w3p = jnp.pad(w3, ((0, 0), (0, OUT_PAD - OUT_DIM))).astype(jnp.bfloat16)
    b12 = jnp.concatenate(
        [b1.reshape(1, HID), b2.reshape(1, HID)], axis=0
    ).astype(jnp.float32)
    b3p = jnp.pad(b3.reshape(1, OUT_DIM),
                  ((0, 0), (0, OUT_PAD - OUT_DIM))).astype(jnp.float32)
    return w1b, b12, w2b, w3p, b3p


def mlp_forward(x, w1b, b12, w2b, w3p, b3p, *, tb: int = 256):
    B = x.shape[0]
    # Tile size: multiple of 8 sublanes; shrink for tiny batches, pad B up to it.
    tb = min(tb, _round_up(B, 8))
    Bp = _round_up(B, tb)
    xp = x if Bp == B else jnp.pad(x, ((0, Bp - B), (0, 0)))

    grid = (Bp // tb,)
    out = pl.pallas_call(
        mlp_kernel,
        out_shape=jax.ShapeDtypeStruct((Bp, OUT_PAD), jnp.float32),
        grid_spec=pltpu.PrefetchScalarGridSpec(
            num_scalar_prefetch=0,
            grid=grid,
            in_specs=[
                # batch tile of activations: streams through the pipeline
                pl.BlockSpec((tb, IN_DIM), lambda i: (i, 0)),
                # weights/biases: constant block index -> fetched once, VMEM-resident
                pl.BlockSpec((IN_DIM, HID), lambda i: (0, 0)),
                pl.BlockSpec((2, HID), lambda i: (0, 0)),
                pl.BlockSpec((HID, HID), lambda i: (0, 0)),
                pl.BlockSpec((HID, OUT_PAD), lambda i: (0, 0)),
                pl.BlockSpec((1, OUT_PAD), lambda i: (0, 0)),
            ],
            out_specs=pl.BlockSpec((tb, OUT_PAD), lambda i: (i, 0)),
        ),
        compiler_params=pltpu.CompilerParams(
            dimension_semantics=("parallel",),          # v7x dual-TC split
            vmem_limit_bytes=32 * 1024 * 1024,          # fits v5e/v6e/v7x budgets
        ),
    )(xp, w1b, b12, w2b, w3p, b3p)
    # drop batch padding and the lane padding of the 10-class output
    return out[:B, :OUT_DIM]


def init_params(key):
    """Deterministic parameter init mirroring the module's __init__:
    RandomUniform weights, Constant(0.1) bias for the two hidden layers;
    default init (uniform weights, zero bias) for the output layer."""
    k1, k2, k3 = jax.random.split(key, 3)
    lo, hi = -0.05, 0.05  # init.RandomUniform default range
    w1 = jax.random.uniform(k1, (IN_DIM, HID), jnp.float32, lo, hi)
    b1 = jnp.full((1, HID), 0.1, jnp.float32)          # init.Constant(0.1)
    w2 = jax.random.uniform(k2, (HID, HID), jnp.float32, lo, hi)
    b2 = jnp.full((1, HID), 0.1, jnp.float32)          # init.Constant(0.1)
    w3 = jax.random.uniform(k3, (HID, OUT_DIM), jnp.float32, lo, hi)
    b3 = jnp.zeros((1, OUT_DIM), jnp.float32)          # default bias init
    return w1, b1, w2, b2, w3, b3


if __name__ == "__main__":
    key = jax.random.PRNGKey(0)
    kx, kp = jax.random.split(key)

    B = 512  # two 256-row tiles -> exercises the batch grid + resident weights
    x = jax.random.normal(kx, (B, IN_DIM), jnp.float32)
    w1, b1, w2, b2, w3, b3 = init_params(kp)
    packed = prepare_params(w1, b1, w2, b2, w3, b3)

    out = mlp_forward(x, *packed, tb=256)
    out = jax.block_until_ready(out)

    # sanity: shape and sigmoid range
    assert out.shape == (B, OUT_DIM)
    assert bool(jnp.all((out >= 0.0) & (out <= 1.0)))

    # cross-check against plain f32 JAX reference (kernel uses bf16 weights,
    # so tolerance is relaxed vs. the previous pure-f32 version)
    h1 = jnp.tanh(x @ w1 + b1)
    h2 = jnp.tanh(h1 @ w2 + b2)
    ref = jax.nn.sigmoid(h2 @ w3 + b3)
    assert bool(jnp.allclose(out, ref, atol=2e-2, rtol=2e-2))

    print("KERNEL_OK")
</pallas_src>

<mosaic_0001>
module attributes {stable_mosaic.version = 11 : i64} {
  func.func @mlp_kernel(%arg0: i32, %arg1: memref<256x784xf32, #tpu.memory_space<vmem>>, %arg2: memref<784x512xbf16, #tpu.memory_space<vmem>>, %arg3: memref<2x512xf32, #tpu.memory_space<vmem>>, %arg4: memref<512x512xbf16, #tpu.memory_space<vmem>>, %arg5: memref<512x128xbf16, #tpu.memory_space<vmem>>, %arg6: memref<1x128xf32, #tpu.memory_space<vmem>>, %arg7: memref<256x128xf32, #tpu.memory_space<vmem>>) attributes {dimension_semantics = [#tpu.dimension_semantics<parallel>], iteration_bounds = array<i64: 2>, scalar_prefetch = 0 : i64, scratch_operands = 0 : i64, tpu.core_type = #tpu.core_type<tc>, window_params = [{transform_indices = @transform_0, window_bounds = array<i64: 256, 784>}, {pipeline_mode = #tpu.pipeline_mode<synchronous>, transform_indices = @transform_1, window_bounds = array<i64: 784, 512>}, {pipeline_mode = #tpu.pipeline_mode<synchronous>, transform_indices = @transform_2, window_bounds = array<i64: 2, 512>}, {pipeline_mode = #tpu.pipeline_mode<synchronous>, transform_indices = @transform_3, window_bounds = array<i64: 512, 512>}, {pipeline_mode = #tpu.pipeline_mode<synchronous>, transform_indices = @transform_4, window_bounds = array<i64: 512, 128>}, {pipeline_mode = #tpu.pipeline_mode<synchronous>, transform_indices = @transform_5, window_bounds = array<i64: 1, 128>}, {transform_indices = @transform_6, window_bounds = array<i64: 256, 128>}]} {
    %c0 = arith.constant 0 : index
    %c0_0 = arith.constant 0 : index
    %0 = vector.load %arg3[%c0, %c0_0] : memref<2x512xf32, #tpu.memory_space<vmem>>, vector<2x512xf32>
    %c0_1 = arith.constant 0 : index
    %c0_2 = arith.constant 0 : index
    %1 = vector.load %arg1[%c0_1, %c0_2] : memref<256x784xf32, #tpu.memory_space<vmem>>, vector<256x784xf32>
    %2 = arith.truncf %1 : vector<256x784xf32> to vector<256x784xbf16>
    %c0_3 = arith.constant 0 : index
    %c0_4 = arith.constant 0 : index
    %3 = vector.load %arg2[%c0_3, %c0_4] : memref<784x512xbf16, #tpu.memory_space<vmem>>, vector<784x512xbf16>
    %cst = arith.constant dense<0.000000e+00> : vector<256x512xf32>
    %4 = tpu.matmul %2, %3, %cst {dimension_numbers = #tpu.dot_dimension_numbers<[1], [0], [0], [1], [0, 0, 1, 1], [], []>} : vector<256x784xbf16>, vector<784x512xbf16>, vector<256x512xf32> -> vector<256x512xf32>
    %5 = vector.extract_strided_slice %0 {offsets = [0, 0], sizes = [1, 512], strides = [1, 1]} : vector<2x512xf32> to vector<1x512xf32>
    %6 = vector.broadcast %5 : vector<1x512xf32> to vector<256x512xf32>
    %7 = arith.addf %4, %6 : vector<256x512xf32>
    %8 = math.tanh %7 : vector<256x512xf32>
    %9 = arith.truncf %8 : vector<256x512xf32> to vector<256x512xbf16>
    %c0_5 = arith.constant 0 : index
    %c0_6 = arith.constant 0 : index
    %10 = vector.load %arg4[%c0_5, %c0_6] : memref<512x512xbf16, #tpu.memory_space<vmem>>, vector<512x512xbf16>
    %cst_7 = arith.constant dense<0.000000e+00> : vector<256x512xf32>
    %11 = tpu.matmul %9, %10, %cst_7 {dimension_numbers = #tpu.dot_dimension_numbers<[1], [0], [0], [1], [0, 0, 1, 1], [], []>} : vector<256x512xbf16>, vector<512x512xbf16>, vector<256x512xf32> -> vector<256x512xf32>
    %12 = vector.extract_strided_slice %0 {offsets = [1, 0], sizes = [1, 512], strides = [1, 1]} : vector<2x512xf32> to vector<1x512xf32>
    %13 = vector.broadcast %12 : vector<1x512xf32> to vector<256x512xf32>
    %14 = arith.addf %11, %13 : vector<256x512xf32>
    %15 = math.tanh %14 : vector<256x512xf32>
    %16 = arith.truncf %15 : vector<256x512xf32> to vector<256x512xbf16>
    %c0_8 = arith.constant 0 : index
    %c0_9 = arith.constant 0 : index
    %17 = vector.load %arg5[%c0_8, %c0_9] : memref<512x128xbf16, #tpu.memory_space<vmem>>, vector<512x128xbf16>
    %cst_10 = arith.constant dense<0.000000e+00> : vector<256x128xf32>
    %18 = tpu.matmul %16, %17, %cst_10 {dimension_numbers = #tpu.dot_dimension_numbers<[1], [0], [0], [1], [0, 0, 1, 1], [], []>} : vector<256x512xbf16>, vector<512x128xbf16>, vector<256x128xf32> -> vector<256x128xf32>
    %c0_11 = arith.constant 0 : index
    %c0_12 = arith.constant 0 : index
    %19 = vector.load %arg6[%c0_11, %c0_12] : memref<1x128xf32, #tpu.memory_space<vmem>>, vector<1x128xf32>
    %20 = vector.broadcast %19 : vector<1x128xf32> to vector<256x128xf32>
    %21 = arith.addf %18, %20 : vector<256x128xf32>
    %22 = arith.negf %21 : vector<256x128xf32>
    %23 = math.exp %22 : vector<256x128xf32>
    %cst_13 = arith.constant 1.000000e+00 : f32
    %24 = vector.broadcast %cst_13 : f32 to vector<256x128xf32>
    %25 = arith.addf %24, %23 : vector<256x128xf32>
    %26 = arith.divf %24, %25 : vector<256x128xf32>
    %c0_14 = arith.constant 0 : index
    %c0_15 = arith.constant 0 : index
    %27 = vector.load %arg7[%c0_14, %c0_15] : memref<256x128xf32, #tpu.memory_space<vmem>>, vector<256x128xf32>
    tpu.vector_store %arg7[%c0_14, %c0_15], %26 {strides = array<i32>} : memref<256x128xf32, #tpu.memory_space<vmem>>, vector<256x128xf32>,
    return
  }
  func.func @transform_0(%arg0: i32) -> (i32, i32) {
    %c0_i32 = arith.constant 0 : i32
    %c0_i32_0 = arith.constant 0 : i32
    return %arg0, %c0_i32 : i32, i32
  }
  func.func @transform_1(%arg0: i32) -> (i32, i32) {
    %c0_i32 = arith.constant 0 : i32
    %c0_i32_0 = arith.constant 0 : i32
    %c0_i32_1 = arith.constant 0 : i32
    return %c0_i32, %c0_i32_0 : i32, i32
  }
  func.func @transform_2(%arg0: i32) -> (i32, i32) {
    %c0_i32 = arith.constant 0 : i32
    %c0_i32_0 = arith.constant 0 : i32
    %c0_i32_1 = arith.constant 0 : i32
    return %c0_i32, %c0_i32_0 : i32, i32
  }
  func.func @transform_3(%arg0: i32) -> (i32, i32) {
    %c0_i32 = arith.constant 0 : i32
    %c0_i32_0 = arith.constant 0 : i32
    %c0_i32_1 = arith.constant 0 : i32
    return %c0_i32, %c0_i32_0 : i32, i32
  }
  func.func @transform_4(%arg0: i32) -> (i32, i32) {
    %c0_i32 = arith.constant 0 : i32
    %c0_i32_0 = arith.constant 0 : i32
    %c0_i32_1 = arith.constant 0 : i32
    return %c0_i32, %c0_i32_0 : i32, i32
  }
  func.func @transform_5(%arg0: i32) -> (i32, i32) {
    %c0_i32 = arith.constant 0 : i32
    %c0_i32_0 = arith.constant 0 : i32
    %c0_i32_1 = arith.constant 0 : i32
    return %c0_i32, %c0_i32_0 : i32, i32
  }
  func.func @transform_6(%arg0: i32) -> (i32, i32) {
    %c0_i32 = arith.constant 0 : i32
    %c0_i32_0 = arith.constant 0 : i32
    return %arg0, %c0_i32 : i32, i32
  }
}

</mosaic_0001>

<llo_original>
// kernel: tpu_custom_call.1
$region0: #{tpu_custom_call.1}
  #allocation0 [shape = 'u32[]', space=smem, size = 0x4, offset = 0x4, fixed_abs, tag = 'smem constant byte address 0x4 - core index']
  #allocation1 [shape = 'u32[144,128]{1,0:T(1,128)}', space=vmem, size = 0x12000, scoped, tag = 'internal scratch']
  %s0 = inlined_call_operand.vmem [shape: f32[512,784], index: 0, kind: input, shape index: {}]
  %s1 = inlined_call_operand.vmem [shape: bf16[784,512], index: 1, kind: input, shape index: {}]
  %s2 = inlined_call_operand.vmem [shape: f32[2,512], index: 2, kind: input, shape index: {}]
  %s3 = inlined_call_operand.vmem [shape: bf16[512,512], index: 3, kind: input, shape index: {}]
  %s4 = inlined_call_operand.vmem [shape: bf16[512,128], index: 4, kind: input, shape index: {}]
  %s5 = inlined_call_operand.vmem [shape: f32[1,128], index: 5, kind: input, shape index: {}]
  %s6 = inlined_call_operand.hbm [shape: f32[512,128], index: 6, kind: output, shape index: {}]
  %s7 = sld [smem:[#allocation0]]
  $region57: #{tpu_custom_call.1} parent=0
    _
  %s9 = ssub.s32 1, %s7
  %s10 = scalar_select 0, %s9, %s7
  $region1: #{tpu_custom_call.1} parent=0
    #allocation2 [shape = 'u8[262144]{0}', space=vmem, size = 0x40000, scoped, tag = 'output window, operand 0']
    #allocation3 [shape = 's32[2]{0}', space=sflag, size = 0x8, scoped, tag = 'scoped memory for tpu_custom_call.1']
    %11 = vsyncpa [#allocation3], 0
    %s12 = scalar_lea.sflag [#allocation3], 1
    %13 = vsyncpa %s12, 0
    loop: start=0, step=1, limit=4
    $region2: #{tpu_custom_call.1} parent=1 // loop_pre_header
      _
    $region3: #{tpu_custom_call.1} parent=1 // loop_header
      %s15 = sphi 0, %s19
      %p16 = scmp.ge.s32.totalorder %s15, 4
      %s25 = sphi 0, %s27
      %s28 = sphi 0, %s25
      %s29 = sphi 0, %s28
      %s45 = sphi 0, %s29
      %s49 = sphi 0, %s49
      %s51 = sphi 0, %s49
      %s52 = sphi 0, %s51
      %s66 = sphi 0, %s52
      %s70 = sphi 0, %s70
      %s72 = sphi 0, %s70
      %s73 = sphi 0, %s72
      %s87 = sphi 0, %s73
      %s91 = sphi 0, %s91
      %s93 = sphi 0, %s91
      %s94 = sphi 0, %s93
      %s108 = sphi 0, %s94
      %s112 = sphi 0, %s112
      %s114 = sphi 0, %s112
      %s115 = sphi 0, %s114
      %s129 = sphi 0, %s115
      %s133 = sphi 0, %s133
      %s135 = sphi 0, %s133
      %s136 = sphi 0, %s135
      %s150 = sphi 0, %s136
      %s156 = sphi 0, %s158
      %s159 = sphi 0, %s156
      %s160 = sphi 0, %s159
      %s176 = sphi 0, %s160
    $region4: #{tpu_custom_call.1} parent=1 // loop_header_branch
      %18 = sbr.rel (%p16) target = $region8
    $region5: #{tpu_custom_call.1} parent=1 // loop_body
      %s20 = ssub.s32 %s15, 1
      %s21 = ssub.s32 %s15, 2
      %s22 = sadd.s32 %s15, 1
      %s23 = ssub.s32 %s15, %s22
      %p24 = scmp.eq.s32.totalorder %s23, 0
      %s26 = sadd.s32 %s25, 1
      %s27 = scalar_select %p24, %s25, %s26
      %p30 = pneg %p24
      %p31 = scmp.eq.s32.totalorder %s15, 1
      %p32 = por %p30, %p31
      %p33 = scmp.ne.s32.totalorder %s25, %s28
      %p34 = scmp.eq.s32.totalorder %s15, 0
      %p35 = por %p33, %p34
      %p36 = scmp.ne.s32.totalorder %s25, %s28
      %p37 = scmp.eq.s32.totalorder %s20, 1
      %p38 = por %p36, %p37
      %p39 = scmp.ne.s32.totalorder %s28, %s29
      %p40 = scmp.eq.s32.totalorder %s20, 0
      %p41 = por %p39, %p40
      %p42 = scmp.ne.s32.totalorder %s28, %s29
      %p43 = scmp.eq.s32.totalorder %s21, 1
      %p44 = por %p42, %p43
      %p46 = scmp.ne.s32.totalorder %s29, %s45
      %p47 = scmp.eq.s32.totalorder %s21, 0
      %p48 = por %p46, %p47
      %s50 = sadd.s32 %s49, 1
      %p53 = scmp.eq.s32.totalorder %s15, 1
      %p54 = scmp.ne.s32.totalorder %s49, %s51
      %p55 = scmp.eq.s32.totalorder %s15, 0
      %p56 = por %p54, %p55
      %p57 = scmp.ne.s32.totalorder %s49, %s51
      %p58 = scmp.eq.s32.totalorder %s20, 1
      %p59 = por %p57, %p58
      %p60 = scmp.ne.s32.totalorder %s51, %s52
      %p61 = scmp.eq.s32.totalorder %s20, 0
      %p62 = por %p60, %p61
      %p63 = scmp.ne.s32.totalorder %s51, %s52
      %p64 = scmp.eq.s32.totalorder %s21, 1
      %p65 = por %p63, %p64
      %p67 = scmp.ne.s32.totalorder %s52, %s66
      %p68 = scmp.eq.s32.totalorder %s21, 0
      %p69 = por %p67, %p68
      %s71 = sadd.s32 %s70, 1
      %p74 = scmp.eq.s32.totalorder %s15, 1
      %p75 = scmp.ne.s32.totalorder %s70, %s72
      %p76 = scmp.eq.s32.totalorder %s15, 0
      %p77 = por %p75, %p76
      %p78 = scmp.ne.s32.totalorder %s70, %s72
      %p79 = scmp.eq.s32.totalorder %s20, 1
      %p80 = por %p78, %p79
      %p81 = scmp.ne.s32.totalorder %s72, %s73
      %p82 = scmp.eq.s32.totalorder %s20, 0
      %p83 = por %p81, %p82
      %p84 = scmp.ne.s32.totalorder %s72, %s73
      %p85 = scmp.eq.s32.totalorder %s21, 1
      %p86 = por %p84, %p85
      %p88 = scmp.ne.s32.totalorder %s73, %s87
      %p89 = scmp.eq.s32.totalorder %s21, 0
      %p90 = por %p88, %p89
      %s92 = sadd.s32 %s91, 1
      %p95 = scmp.eq.s32.totalorder %s15, 1
      %p96 = scmp.ne.s32.totalorder %s91, %s93
      %p97 = scmp.eq.s32.totalorder %s15, 0
      %p98 = por %p96, %p97
      %p99 = scmp.ne.s32.totalorder %s91, %s93
      %p100 = scmp.eq.s32.totalorder %s20, 1
      %p101 = por %p99, %p100
      %p102 = scmp.ne.s32.totalorder %s93, %s94
      %p103 = scmp.eq.s32.totalorder %s20, 0
      %p104 = por %p102, %p103
      %p105 = scmp.ne.s32.totalorder %s93, %s94
      %p106 = scmp.eq.s32.totalorder %s21, 1
      %p107 = por %p105, %p106
      %p109 = scmp.ne.s32.totalorder %s94, %s108
      %p110 = scmp.eq.s32.totalorder %s21, 0
      %p111 = por %p109, %p110
      %s113 = sadd.s32 %s112, 1
      %p116 = scmp.eq.s32.totalorder %s15, 1
      %p117 = scmp.ne.s32.totalorder %s112, %s114
      %p118 = scmp.eq.s32.totalorder %s15, 0
      %p119 = por %p117, %p118
      %p120 = scmp.ne.s32.totalorder %s112, %s114
      %p121 = scmp.eq.s32.totalorder %s20, 1
      %p122 = por %p120, %p121
      %p123 = scmp.ne.s32.totalorder %s114, %s115
      %p124 = scmp.eq.s32.totalorder %s20, 0
      %p125 = por %p123, %p124
      %p126 = scmp.ne.s32.totalorder %s114, %s115
      %p127 = scmp.eq.s32.totalorder %s21, 1
      %p128 = por %p126, %p127
      %p130 = scmp.ne.s32.totalorder %s115, %s129
      %p131 = scmp.eq.s32.totalorder %s21, 0
      %p132 = por %p130, %p131
      %s134 = sadd.s32 %s133, 1
      %p137 = scmp.eq.s32.totalorder %s15, 1
      %p138 = scmp.ne.s32.totalorder %s133, %s135
      %p139 = scmp.eq.s32.totalorder %s15, 0
      %p140 = por %p138, %p139
      %p141 = scmp.ne.s32.totalorder %s133, %s135
      %p142 = scmp.eq.s32.totalorder %s20, 1
      %p143 = por %p141, %p142
      %p144 = scmp.ne.s32.totalorder %s135, %s136
      %p145 = scmp.eq.s32.totalorder %s20, 0
      %p146 = por %p144, %p145
      %p147 = scmp.ne.s32.totalorder %s135, %s136
      %p148 = scmp.eq.s32.totalorder %s21, 1
      %p149 = por %p147, %p148
      %p151 = scmp.ne.s32.totalorder %s136, %s150
      %p152 = scmp.eq.s32.totalorder %s21, 0
      %p153 = por %p151, %p152
      %s154 = ssub.s32 %s15, %s22
      %p155 = scmp.eq.s32.totalorder %s154, 0
      %s157 = sadd.s32 %s156, 1
      %s158 = scalar_select %p155, %s156, %s157
      %p161 = pneg %p155
      %p162 = scmp.eq.s32.totalorder %s15, 1
      %p163 = por %p161, %p162
      %p164 = scmp.ne.s32.totalorder %s156, %s159
      %p165 = scmp.eq.s32.totalorder %s15, 0
      %p166 = por %p164, %p165
      %p167 = scmp.ne.s32.totalorder %s156, %s159
      %p168 = scmp.eq.s32.totalorder %s20, 1
      %p169 = por %p167, %p168
      %p170 = scmp.ne.s32.totalorder %s159, %s160
      %p171 = scmp.eq.s32.totalorder %s20, 0
      %p172 = por %p170, %p171
      %p173 = scmp.ne.s32.totalorder %s159, %s160
      %p174 = scmp.eq.s32.totalorder %s21, 1
      %p175 = por %p173, %p174
      %p177 = scmp.ne.s32.totalorder %s160, %s176
      %p178 = scmp.eq.s32.totalorder %s21, 0
      %p179 = por %p177, %p178
      %p180 = scmp.le.s32.totalorder 1, %s15
      %p181 = scmp.lt.s32.totalorder %s15, 3
      %p182 = pnand %p180, %p181
      %p183 = pneg %p182
      // Predicated region
      $region9: #{tpu_custom_call.1} parent=5 // pred_check
        _
      $region10: #{tpu_custom_call.1} parent=5 // pred_check_branch
        %185 = sbr.rel (%p182) target = $region12
      $region11: #{tpu_custom_call.1} parent=5 // pred_region
        %s186 = ssub.s32 %s15, 1
        // Predicated region
        $region13: #{tpu_custom_call.1} parent=11 // pred_check
          %p187 = pneg %p62
        $region14: #{tpu_custom_call.1} parent=11 // pred_check_branch
          %189 = sbr.rel (%p187) target = $region16
        $region15: #{tpu_custom_call.1} parent=11 // pred_region
          _
        $region16: #{tpu_custom_call.1} parent=11 // pred_fallthru
          _
        // Predicated region
        $region17: #{tpu_custom_call.1} parent=11 // pred_check
          %p190 = pneg %p83
        $region18: #{tpu_custom_call.1} parent=11 // pred_check_branch
          %192 = sbr.rel (%p190) target = $region20
        $region19: #{tpu_custom_call.1} parent=11 // pred_region
          _
        $region20: #{tpu_custom_call.1} parent=11 // pred_fallthru
          _
        // Predicated region
        $region21: #{tpu_custom_call.1} parent=11 // pred_check
          %p193 = pneg %p104
        $region22: #{tpu_custom_call.1} parent=11 // pred_check_branch
          %195 = sbr.rel (%p193) target = $region24
        $region23: #{tpu_custom_call.1} parent=11 // pred_region
          _
        $region24: #{tpu_custom_call.1} parent=11 // pred_fallthru
          _
        // Predicated region
        $region25: #{tpu_custom_call.1} parent=11 // pred_check
          %p196 = pneg %p125
        $region26: #{tpu_custom_call.1} parent=11 // pred_check_branch
          %198 = sbr.rel (%p196) target = $region28
        $region27: #{tpu_custom_call.1} parent=11 // pred_region
          _
        $region28: #{tpu_custom_call.1} parent=11 // pred_fallthru
          _
        // Predicated region
        $region29: #{tpu_custom_call.1} parent=11 // pred_check
          %p199 = pneg %p146
        $region30: #{tpu_custom_call.1} parent=11 // pred_check_branch
          %201 = sbr.rel (%p199) target = $region32
        $region31: #{tpu_custom_call.1} parent=11 // pred_region
          _
        $region32: #{tpu_custom_call.1} parent=11 // pred_fallthru
          _
      $region12: #{tpu_custom_call.1} parent=5 // pred_fallthru
        _
      %p202 = scmp.lt.s32.totalorder %s15, 2
      // Predicated region
      $region33: #{tpu_custom_call.1} parent=5 // pred_check
        %p203 = pneg %p202
      $region34: #{tpu_custom_call.1} parent=5 // pred_check_branch
        %205 = sbr.rel (%p203) target = $region36
      $region35: #{tpu_custom_call.1} parent=5 // pred_region
        // Predicated region
        $region37: #{tpu_custom_call.1} parent=35 // pred_check
          %p206 = pneg %p35
        $region38: #{tpu_custom_call.1} parent=35 // pred_check_branch
          %208 = sbr.rel (%p206) target = $region40
        $region39: #{tpu_custom_call.1} parent=35 // pred_region
          %s209 = smul.u32 32, %s15
          %p210 = scmp.lt.s32.totalorder %s209, 63
          %s211 = scalar_select %p210, %s209, 63
          %s212 = smul.addr %s211, 7
          %s213 = smul.addr %s212, 8
          %s214 = scalar_lea.vmem %s0, %s213
          %s215 = smul.u32 32, %s15
        $region40: #{tpu_custom_call.1} parent=35 // pred_fallthru
          _
      $region36: #{tpu_custom_call.1} parent=5 // pred_fallthru
        _
      %p216 = scmp.le.s32.totalorder 1, %s15
      %p217 = scmp.lt.s32.totalorder %s15, 3
      %p218 = pnand %p216, %p217
      %p219 = pneg %p218
      // Predicated region
      $region41: #{tpu_custom_call.1} parent=5 // pred_check
        _
      $region42: #{tpu_custom_call.1} parent=5 // pred_check_branch
        %221 = sbr.rel (%p218) target = $region44
      $region43: #{tpu_custom_call.1} parent=5 // pred_region
        %s222 = ssub.s32 %s15, 1
        %s223 = smul.u32 32, %s20
        %p224 = scmp.lt.s32.totalorder %s223, 63
        %s225 = scalar_select %p224, %s223, 63
        %s226 = smul.addr %s225, 7
        %s227 = smul.addr %s226, 8
        %s228 = scalar_lea.vmem %s0, %s227
        %p229 = pneg %p41
        %p230 = pneg %p38
        %p231 = pneg %p62
        %p232 = pneg %p59
        %p233 = pneg %p83
        %p234 = pneg %p80
        %p235 = pneg %p104
        %p236 = pneg %p101
        %p237 = pneg %p125
        %p238 = pneg %p122
        %p239 = pneg %p146
        %p240 = pneg %p143
        %p241 = pneg %p172
        %p242 = pneg %p169
        %s243 = sand.u32 %s159, 1
        %s244 = scalar_lea.sflag [#allocation3], %s243
        %s245 = sand.u32 %s159, 1
        %s246 = smul.addr %s245, 256
        %s247 = scalar_lea.vmem [#allocation2], %s246
        %s248 = smul.u32 32, %s20
        %p249 = scmp.lt.s32.totalorder %s248, 63
        %s250 = scalar_select %p249, %s248, 63
        %s251 = smul.addr %s250, 7
        %s252 = smul.addr %s251, 8
        %s253 = scalar_lea.vmem %s0, %s252
        %s254 = smul.u32 32, %s20
        %s255 = smul.u32 32, %s20
        %v257 = vld [vmem:[%s2] sm:$0xff]
        %v258 = vld [vmem:[%s253] sm:$0xff]
        %v259 = vld [vmem:[%s253 + $0x8] sm:$0xff]
        %v260 = vld [vmem:[%s253 + $0x10] sm:$0xff]
        %v261 = vld [vmem:[%s253 + $0x18] sm:$0xff]
        %v262 = vld [vmem:[%s253 + $0x20] sm:$0xff]
        %v263 = vld [vmem:[%s253 + $0x28] sm:$0xff]
        %v264 = vld [vmem:[%s253 + $0x30] sm:$0xff]
        %v265 = vld [vmem:[%s253 + $0x38] sm:$0xff]
        %v266 = vld [vmem:[%s253 + $0x40] sm:$0xff]
        %v267 = vld [vmem:[%s253 + $0x48] sm:$0xff]
        %v268 = vld [vmem:[%s253 + $0x50] sm:$0xff]
        %v269 = vld [vmem:[%s253 + $0x58] sm:$0xff]
        %v270 = vld [vmem:[%s253 + $0x60] sm:$0xff]
        %v271 = vld [vmem:[%s253 + $0x68] sm:$0xff]
        %v272 = vld [vmem:[%s253 + $0x70] sm:$0xff]
        %v273 = vld [vmem:[%s253 + $0x78] sm:$0xff]
        %v274 = vld [vmem:[%s253 + $0x80] sm:$0xff]
        %v275 = vld [vmem:[%s253 + $0x88] sm:$0xff]
        %v276 = vld [vmem:[%s253 + $0x90] sm:$0xff]
        %v277 = vld [vmem:[%s253 + $0x98] sm:$0xff]
        %v278 = vld [vmem:[%s253 + $0xa0] sm:$0xff]
        %v279 = vld [vmem:[%s253 + $0xa8] sm:$0xff]
        %v280 = vld [vmem:[%s253 + $0xb0] sm:$0xff]
        %v281 = vld [vmem:[%s253 + $0xb8] sm:$0xff]
        %v282 = vld [vmem:[%s253 + $0xc0] sm:$0xff]
        %v283 = vld [vmem:[%s253 + $0xc8] sm:$0xff]
        %v284 = vld [vmem:[%s253 + $0xd0] sm:$0xff]
        %v285 = vld [vmem:[%s253 + $0xd8] sm:$0xff]
        %v286 = vld [vmem:[%s253 + $0xe0] sm:$0xff]
        %v287 = vld [vmem:[%s253 + $0xe8] sm:$0xff]
        %v288 = vld [vmem:[%s253 + $0xf0] sm:$0xff]
        %v289 = vld [vmem:[%s253 + $0xf8] sm:$0xff]
        %v290 = vld [vmem:[%s253 + $0x100] sm:$0xff]
        %v291 = vld [vmem:[%s253 + $0x108] sm:$0xff]
        %v292 = vld [vmem:[%s253 + $0x110] sm:$0xff]
        %v293 = vld [vmem:[%s253 + $0x118] sm:$0xff]
        %v294 = vld [vmem:[%s253 + $0x120] sm:$0xff]
        %v295 = vld [vmem:[%s253 + $0x128] sm:$0xff]
        %v296 = vld [vmem:[%s253 + $0x130] sm:$0xff]
        %v297 = vld [vmem:[%s253 + $0x138] sm:$0xff]
        %v298 = vld [vmem:[%s253 + $0x140] sm:$0xff]
        %v299 = vld [vmem:[%s253 + $0x148] sm:$0xff]
        %v300 = vld [vmem:[%s253 + $0x150] sm:$0xff]
        %v301 = vld [vmem:[%s253 + $0x158] sm:$0xff]
        %v302 = vld [vmem:[%s253 + $0x160] sm:$0xff]
        %v303 = vld [vmem:[%s253 + $0x168] sm:$0xff]
        %v304 = vld [vmem:[%s253 + $0x170] sm:$0xff]
        %v305 = vld [vmem:[%s253 + $0x178] sm:$0xff]
        %v306 = vld [vmem:[%s253 + $0x180] sm:$0xff]
        %v307 = vld [vmem:[%s253 + $0x188] sm:$0xff]
        %v308 = vld [vmem:[%s253 + $0x190] sm:$0xff]
        %v309 = vld [vmem:[%s253 + $0x198] sm:$0xff]
        %v310 = vld [vmem:[%s253 + $0x1a0] sm:$0xff]
        %v311 = vld [vmem:[%s253 + $0x1a8] sm:$0xff]
        %v312 = vld [vmem:[%s253 + $0x1b0] sm:$0xff]
        %v313 = vld [vmem:[%s253 + $0x1b8] sm:$0xff]
        %v314 = vld [vmem:[%s253 + $0x1c0] sm:$0xff]
        %v315 = vld [vmem:[%s253 + $0x1c8] sm:$0xff]
        %v316 = vld [vmem:[%s253 + $0x1d0] sm:$0xff]
        %v317 = vld [vmem:[%s253 + $0x1d8] sm:$0xff]
        %v318 = vld [vmem:[%s253 + $0x1e0] sm:$0xff]
        %v319 = vld [vmem:[%s253 + $0x1e8] sm:$0xff]
        %v320 = vld [vmem:[%s253 + $0x1f0] sm:$0xff]
        %v321 = vld [vmem:[%s253 + $0x1f8] sm:$0xff]
        %v322 = vld [vmem:[%s253 + $0x200] sm:$0xff]
        %v323 = vld [vmem:[%s253 + $0x208] sm:$0xff]
        %v324 = vld [vmem:[%s253 + $0x210] sm:$0xff]
        %v325 = vld [vmem:[%s253 + $0x218] sm:$0xff]
        %v326 = vld [vmem:[%s253 + $0x220] sm:$0xff]
        %v327 = vld [vmem:[%s253 + $0x228] sm:$0xff]
        %v328 = vld [vmem:[%s253 + $0x230] sm:$0xff]
        %v329 = vld [vmem:[%s253 + $0x238] sm:$0xff]
        %v330 = vld [vmem:[%s253 + $0x240] sm:$0xff]
        %v331 = vld [vmem:[%s253 + $0x248] sm:$0xff]
        %v332 = vld [vmem:[%s253 + $0x250] sm:$0xff]
        %v333 = vld [vmem:[%s253 + $0x258] sm:$0xff]
        %v334 = vld [vmem:[%s253 + $0x260] sm:$0xff]
        %v335 = vld [vmem:[%s253 + $0x268] sm:$0xff]
        %v336 = vld [vmem:[%s253 + $0x270] sm:$0xff]
        %v337 = vld [vmem:[%s253 + $0x278] sm:$0xff]
        %v338 = vld [vmem:[%s253 + $0x280] sm:$0xff]
        %v339 = vld [vmem:[%s253 + $0x288] sm:$0xff]
        %v340 = vld [vmem:[%s253 + $0x290] sm:$0xff]
        %v341 = vld [vmem:[%s253 + $0x298] sm:$0xff]
        %v342 = vld [vmem:[%s253 + $0x2a0] sm:$0xff]
        %v343 = vld [vmem:[%s253 + $0x2a8] sm:$0xff]
        %v344 = vld [vmem:[%s253 + $0x2b0] sm:$0xff]
        %v345 = vld [vmem:[%s253 + $0x2b8] sm:$0xff]
        %v346 = vld [vmem:[%s253 + $0x2c0] sm:$0xff]
        %v347 = vld [vmem:[%s253 + $0x2c8] sm:$0xff]
        %v348 = vld [vmem:[%s253 + $0x2d0] sm:$0xff]
        %v349 = vld [vmem:[%s253 + $0x2d8] sm:$0xff]
        %v350 = vld [vmem:[%s253 + $0x2e0] sm:$0xff]
        %v351 = vld [vmem:[%s253 + $0x2e8] sm:$0xff]
        %v352 = vld [vmem:[%s253 + $0x2f0] sm:$0xff]
        %v353 = vld [vmem:[%s253 + $0x2f8] sm:$0xff]
        %v354 = vld [vmem:[%s253 + $0x300] sm:$0xff]
        %v355 = vld [vmem:[%s253 + $0x308] sm:$0xff]
        %v356 = vld [vmem:[%s253 + $0x310] sm:$0xff]
        %v357 = vld [vmem:[%s253 + $0x318] sm:$0xff]
        %v358 = vld [vmem:[%s253 + $0x320] sm:$0xff]
        %v359 = vld [vmem:[%s253 + $0x328] sm:$0xff]
        %v360 = vld [vmem:[%s253 + $0x330] sm:$0xff]
        %v361 = vld [vmem:[%s253 + $0x338] sm:$0xff]
        %v362 = vld [vmem:[%s253 + $0x340] sm:$0xff]
        %v363 = vld [vmem:[%s253 + $0x348] sm:$0xff]
        %v364 = vld [vmem:[%s253 + $0x350] sm:$0xff]
        %v365 = vld [vmem:[%s253 + $0x358] sm:$0xff]
        %v366 = vld [vmem:[%s253 + $0x360] sm:$0xff]
        %v367 = vld [vmem:[%s253 + $0x368] sm:$0xff]
        %v368 = vld [vmem:[%s253 + $0x370] sm:$0xff]
        %v369 = vld [vmem:[%s253 + $0x378] sm:$0xff]
        %v370 = vld [vmem:[%s253 + $0x380] sm:$0xff]
        %v371 = vld [vmem:[%s253 + $0x388] sm:$0xff]
        %v372 = vld [vmem:[%s253 + $0x390] sm:$0xff]
        %v373 = vld [vmem:[%s253 + $0x398] sm:$0xff]
        %v374 = vld [vmem:[%s253 + $0x3a0] sm:$0xff]
        %v375 = vld [vmem:[%s253 + $0x3a8] sm:$0xff]
        %v376 = vld [vmem:[%s253 + $0x3b0] sm:$0xff]
        %v377 = vld [vmem:[%s253 + $0x3b8] sm:$0xff]
        %v378 = vld [vmem:[%s253 + $0x3c0] sm:$0xff]
        %v379 = vld [vmem:[%s253 + $0x3c8] sm:$0xff]
        %v380 = vld [vmem:[%s253 + $0x3d0] sm:$0xff]
        %v381 = vld [vmem:[%s253 + $0x3d8] sm:$0xff]
        %v382 = vld [vmem:[%s253 + $0x3e0] sm:$0xff]
        %v383 = vld [vmem:[%s253 + $0x3e8] sm:$0xff]
        %v384 = vld [vmem:[%s253 + $0x3f0] sm:$0xff]
        %v385 = vld [vmem:[%s253 + $0x3f8] sm:$0xff]
        %v386 = vld [vmem:[%s253 + $0x400] sm:$0xff]
        %v387 = vld [vmem:[%s253 + $0x408] sm:$0xff]
        %v388 = vld [vmem:[%s253 + $0x410] sm:$0xff]
        %v389 = vld [vmem:[%s253 + $0x418] sm:$0xff]
        %v390 = vld [vmem:[%s253 + $0x420] sm:$0xff]
        %v391 = vld [vmem:[%s253 + $0x428] sm:$0xff]
        %v392 = vld [vmem:[%s253 + $0x430] sm:$0xff]
        %v393 = vld [vmem:[%s253 + $0x438] sm:$0xff]
        %v394 = vld [vmem:[%s253 + $0x440] sm:$0xff]
        %v395 = vld [vmem:[%s253 + $0x448] sm:$0xff]
        %v396 = vld [vmem:[%s253 + $0x450] sm:$0xff]
        %v397 = vld [vmem:[%s253 + $0x458] sm:$0xff]
        %v398 = vld [vmem:[%s253 + $0x460] sm:$0xff]
        %v399 = vld [vmem:[%s253 + $0x468] sm:$0xff]
        %v400 = vld [vmem:[%s253 + $0x470] sm:$0xff]
        %v401 = vld [vmem:[%s253 + $0x478] sm:$0xff]
        %v402 = vld [vmem:[%s253 + $0x480] sm:$0xff]
        %v403 = vld [vmem:[%s253 + $0x488] sm:$0xff]
        %v404 = vld [vmem:[%s253 + $0x490] sm:$0xff]
        %v405 = vld [vmem:[%s253 + $0x498] sm:$0xff]
        %v406 = vld [vmem:[%s253 + $0x4a0] sm:$0xff]
        %v407 = vld [vmem:[%s253 + $0x4a8] sm:$0xff]
        %v408 = vld [vmem:[%s253 + $0x4b0] sm:$0xff]
        %v409 = vld [vmem:[%s253 + $0x4b8] sm:$0xff]
        %v410 = vld [vmem:[%s253 + $0x4c0] sm:$0xff]
        %v411 = vld [vmem:[%s253 + $0x4c8] sm:$0xff]
        %v412 = vld [vmem:[%s253 + $0x4d0] sm:$0xff]
        %v413 = vld [vmem:[%s253 + $0x4d8] sm:$0xff]
        %v414 = vld [vmem:[%s253 + $0x4e0] sm:$0xff]
        %v415 = vld [vmem:[%s253 + $0x4e8] sm:$0xff]
        %v416 = vld [vmem:[%s253 + $0x4f0] sm:$0xff]
        %v417 = vld [vmem:[%s253 + $0x4f8] sm:$0xff]
        %v418 = vld [vmem:[%s253 + $0x500] sm:$0xff]
        %v419 = vld [vmem:[%s253 + $0x508] sm:$0xff]
        %v420 = vld [vmem:[%s253 + $0x510] sm:$0xff]
        %v421 = vld [vmem:[%s253 + $0x518] sm:$0xff]
        %v422 = vld [vmem:[%s253 + $0x520] sm:$0xff]
        %v423 = vld [vmem:[%s253 + $0x528] sm:$0xff]
        %v424 = vld [vmem:[%s253 + $0x530] sm:$0xff]
        %v425 = vld [vmem:[%s253 + $0x538] sm:$0xff]
        %v426 = vld [vmem:[%s253 + $0x540] sm:$0xff]
        %v427 = vld [vmem:[%s253 + $0x548] sm:$0xff]
        %v428 = vld [vmem:[%s253 + $0x550] sm:$0xff]
        %v429 = vld [vmem:[%s253 + $0x558] sm:$0xff]
        %v430 = vld [vmem:[%s253 + $0x560] sm:$0xff]
        %v431 = vld [vmem:[%s253 + $0x568] sm:$0xff]
        %v432 = vld [vmem:[%s253 + $0x570] sm:$0xff]
        %v433 = vld [vmem:[%s253 + $0x578] sm:$0xff]
        %v434 = vld [vmem:[%s253 + $0x580] sm:$0xff]
        %v435 = vld [vmem:[%s253 + $0x588] sm:$0xff]
        %v436 = vld [vmem:[%s253 + $0x590] sm:$0xff]
        %v437 = vld [vmem:[%s253 + $0x598] sm:$0xff]
        %v438 = vld [vmem:[%s253 + $0x5a0] sm:$0xff]
        %v439 = vld [vmem:[%s253 + $0x5a8] sm:$0xff]
        %v440 = vld [vmem:[%s253 + $0x5b0] sm:$0xff]
        %v441 = vld [vmem:[%s253 + $0x5b8] sm:$0xff]
        %v442 = vld [vmem:[%s253 + $0x5c0] sm:$0xff]
        %v443 = vld [vmem:[%s253 + $0x5c8] sm:$0xff]
        %v444 = vld [vmem:[%s253 + $0x5d0] sm:$0xff]
        %v445 = vld [vmem:[%s253 + $0x5d8] sm:$0xff]
        %v446 = vld [vmem:[%s253 + $0x5e0] sm:$0xff]
        %v447 = vld [vmem:[%s253 + $0x5e8] sm:$0xff]
        %v448 = vld [vmem:[%s253 + $0x5f0] sm:$0xff]
        %v449 = vld [vmem:[%s253 + $0x5f8] sm:$0xff]
        %v450 = vld [vmem:[%s253 + $0x600] sm:$0xff]
        %v451 = vld [vmem:[%s253 + $0x608] sm:$0xff]
        %v452 = vld [vmem:[%s253 + $0x610] sm:$0xff]
        %v453 = vld [vmem:[%s253 + $0x618] sm:$0xff]
        %v454 = vld [vmem:[%s253 + $0x620] sm:$0xff]
        %v455 = vld [vmem:[%s253 + $0x628] sm:$0xff]
        %v456 = vld [vmem:[%s253 + $0x630] sm:$0xff]
        %v457 = vld [vmem:[%s253 + $0x638] sm:$0xff]
        %v458 = vld [vmem:[%s253 + $0x640] sm:$0xff]
        %v459 = vld [vmem:[%s253 + $0x648] sm:$0xff]
        %v460 = vld [vmem:[%s253 + $0x650] sm:$0xff]
        %v461 = vld [vmem:[%s253 + $0x658] sm:$0xff]
        %v462 = vld [vmem:[%s253 + $0x660] sm:$0xff]
        %v463 = vld [vmem:[%s253 + $0x668] sm:$0xff]
        %v464 = vld [vmem:[%s253 + $0x670] sm:$0xff]
        %v465 = vld [vmem:[%s253 + $0x678] sm:$0xff]
        %v466 = vld [vmem:[%s253 + $0x680] sm:$0xff]
        %v467 = vld [vmem:[%s253 + $0x688] sm:$0xff]
        %v468 = vld [vmem:[%s253 + $0x690] sm:$0xff]
        %v469 = vld [vmem:[%s253 + $0x698] sm:$0xff]
        %v470 = vld [vmem:[%s253 + $0x6a0] sm:$0xff]
        %v471 = vld [vmem:[%s253 + $0x6a8] sm:$0xff]
        %v472 = vld [vmem:[%s253 + $0x6b0] sm:$0xff]
        %v473 = vld [vmem:[%s253 + $0x6b8] sm:$0xff]
        %v474 = vld [vmem:[%s253 + $0x6c0] sm:$0xff]
        %v475 = vld [vmem:[%s253 + $0x6c8] sm:$0xff]
        %v476 = vld [vmem:[%s253 + $0x6d0] sm:$0xff]
        %v477 = vld [vmem:[%s253 + $0x6d8] sm:$0xff]
        %v478 = vld [vmem:[%s253 + $0x6e0] sm:$0xff]
        %v479 = vld [vmem:[%s253 + $0x6e8] sm:$0xff]
        %v480 = vld [vmem:[%s253 + $0x6f0] sm:$0xff]
        %v481 = vld [vmem:[%s253 + $0x6f8] sm:$0xff]
        %v482 = vpack.c.bf16 %v265, %v258
        %v483 = vpack.c.bf16 %v266, %v259
        %v484 = vpack.c.bf16 %v267, %v260
        %v485 = vpack.c.bf16 %v268, %v261
        %v486 = vpack.c.bf16 %v269, %v262
        %v487 = vpack.c.bf16 %v270, %v263
        %v488 = vpack.c.bf16 %v271, %v264
        %v489 = vpack.c.bf16 %v279, %v272
        %v490 = vpack.c.bf16 %v280, %v273
        %v491 = vpack.c.bf16 %v281, %v274
        %v492 = vpack.c.bf16 %v282, %v275
        %v493 = vpack.c.bf16 %v283, %v276
        %v494 = vpack.c.bf16 %v284, %v277
        %v495 = vpack.c.bf16 %v285, %v278
        %v496 = vpack.c.bf16 %v293, %v286
        %v497 = vpack.c.bf16 %v294, %v287
        %v498 = vpack.c.bf16 %v295, %v288
        %v499 = vpack.c.bf16 %v296, %v289
        %v500 = vpack.c.bf16 %v297, %v290
        %v501 = vpack.c.bf16 %v298, %v291
        %v502 = vpack.c.bf16 %v299, %v292
        %v503 = vpack.c.bf16 %v307, %v300
        %v504 = vpack.c.bf16 %v308, %v301
        %v505 = vpack.c.bf16 %v309, %v302
        %v506 = vpack.c.bf16 %v310, %v303
        %v507 = vpack.c.bf16 %v311, %v304
        %v508 = vpack.c.bf16 %v312, %v305
        %v509 = vpack.c.bf16 %v313, %v306
        %v510 = vpack.c.bf16 %v321, %v314
        %v511 = vpack.c.bf16 %v322, %v315
        %v512 = vpack.c.bf16 %v323, %v316
        %v513 = vpack.c.bf16 %v324, %v317
        %v514 = vpack.c.bf16 %v325, %v318
        %v515 = vpack.c.bf16 %v326, %v319
        %v516 = vpack.c.bf16 %v327, %v320
        %v517 = vpack.c.bf16 %v335, %v328
        %v518 = vpack.c.bf16 %v336, %v329
        %v519 = vpack.c.bf16 %v337, %v330
        %v520 = vpack.c.bf16 %v338, %v331
        %v521 = vpack.c.bf16 %v339, %v332
        %v522 = vpack.c.bf16 %v340, %v333
        %v523 = vpack.c.bf16 %v341, %v334
        %v524 = vpack.c.bf16 %v349, %v342
        %v525 = vpack.c.bf16 %v350, %v343
        %v526 = vpack.c.bf16 %v351, %v344
        %v527 = vpack.c.bf16 %v352, %v345
        %v528 = vpack.c.bf16 %v353, %v346
        %v529 = vpack.c.bf16 %v354, %v347
        %v530 = vpack.c.bf16 %v355, %v348
        %v531 = vpack.c.bf16 %v363, %v356
        %v532 = vpack.c.bf16 %v364, %v357
        %v533 = vpack.c.bf16 %v365, %v358
        %v534 = vpack.c.bf16 %v366, %v359
        %v535 = vpack.c.bf16 %v367, %v360
        %v536 = vpack.c.bf16 %v368, %v361
        %v537 = vpack.c.bf16 %v369, %v362
        %v538 = vpack.c.bf16 %v377, %v370
        %v539 = vpack.c.bf16 %v378, %v371
        %v540 = vpack.c.bf16 %v379, %v372
        %v541 = vpack.c.bf16 %v380, %v373
        %v542 = vpack.c.bf16 %v381, %v374
        %v543 = vpack.c.bf16 %v382, %v375
        %v544 = vpack.c.bf16 %v383, %v376
        %v545 = vpack.c.bf16 %v391, %v384
        %v546 = vpack.c.bf16 %v392, %v385
        %v547 = vpack.c.bf16 %v393, %v386
        %v548 = vpack.c.bf16 %v394, %v387
        %v549 = vpack.c.bf16 %v395, %v388
        %v550 = vpack.c.bf16 %v396, %v389
        %v551 = vpack.c.bf16 %v397, %v390
        %v552 = vpack.c.bf16 %v405, %v398
        %v553 = vpack.c.bf16 %v406, %v399
        %v554 = vpack.c.bf16 %v407, %v400
        %v555 = vpack.c.bf16 %v408, %v401
        %v556 = vpack.c.bf16 %v409, %v402
        %v557 = vpack.c.bf16 %v410, %v403
        %v558 = vpack.c.bf16 %v411, %v404
        %v559 = vpack.c.bf16 %v419, %v412
        %v560 = vpack.c.bf16 %v420, %v413
        %v561 = vpack.c.bf16 %v421, %v414
        %v562 = vpack.c.bf16 %v422, %v415
        %v563 = vpack.c.bf16 %v423, %v416
        %v564 = vpack.c.bf16 %v424, %v417
        %v565 = vpack.c.bf16 %v425, %v418
        %v566 = vpack.c.bf16 %v433, %v426
        %v567 = vpack.c.bf16 %v434, %v427
        %v568 = vpack.c.bf16 %v435, %v428
        %v569 = vpack.c.bf16 %v436, %v429
        %v570 = vpack.c.bf16 %v437, %v430
        %v571 = vpack.c.bf16 %v438, %v431
        %v572 = vpack.c.bf16 %v439, %v432
        %v573 = vpack.c.bf16 %v447, %v440
        %v574 = vpack.c.bf16 %v448, %v441
        %v575 = vpack.c.bf16 %v449, %v442
        %v576 = vpack.c.bf16 %v450, %v443
        %v577 = vpack.c.bf16 %v451, %v444
        %v578 = vpack.c.bf16 %v452, %v445
        %v579 = vpack.c.bf16 %v453, %v446
        %v580 = vpack.c.bf16 %v461, %v454
        %v581 = vpack.c.bf16 %v462, %v455
        %v582 = vpack.c.bf16 %v463, %v456
        %v583 = vpack.c.bf16 %v464, %v457
        %v584 = vpack.c.bf16 %v465, %v458
        %v585 = vpack.c.bf16 %v466, %v459
        %v586 = vpack.c.bf16 %v467, %v460
        %v587 = vpack.c.bf16 %v475, %v468
        %v588 = vpack.c.bf16 %v476, %v469
        %v589 = vpack.c.bf16 %v477, %v470
        %v590 = vpack.c.bf16 %v478, %v471
        %v591 = vpack.c.bf16 %v479, %v472
        %v592 = vpack.c.bf16 %v480, %v473
        %v593 = vpack.c.bf16 %v481, %v474
        %v594 = vld [vmem:[%s1] sm:$0xff]
        %v595 = vld [vmem:[%s1 + $0x8] sm:$0xff]
        %v596 = vld [vmem:[%s1 + $0x10] sm:$0xff]
        %v597 = vld [vmem:[%s1 + $0x18] sm:$0xff]
        %v598 = vld [vmem:[%s1 + $0x20] sm:$0xff]
        %v599 = vld [vmem:[%s1 + $0x28] sm:$0xff]
        %v600 = vld [vmem:[%s1 + $0x30] sm:$0xff]
        %v601 = vld [vmem:[%s1 + $0x38] sm:$0xff]
        %v602 = vld [vmem:[%s1 + $0x40] sm:$0xff]
        %v603 = vld [vmem:[%s1 + $0x48] sm:$0xff]
        %v604 = vld [vmem:[%s1 + $0x50] sm:$0xff]
        %v605 = vld [vmem:[%s1 + $0x58] sm:$0xff]
        %v606 = vld [vmem:[%s1 + $0x60] sm:$0xff]
        %v607 = vld [vmem:[%s1 + $0x68] sm:$0xff]
        %v608 = vld [vmem:[%s1 + $0x70] sm:$0xff]
        %v609 = vld [vmem:[%s1 + $0x78] sm:$0xff]
        %v610 = vld [vmem:[%s1 + $0x80] sm:$0xff]
        %v611 = vld [vmem:[%s1 + $0x88] sm:$0xff]
        %v612 = vld [vmem:[%s1 + $0x90] sm:$0xff]
        %v613 = vld [vmem:[%s1 + $0x98] sm:$0xff]
        %v614 = vld [vmem:[%s1 + $0xa0] sm:$0xff]
        %v615 = vld [vmem:[%s1 + $0xa8] sm:$0xff]
        %v616 = vld [vmem:[%s1 + $0xb0] sm:$0xff]
        %v617 = vld [vmem:[%s1 + $0xb8] sm:$0xff]
        %v618 = vld [vmem:[%s1 + $0xc0] sm:$0xff]
        %v619 = vld [vmem:[%s1 + $0xc8] sm:$0xff]
        %v620 = vld [vmem:[%s1 + $0xd0] sm:$0xff]
        %v621 = vld [vmem:[%s1 + $0xd8] sm:$0xff]
        %v622 = vld [vmem:[%s1 + $0xe0] sm:$0xff]
        %v623 = vld [vmem:[%s1 + $0xe8] sm:$0xff]
        %v624 = vld [vmem:[%s1 + $0xf0] sm:$0xff]
        %v625 = vld [vmem:[%s1 + $0xf8] sm:$0xff]
        %v626 = vld [vmem:[%s1 + $0x100] sm:$0xff]
        %v627 = vld [vmem:[%s1 + $0x108] sm:$0xff]
        %v628 = vld [vmem:[%s1 + $0x110] sm:$0xff]
        %v629 = vld [vmem:[%s1 + $0x118] sm:$0xff]
        %v630 = vld [vmem:[%s1 + $0x120] sm:$0xff]
        %v631 = vld [vmem:[%s1 + $0x128] sm:$0xff]
        %v632 = vld [vmem:[%s1 + $0x130] sm:$0xff]
        %v633 = vld [vmem:[%s1 + $0x138] sm:$0xff]
        %v634 = vld [vmem:[%s1 + $0x140] sm:$0xff]
        %v635 = vld [vmem:[%s1 + $0x148] sm:$0xff]
        %v636 = vld [vmem:[%s1 + $0x150] sm:$0xff]
        %v637 = vld [vmem:[%s1 + $0x158] sm:$0xff]
        %v638 = vld [vmem:[%s1 + $0x160] sm:$0xff]
        %v639 = vld [vmem:[%s1 + $0x168] sm:$0xff]
        %v640 = vld [vmem:[%s1 + $0x170] sm:$0xff]
        %v641 = vld [vmem:[%s1 + $0x178] sm:$0xff]
        %v642 = vld [vmem:[%s1 + $0x180] sm:$0xff]
        %v643 = vld [vmem:[%s1 + $0x188] sm:$0xff]
        %v644 = vld [vmem:[%s1 + $0x190] sm:$0xff]
        %v645 = vld [vmem:[%s1 + $0x198] sm:$0xff]
        %v646 = vld [vmem:[%s1 + $0x1a0] sm:$0xff]
        %v647 = vld [vmem:[%s1 + $0x1a8] sm:$0xff]
        %v648 = vld [vmem:[%s1 + $0x1b0] sm:$0xff]
        %v649 = vld [vmem:[%s1 + $0x1b8] sm:$0xff]
        %v650 = vld [vmem:[%s1 + $0x1c0] sm:$0xff]
        %v651 = vld [vmem:[%s1 + $0x1c8] sm:$0xff]
        %v652 = vld [vmem:[%s1 + $0x1d0] sm:$0xff]
        %v653 = vld [vmem:[%s1 + $0x1d8] sm:$0xff]
        %v654 = vld [vmem:[%s1 + $0x1e0] sm:$0xff]
        %v655 = vld [vmem:[%s1 + $0x1e8] sm:$0xff]
        %v656 = vld [vmem:[%s1 + $0x1f0] sm:$0xff]
        %v657 = vld [vmem:[%s1 + $0x1f8] sm:$0xff]
        %v658 = vld [vmem:[%s1 + $0x200] sm:$0xff]
        %v659 = vld [vmem:[%s1 + $0x208] sm:$0xff]
        %v660 = vld [vmem:[%s1 + $0x210] sm:$0xff]
        %v661 = vld [vmem:[%s1 + $0x218] sm:$0xff]
        %v662 = vld [vmem:[%s1 + $0x220] sm:$0xff]
        %v663 = vld [vmem:[%s1 + $0x228] sm:$0xff]
        %v664 = vld [vmem:[%s1 + $0x230] sm:$0xff]
        %v665 = vld [vmem:[%s1 + $0x238] sm:$0xff]
        %v666 = vld [vmem:[%s1 + $0x240] sm:$0xff]
        %v667 = vld [vmem:[%s1 + $0x248] sm:$0xff]
        %v668 = vld [vmem:[%s1 + $0x250] sm:$0xff]
        %v669 = vld [vmem:[%s1 + $0x258] sm:$0xff]
        %v670 = vld [vmem:[%s1 + $0x260] sm:$0xff]
        %v671 = vld [vmem:[%s1 + $0x268] sm:$0xff]
        %v672 = vld [vmem:[%s1 + $0x270] sm:$0xff]
        %v673 = vld [vmem:[%s1 + $0x278] sm:$0xff]
        %v674 = vld [vmem:[%s1 + $0x280] sm:$0xff]
        %v675 = vld [vmem:[%s1 + $0x288] sm:$0xff]
        %v676 = vld [vmem:[%s1 + $0x290] sm:$0xff]
        %v677 = vld [vmem:[%s1 + $0x298] sm:$0xff]
        %v678 = vld [vmem:[%s1 + $0x2a0] sm:$0xff]
        %v679 = vld [vmem:[%s1 + $0x2a8] sm:$0xff]
        %v680 = vld [vmem:[%s1 + $0x2b0] sm:$0xff]
        %v681 = vld [vmem:[%s1 + $0x2b8] sm:$0xff]
        %v682 = vld [vmem:[%s1 + $0x2c0] sm:$0xff]
        %v683 = vld [vmem:[%s1 + $0x2c8] sm:$0xff]
        %v684 = vld [vmem:[%s1 + $0x2d0] sm:$0xff]
        %v685 = vld [vmem:[%s1 + $0x2d8] sm:$0xff]
        %v686 = vld [vmem:[%s1 + $0x2e0] sm:$0xff]
        %v687 = vld [vmem:[%s1 + $0x2e8] sm:$0xff]
        %v688 = vld [vmem:[%s1 + $0x2f0] sm:$0xff]
        %v689 = vld [vmem:[%s1 + $0x2f8] sm:$0xff]
        %v690 = vld [vmem:[%s1 + $0x300] sm:$0xff]
        %v691 = vld [vmem:[%s1 + $0x308] sm:$0xff]
        %v692 = vld [vmem:[%s1 + $0x310] sm:$0xff]
        %v693 = vld [vmem:[%s1 + $0x318] sm:$0xff]
        %v694 = vld [vmem:[%s1 + $0x320] sm:$0xff]
        %v695 = vld [vmem:[%s1 + $0x328] sm:$0xff]
        %v696 = vld [vmem:[%s1 + $0x330] sm:$0xff]
        %v697 = vld [vmem:[%s1 + $0x338] sm:$0xff]
        %v698 = vld [vmem:[%s1 + $0x340] sm:$0xff]
        %v699 = vld [vmem:[%s1 + $0x348] sm:$0xff]
        %v700 = vld [vmem:[%s1 + $0x350] sm:$0xff]
        %v701 = vld [vmem:[%s1 + $0x358] sm:$0xff]
        %v702 = vld [vmem:[%s1 + $0x360] sm:$0xff]
        %v703 = vld [vmem:[%s1 + $0x368] sm:$0xff]
        %v704 = vld [vmem:[%s1 + $0x370] sm:$0xff]
        %v705 = vld [vmem:[%s1 + $0x378] sm:$0xff]
        %v706 = vld [vmem:[%s1 + $0x380] sm:$0xff]
        %v707 = vld [vmem:[%s1 + $0x388] sm:$0xff]
        %v708 = vld [vmem:[%s1 + $0x390] sm:$0xff]
        %v709 = vld [vmem:[%s1 + $0x398] sm:$0xff]
        %v710 = vld [vmem:[%s1 + $0x3a0] sm:$0xff]
        %v711 = vld [vmem:[%s1 + $0x3a8] sm:$0xff]
        %v712 = vld [vmem:[%s1 + $0x3b0] sm:$0xff]
        %v713 = vld [vmem:[%s1 + $0x3b8] sm:$0xff]
        %v714 = vld [vmem:[%s1 + $0x3c0] sm:$0xff]
        %v715 = vld [vmem:[%s1 + $0x3c8] sm:$0xff]
        %v716 = vld [vmem:[%s1 + $0x3d0] sm:$0xff]
        %v717 = vld [vmem:[%s1 + $0x3d8] sm:$0xff]
        %v718 = vld [vmem:[%s1 + $0x3e0] sm:$0xff]
        %v719 = vld [vmem:[%s1 + $0x3e8] sm:$0xff]
        %v720 = vld [vmem:[%s1 + $0x3f0] sm:$0xff]
        %v721 = vld [vmem:[%s1 + $0x3f8] sm:$0xff]
        %v722 = vld [vmem:[%s1 + $0x400] sm:$0xff]
        %v723 = vld [vmem:[%s1 + $0x408] sm:$0xff]
        %v724 = vld [vmem:[%s1 + $0x410] sm:$0xff]
        %v725 = vld [vmem:[%s1 + $0x418] sm:$0xff]
        %v726 = vld [vmem:[%s1 + $0x420] sm:$0xff]
        %v727 = vld [vmem:[%s1 + $0x428] sm:$0xff]
        %v728 = vld [vmem:[%s1 + $0x430] sm:$0xff]
        %v729 = vld [vmem:[%s1 + $0x438] sm:$0xff]
        %v730 = vld [vmem:[%s1 + $0x440] sm:$0xff]
        %v731 = vld [vmem:[%s1 + $0x448] sm:$0xff]
        %v732 = vld [vmem:[%s1 + $0x450] sm:$0xff]
        %v733 = vld [vmem:[%s1 + $0x458] sm:$0xff]
        %v734 = vld [vmem:[%s1 + $0x460] sm:$0xff]
        %v735 = vld [vmem:[%s1 + $0x468] sm:$0xff]
        %v736 = vld [vmem:[%s1 + $0x470] sm:$0xff]
        %v737 = vld [vmem:[%s1 + $0x478] sm:$0xff]
        %v738 = vld [vmem:[%s1 + $0x480] sm:$0xff]
        %v739 = vld [vmem:[%s1 + $0x488] sm:$0xff]
        %v740 = vld [vmem:[%s1 + $0x490] sm:$0xff]
        %v741 = vld [vmem:[%s1 + $0x498] sm:$0xff]
        %v742 = vld [vmem:[%s1 + $0x4a0] sm:$0xff]
        %v743 = vld [vmem:[%s1 + $0x4a8] sm:$0xff]
        %v744 = vld [vmem:[%s1 + $0x4b0] sm:$0xff]
        %v745 = vld [vmem:[%s1 + $0x4b8] sm:$0xff]
        %v746 = vld [vmem:[%s1 + $0x4c0] sm:$0xff]
        %v747 = vld [vmem:[%s1 + $0x4c8] sm:$0xff]
        %v748 = vld [vmem:[%s1 + $0x4d0] sm:$0xff]
        %v749 = vld [vmem:[%s1 + $0x4d8] sm:$0xff]
        %v750 = vld [vmem:[%s1 + $0x4e0] sm:$0xff]
        %v751 = vld [vmem:[%s1 + $0x4e8] sm:$0xff]
        %v752 = vld [vmem:[%s1 + $0x4f0] sm:$0xff]
        %v753 = vld [vmem:[%s1 + $0x4f8] sm:$0xff]
        %v754 = vld [vmem:[%s1 + $0x500] sm:$0xff]
        %v755 = vld [vmem:[%s1 + $0x508] sm:$0xff]
        %v756 = vld [vmem:[%s1 + $0x510] sm:$0xff]
        %v757 = vld [vmem:[%s1 + $0x518] sm:$0xff]
        %v758 = vld [vmem:[%s1 + $0x520] sm:$0xff]
        %v759 = vld [vmem:[%s1 + $0x528] sm:$0xff]
        %v760 = vld [vmem:[%s1 + $0x530] sm:$0xff]
        %v761 = vld [vmem:[%s1 + $0x538] sm:$0xff]
        %v762 = vld [vmem:[%s1 + $0x540] sm:$0xff]
        %v763 = vld [vmem:[%s1 + $0x548] sm:$0xff]
        %v764 = vld [vmem:[%s1 + $0x550] sm:$0xff]
        %v765 = vld [vmem:[%s1 + $0x558] sm:$0xff]
        %v766 = vld [vmem:[%s1 + $0x560] sm:$0xff]
        %v767 = vld [vmem:[%s1 + $0x568] sm:$0xff]
        %v768 = vld [vmem:[%s1 + $0x570] sm:$0xff]
        %v769 = vld [vmem:[%s1 + $0x578] sm:$0xff]
        %v770 = vld [vmem:[%s1 + $0x580] sm:$0xff]
        %v771 = vld [vmem:[%s1 + $0x588] sm:$0xff]
        %v772 = vld [vmem:[%s1 + $0x590] sm:$0xff]
        %v773 = vld [vmem:[%s1 + $0x598] sm:$0xff]
        %v774 = vld [vmem:[%s1 + $0x5a0] sm:$0xff]
        %v775 = vld [vmem:[%s1 + $0x5a8] sm:$0xff]
        %v776 = vld [vmem:[%s1 + $0x5b0] sm:$0xff]
        %v777 = vld [vmem:[%s1 + $0x5b8] sm:$0xff]
        %v778 = vld [vmem:[%s1 + $0x5c0] sm:$0xff]
        %v779 = vld [vmem:[%s1 + $0x5c8] sm:$0xff]
        %v780 = vld [vmem:[%s1 + $0x5d0] sm:$0xff]
        %v781 = vld [vmem:[%s1 + $0x5d8] sm:$0xff]
        %v782 = vld [vmem:[%s1 + $0x5e0] sm:$0xff]
        %v783 = vld [vmem:[%s1 + $0x5e8] sm:$0xff]
        %v784 = vld [vmem:[%s1 + $0x5f0] sm:$0xff]
        %v785 = vld [vmem:[%s1 + $0x5f8] sm:$0xff]
        %v786 = vld [vmem:[%s1 + $0x600] sm:$0xff]
        %v787 = vld [vmem:[%s1 + $0x608] sm:$0xff]
        %v788 = vld [vmem:[%s1 + $0x610] sm:$0xff]
        %v789 = vld [vmem:[%s1 + $0x618] sm:$0xff]
        %v791 = vlaneseq
        %v792 = vshrl.u32 %v791, 7
        %v793 = vsub.s32 0, %v792
        %v794 = vrot.slane %v257, %v793
        %v795 = vlaneseq
        %v796 = vshrl.u32 %v795, 7
        %v797 = vsub.s32 2, %v796
        %v798 = vrot.slane %v257, %v797
        %v799 = vlaneseq
        %v800 = vshrl.u32 %v799, 7
        %v801 = vsub.s32 4, %v800
        %v802 = vrot.slane %v257, %v801
        %v803 = vlaneseq
        %v804 = vshrl.u32 %v803, 7
        %v805 = vsub.s32 6, %v804
        %v806 = vrot.slane %v257, %v805
        %v811 = vlaneseq
        %v812 = vshrl.u32 %v811, 7
        %v813 = vsub.s32 0, %v812
        %v814 = vrot.slane %v794, %v813
        %v815 = vlaneseq
        %v816 = vshrl.u32 %v815, 7
        %v817 = vsub.s32 0, %v816
        %v818 = vrot.slane %v798, %v817
        %v819 = vlaneseq
        %v820 = vshrl.u32 %v819, 7
        %v821 = vsub.s32 0, %v820
        %v822 = vrot.slane %v802, %v821
        %v823 = vlaneseq
        %v824 = vshrl.u32 %v823, 7
        %v825 = vsub.s32 0, %v824
        %v826 = vrot.slane %v806, %v825
        %v1023 = vunpack.c.l.b16 %v594
        %v1024 = vunpack.c.h.b16 %v594
        %v1025 = vunpack.c.l.b16 %v595
        %v1026 = vunpack.c.h.b16 %v595
        %v1027 = vunpack.c.l.b16 %v596
        %v1028 = vunpack.c.h.b16 %v596
        %v1029 = vunpack.c.l.b16 %v597
        %v1030 = vunpack.c.h.b16 %v597
        %v1031 = vunpack.c.l.b16 %v598
        %v1032 = vunpack.c.h.b16 %v598
        %v1033 = vunpack.c.l.b16 %v599
        %v1034 = vunpack.c.h.b16 %v599
        %v1035 = vunpack.c.l.b16 %v600
        %v1036 = vunpack.c.h.b16 %v600
        %v1037 = vunpack.c.l.b16 %v601
        %v1038 = vunpack.c.h.b16 %v601
        %v1039 = vunpack.c.l.b16 %v602
        %v1040 = vunpack.c.h.b16 %v602
        %v1041 = vunpack.c.l.b16 %v603
        %v1042 = vunpack.c.h.b16 %v603
        %v1043 = vunpack.c.l.b16 %v604
        %v1044 = vunpack.c.h.b16 %v604
        %v1045 = vunpack.c.l.b16 %v605
        %v1046 = vunpack.c.h.b16 %v605
        %v1047 = vunpack.c.l.b16 %v606
        %v1048 = vunpack.c.h.b16 %v606
        %v1049 = vunpack.c.l.b16 %v607
        %v1050 = vunpack.c.h.b16 %v607
        %v1051 = vunpack.c.l.b16 %v608
        %v1052 = vunpack.c.h.b16 %v608
        %v1053 = vunpack.c.l.b16 %v609
        %v1054 = vunpack.c.h.b16 %v609
        %v1055 = vunpack.c.l.b16 %v610
        %v1056 = vunpack.c.h.b16 %v610
        %v1057 = vunpack.c.l.b16 %v611
        %v1058 = vunpack.c.h.b16 %v611
        %v1059 = vunpack.c.l.b16 %v612
        %v1060 = vunpack.c.h.b16 %v612
        %v1061 = vunpack.c.l.b16 %v613
        %v1062 = vunpack.c.h.b16 %v613
        %v1063 = vunpack.c.l.b16 %v614
        %v1064 = vunpack.c.h.b16 %v614
        %v1065 = vunpack.c.l.b16 %v615
        %v1066 = vunpack.c.h.b16 %v615
        %v1067 = vunpack.c.l.b16 %v616
        %v1068 = vunpack.c.h.b16 %v616
        %v1069 = vunpack.c.l.b16 %v617
        %v1070 = vunpack.c.h.b16 %v617
        %v1071 = vunpack.c.l.b16 %v618
        %v1072 = vunpack.c.h.b16 %v618
        %v1073 = vunpack.c.l.b16 %v619
        %v1074 = vunpack.c.h.b16 %v619
        %v1075 = vunpack.c.l.b16 %v620
        %v1076 = vunpack.c.h.b16 %v620
        %v1077 = vunpack.c.l.b16 %v621
        %v1078 = vunpack.c.h.b16 %v621
        %v1079 = vunpack.c.l.b16 %v622
        %v1080 = vunpack.c.h.b16 %v622
        %v1081 = vunpack.c.l.b16 %v623
        %v1082 = vunpack.c.h.b16 %v623
        %v1083 = vunpack.c.l.b16 %v624
        %v1084 = vunpack.c.h.b16 %v624
        %v1085 = vunpack.c.l.b16 %v625
        %v1086 = vunpack.c.h.b16 %v625
        %v1087 = vunpack.c.l.b16 %v626
        %v1088 = vunpack.c.h.b16 %v626
        %v1089 = vunpack.c.l.b16 %v627
        %v1090 = vunpack.c.h.b16 %v627
        %v1091 = vunpack.c.l.b16 %v628
        %v1092 = vunpack.c.h.b16 %v628
        %v1093 = vunpack.c.l.b16 %v629
        %v1094 = vunpack.c.h.b16 %v629
        %v1095 = vunpack.c.l.b16 %v630
        %v1096 = vunpack.c.h.b16 %v630
        %v1097 = vunpack.c.l.b16 %v631
        %v1098 = vunpack.c.h.b16 %v631
        %v1099 = vunpack.c.l.b16 %v632
        %v1100 = vunpack.c.h.b16 %v632
        %v1101 = vunpack.c.l.b16 %v633
        %v1102 = vunpack.c.h.b16 %v633
        %v1103 = vunpack.c.l.b16 %v634
        %v1104 = vunpack.c.h.b16 %v634
        %v1105 = vunpack.c.l.b16 %v635
        %v1106 = vunpack.c.h.b16 %v635
        %v1107 = vunpack.c.l.b16 %v636
        %v1108 = vunpack.c.h.b16 %v636
        %v1109 = vunpack.c.l.b16 %v637
        %v1110 = vunpack.c.h.b16 %v637
        %v1111 = vunpack.c.l.b16 %v638
        %v1112 = vunpack.c.h.b16 %v638
        %v1113 = vunpack.c.l.b16 %v639
        %v1114 = vunpack.c.h.b16 %v639
        %v1115 = vunpack.c.l.b16 %v640
        %v1116 = vunpack.c.h.b16 %v640
        %v1117 = vunpack.c.l.b16 %v641
        %v1118 = vunpack.c.h.b16 %v641
        %v1119 = vunpack.c.l.b16 %v642
        %v1120 = vunpack.c.h.b16 %v642
        %v1121 = vunpack.c.l.b16 %v643
        %v1122 = vunpack.c.h.b16 %v643
        %v1123 = vunpack.c.l.b16 %v644
        %v1124 = vunpack.c.h.b16 %v644
        %v1125 = vunpack.c.l.b16 %v645
        %v1126 = vunpack.c.h.b16 %v645
        %v1127 = vunpack.c.l.b16 %v646
        %v1128 = vunpack.c.h.b16 %v646
        %v1129 = vunpack.c.l.b16 %v647
        %v1130 = vunpack.c.h.b16 %v647
        %v1131 = vunpack.c.l.b16 %v648
        %v1132 = vunpack.c.h.b16 %v648
        %v1133 = vunpack.c.l.b16 %v649
        %v1134 = vunpack.c.h.b16 %v649
        %v1135 = vunpack.c.l.b16 %v650
        %v1136 = vunpack.c.h.b16 %v650
        %v1137 = vunpack.c.l.b16 %v651
        %v1138 = vunpack.c.h.b16 %v651
        %v1139 = vunpack.c.l.b16 %v652
        %v1140 = vunpack.c.h.b16 %v652
        %v1141 = vunpack.c.l.b16 %v653
        %v1142 = vunpack.c.h.b16 %v653
        %v1143 = vunpack.c.l.b16 %v654
        %v1144 = vunpack.c.h.b16 %v654
        %v1145 = vunpack.c.l.b16 %v655
        %v1146 = vunpack.c.h.b16 %v655
        %v1147 = vunpack.c.l.b16 %v656
        %v1148 = vunpack.c.h.b16 %v656
        %v1149 = vunpack.c.l.b16 %v657
        %v1150 = vunpack.c.h.b16 %v657
        %v1151 = vunpack.c.l.b16 %v658
        %v1152 = vunpack.c.h.b16 %v658
        %v1153 = vunpack.c.l.b16 %v659
        %v1154 = vunpack.c.h.b16 %v659
        %v1155 = vunpack.c.l.b16 %v660
        %v1156 = vunpack.c.h.b16 %v660
        %v1157 = vunpack.c.l.b16 %v661
        %v1158 = vunpack.c.h.b16 %v661
        %v1159 = vunpack.c.l.b16 %v662
        %v1160 = vunpack.c.h.b16 %v662
        %v1161 = vunpack.c.l.b16 %v663
        %v1162 = vunpack.c.h.b16 %v663
        %v1163 = vunpack.c.l.b16 %v664
        %v1164 = vunpack.c.h.b16 %v664
        %v1165 = vunpack.c.l.b16 %v665
        %v1166 = vunpack.c.h.b16 %v665
        %v1167 = vunpack.c.l.b16 %v666
        %v1168 = vunpack.c.h.b16 %v666
        %v1169 = vunpack.c.l.b16 %v667
        %v1170 = vunpack.c.h.b16 %v667
        %v1171 = vunpack.c.l.b16 %v668
        %v1172 = vunpack.c.h.b16 %v668
        %v1173 = vunpack.c.l.b16 %v669
        %v1174 = vunpack.c.h.b16 %v669
        %v1175 = vunpack.c.l.b16 %v670
        %v1176 = vunpack.c.h.b16 %v670
        %v1177 = vunpack.c.l.b16 %v671
        %v1178 = vunpack.c.h.b16 %v671
        %v1179 = vunpack.c.l.b16 %v672
        %v1180 = vunpack.c.h.b16 %v672
        %v1181 = vunpack.c.l.b16 %v673
        %v1182 = vunpack.c.h.b16 %v673
        %v1183 = vunpack.c.l.b16 %v674
        %v1184 = vunpack.c.h.b16 %v674
        %v1185 = vunpack.c.l.b16 %v675
        %v1186 = vunpack.c.h.b16 %v675
        %v1187 = vunpack.c.l.b16 %v676
        %v1188 = vunpack.c.h.b16 %v676
        %v1189 = vunpack.c.l.b16 %v677
        %v1190 = vunpack.c.h.b16 %v677
        %v1191 = vunpack.c.l.b16 %v678
        %v1192 = vunpack.c.h.b16 %v678
        %v1193 = vunpack.c.l.b16 %v679
        %v1194 = vunpack.c.h.b16 %v679
        %v1195 = vunpack.c.l.b16 %v680
        %v1196 = vunpack.c.h.b16 %v680
        %v1197 = vunpack.c.l.b16 %v681
        %v1198 = vunpack.c.h.b16 %v681
        %v1199 = vunpack.c.l.b16 %v682
        %v1200 = vunpack.c.h.b16 %v682
        %v1201 = vunpack.c.l.b16 %v683
        %v1202 = vunpack.c.h.b16 %v683
        %v1203 = vunpack.c.l.b16 %v684
        %v1204 = vunpack.c.h.b16 %v684
        %v1205 = vunpack.c.l.b16 %v685
        %v1206 = vunpack.c.h.b16 %v685
        %v1207 = vunpack.c.l.b16 %v686
        %v1208 = vunpack.c.h.b16 %v686
        %v1209 = vunpack.c.l.b16 %v687
        %v1210 = vunpack.c.h.b16 %v687
        %v1211 = vunpack.c.l.b16 %v688
        %v1212 = vunpack.c.h.b16 %v688
        %v1213 = vunpack.c.l.b16 %v689
        %v1214 = vunpack.c.h.b16 %v689
        %v1215 = vunpack.c.l.b16 %v690
        %v1216 = vunpack.c.h.b16 %v690
        %v1217 = vunpack.c.l.b16 %v691
        %v1218 = vunpack.c.h.b16 %v691
        %v1219 = vunpack.c.l.b16 %v692
        %v1220 = vunpack.c.h.b16 %v692
        %v1221 = vunpack.c.l.b16 %v693
        %v1222 = vunpack.c.h.b16 %v693
        %v1223 = vunpack.c.l.b16 %v694
        %v1224 = vunpack.c.h.b16 %v694
        %v1225 = vunpack.c.l.b16 %v695
        %v1226 = vunpack.c.h.b16 %v695
        %v1227 = vunpack.c.l.b16 %v696
        %v1228 = vunpack.c.h.b16 %v696
        %v1229 = vunpack.c.l.b16 %v697
        %v1230 = vunpack.c.h.b16 %v697
        %v1231 = vunpack.c.l.b16 %v698
        %v1232 = vunpack.c.h.b16 %v698
        %v1233 = vunpack.c.l.b16 %v699
        %v1234 = vunpack.c.h.b16 %v699
        %v1235 = vunpack.c.l.b16 %v700
        %v1236 = vunpack.c.h.b16 %v700
        %v1237 = vunpack.c.l.b16 %v701
        %v1238 = vunpack.c.h.b16 %v701
        %v1239 = vunpack.c.l.b16 %v702
        %v1240 = vunpack.c.h.b16 %v702
        %v1241 = vunpack.c.l.b16 %v703
        %v1242 = vunpack.c.h.b16 %v703
        %v1243 = vunpack.c.l.b16 %v704
        %v1244 = vunpack.c.h.b16 %v704
        %v1245 = vunpack.c.l.b16 %v705
        %v1246 = vunpack.c.h.b16 %v705
        %v1247 = vunpack.c.l.b16 %v706
        %v1248 = vunpack.c.h.b16 %v706
        %v1249 = vunpack.c.l.b16 %v707
        %v1250 = vunpack.c.h.b16 %v707
        %v1251 = vunpack.c.l.b16 %v708
        %v1252 = vunpack.c.h.b16 %v708
        %v1253 = vunpack.c.l.b16 %v709
        %v1254 = vunpack.c.h.b16 %v709
        %v1255 = vunpack.c.l.b16 %v710
        %v1256 = vunpack.c.h.b16 %v710
        %v1257 = vunpack.c.l.b16 %v711
        %v1258 = vunpack.c.h.b16 %v711
        %v1259 = vunpack.c.l.b16 %v712
        %v1260 = vunpack.c.h.b16 %v712
        %v1261 = vunpack.c.l.b16 %v713
        %v1262 = vunpack.c.h.b16 %v713
        %v1263 = vunpack.c.l.b16 %v714
        %v1264 = vunpack.c.h.b16 %v714
        %v1265 = vunpack.c.l.b16 %v715
        %v1266 = vunpack.c.h.b16 %v715
        %v1267 = vunpack.c.l.b16 %v716
        %v1268 = vunpack.c.h.b16 %v716
        %v1269 = vunpack.c.l.b16 %v717
        %v1270 = vunpack.c.h.b16 %v717
        %v1271 = vunpack.c.l.b16 %v718
        %v1272 = vunpack.c.h.b16 %v718
        %v1273 = vunpack.c.l.b16 %v719
        %v1274 = vunpack.c.h.b16 %v719
        %v1275 = vunpack.c.l.b16 %v720
        %v1276 = vunpack.c.h.b16 %v720
        %v1277 = vunpack.c.l.b16 %v721
        %v1278 = vunpack.c.h.b16 %v721
        %v1279 = vunpack.c.l.b16 %v722
        %v1280 = vunpack.c.h.b16 %v722
        %v1281 = vunpack.c.l.b16 %v723
        %v1282 = vunpack.c.h.b16 %v723
        %v1283 = vunpack.c.l.b16 %v724
        %v1284 = vunpack.c.h.b16 %v724
        %v1285 = vunpack.c.l.b16 %v725
        %v1286 = vunpack.c.h.b16 %v725
        %v1287 = vunpack.c.l.b16 %v726
        %v1288 = vunpack.c.h.b16 %v726
        %v1289 = vunpack.c.l.b16 %v727
        %v1290 = vunpack.c.h.b16 %v727
        %v1291 = vunpack.c.l.b16 %v728
        %v1292 = vunpack.c.h.b16 %v728
        %v1293 = vunpack.c.l.b16 %v729
        %v1294 = vunpack.c.h.b16 %v729
        %v1295 = vunpack.c.l.b16 %v730
        %v1296 = vunpack.c.h.b16 %v730
        %v1297 = vunpack.c.l.b16 %v731
        %v1298 = vunpack.c.h.b16 %v731
        %v1299 = vunpack.c.l.b16 %v732
        %v1300 = vunpack.c.h.b16 %v732
        %v1301 = vunpack.c.l.b16 %v733
        %v1302 = vunpack.c.h.b16 %v733
        %v1303 = vunpack.c.l.b16 %v734
        %v1304 = vunpack.c.h.b16 %v734
        %v1305 = vunpack.c.l.b16 %v735
        %v1306 = vunpack.c.h.b16 %v735
        %v1307 = vunpack.c.l.b16 %v736
        %v1308 = vunpack.c.h.b16 %v736
        %v1309 = vunpack.c.l.b16 %v737
        %v1310 = vunpack.c.h.b16 %v737
        %v1311 = vunpack.c.l.b16 %v738
        %v1312 = vunpack.c.h.b16 %v738
        %v1313 = vunpack.c.l.b16 %v739
        %v1314 = vunpack.c.h.b16 %v739
        %v1315 = vunpack.c.l.b16 %v740
        %v1316 = vunpack.c.h.b16 %v740
        %v1317 = vunpack.c.l.b16 %v741
        %v1318 = vunpack.c.h.b16 %v741
        %v1319 = vunpack.c.l.b16 %v742
        %v1320 = vunpack.c.h.b16 %v742
        %v1321 = vunpack.c.l.b16 %v743
        %v1322 = vunpack.c.h.b16 %v743
        %v1323 = vunpack.c.l.b16 %v744
        %v1324 = vunpack.c.h.b16 %v744
        %v1325 = vunpack.c.l.b16 %v745
        %v1326 = vunpack.c.h.b16 %v745
        %v1327 = vunpack.c.l.b16 %v746
        %v1328 = vunpack.c.h.b16 %v746
        %v1329 = vunpack.c.l.b16 %v747
        %v1330 = vunpack.c.h.b16 %v747
        %v1331 = vunpack.c.l.b16 %v748
        %v1332 = vunpack.c.h.b16 %v748
        %v1333 = vunpack.c.l.b16 %v749
        %v1334 = vunpack.c.h.b16 %v749
        %v1335 = vunpack.c.l.b16 %v750
        %v1336 = vunpack.c.h.b16 %v750
        %v1337 = vunpack.c.l.b16 %v751
        %v1338 = vunpack.c.h.b16 %v751
        %v1339 = vunpack.c.l.b16 %v752
        %v1340 = vunpack.c.h.b16 %v752
        %v1341 = vunpack.c.l.b16 %v753
        %v1342 = vunpack.c.h.b16 %v753
        %v1343 = vunpack.c.l.b16 %v754
        %v1344 = vunpack.c.h.b16 %v754
        %v1345 = vunpack.c.l.b16 %v755
        %v1346 = vunpack.c.h.b16 %v755
        %v1347 = vunpack.c.l.b16 %v756
        %v1348 = vunpack.c.h.b16 %v756
        %v1349 = vunpack.c.l.b16 %v757
        %v1350 = vunpack.c.h.b16 %v757
        %v1351 = vunpack.c.l.b16 %v758
        %v1352 = vunpack.c.h.b16 %v758
        %v1353 = vunpack.c.l.b16 %v759
        %v1354 = vunpack.c.h.b16 %v759
        %v1355 = vunpack.c.l.b16 %v760
        %v1356 = vunpack.c.h.b16 %v760
        %v1357 = vunpack.c.l.b16 %v761
        %v1358 = vunpack.c.h.b16 %v761
        %v1359 = vunpack.c.l.b16 %v762
        %v1360 = vunpack.c.h.b16 %v762
        %v1361 = vunpack.c.l.b16 %v763
        %v1362 = vunpack.c.h.b16 %v763
        %v1363 = vunpack.c.l.b16 %v764
        %v1364 = vunpack.c.h.b16 %v764
        %v1365 = vunpack.c.l.b16 %v765
        %v1366 = vunpack.c.h.b16 %v765
        %v1367 = vunpack.c.l.b16 %v766
        %v1368 = vunpack.c.h.b16 %v766
        %v1369 = vunpack.c.l.b16 %v767
        %v1370 = vunpack.c.h.b16 %v767
        %v1371 = vunpack.c.l.b16 %v768
        %v1372 = vunpack.c.h.b16 %v768
        %v1373 = vunpack.c.l.b16 %v769
        %v1374 = vunpack.c.h.b16 %v769
        %v1375 = vunpack.c.l.b16 %v770
        %v1376 = vunpack.c.h.b16 %v770
        %v1377 = vunpack.c.l.b16 %v771
        %v1378 = vunpack.c.h.b16 %v771
        %v1379 = vunpack.c.l.b16 %v772
        %v1380 = vunpack.c.h.b16 %v772
        %v1381 = vunpack.c.l.b16 %v773
        %v1382 = vunpack.c.h.b16 %v773
        %v1383 = vunpack.c.l.b16 %v774
        %v1384 = vunpack.c.h.b16 %v774
        %v1385 = vunpack.c.l.b16 %v775
        %v1386 = vunpack.c.h.b16 %v775
        %v1387 = vunpack.c.l.b16 %v776
        %v1388 = vunpack.c.h.b16 %v776
        %v1389 = vunpack.c.l.b16 %v777
        %v1390 = vunpack.c.h.b16 %v777
        %v1391 = vunpack.c.l.b16 %v778
        %v1392 = vunpack.c.h.b16 %v778
        %v1393 = vunpack.c.l.b16 %v779
        %v1394 = vunpack.c.h.b16 %v779
        %v1395 = vunpack.c.l.b16 %v780
        %v1396 = vunpack.c.h.b16 %v780
        %v1397 = vunpack.c.l.b16 %v781
        %v1398 = vunpack.c.h.b16 %v781
        %v1399 = vunpack.c.l.b16 %v782
        %v1400 = vunpack.c.h.b16 %v782
        %v1401 = vunpack.c.l.b16 %v783
        %v1402 = vunpack.c.h.b16 %v783
        %v1403 = vunpack.c.l.b16 %v784
        %v1404 = vunpack.c.h.b16 %v784
        %v1405 = vunpack.c.l.b16 %v785
        %v1406 = vunpack.c.h.b16 %v785
        %v1407 = vunpack.c.l.b16 %v786
        %v1408 = vunpack.c.h.b16 %v786
        %v1409 = vunpack.c.l.b16 %v787
        %v1410 = vunpack.c.h.b16 %v787
        %v1411 = vunpack.c.l.b16 %v788
        %v1412 = vunpack.c.h.b16 %v788
        %v1413 = vunpack.c.l.b16 %v789
        %v1414 = vunpack.c.h.b16 %v789
        %v1415 = vpack.c.b16 %v1027, %v1023
        %v1416 = vpack.c.b16 %v1028, %v1024
        %v1417 = vpack.c.b16 %v1029, %v1025
        %v1418 = vpack.c.b16 %v1030, %v1026
        %v1419 = vpack.c.b16 %v1035, %v1031
        %v1420 = vpack.c.b16 %v1036, %v1032
        %v1421 = vpack.c.b16 %v1037, %v1033
        %v1422 = vpack.c.b16 %v1038, %v1034
        %v1423 = vpack.c.b16 %v1043, %v1039
        %v1424 = vpack.c.b16 %v1044, %v1040
        %v1425 = vpack.c.b16 %v1045, %v1041
        %v1426 = vpack.c.b16 %v1046, %v1042
        %v1427 = vpack.c.b16 %v1051, %v1047
        %v1428 = vpack.c.b16 %v1052, %v1048
        %v1429 = vpack.c.b16 %v1053, %v1049
        %v1430 = vpack.c.b16 %v1054, %v1050
        %v1431 = vpack.c.b16 %v1059, %v1055
        %v1432 = vpack.c.b16 %v1060, %v1056
        %v1433 = vpack.c.b16 %v1061, %v1057
        %v1434 = vpack.c.b16 %v1062, %v1058
        %v1435 = vpack.c.b16 %v1067, %v1063
        %v1436 = vpack.c.b16 %v1068, %v1064
        %v1437 = vpack.c.b16 %v1069, %v1065
        %v1438 = vpack.c.b16 %v1070, %v1066
        %v1439 = vpack.c.b16 %v1075, %v1071
        %v1440 = vpack.c.b16 %v1076, %v1072
        %v1441 = vpack.c.b16 %v1077, %v1073
        %v1442 = vpack.c.b16 %v1078, %v1074
        %v1443 = vpack.c.b16 %v1083, %v1079
        %v1444 = vpack.c.b16 %v1084, %v1080
        %v1445 = vpack.c.b16 %v1085, %v1081
        %v1446 = vpack.c.b16 %v1086, %v1082
        %v1447 = vpack.c.b16 %v1091, %v1087
        %v1448 = vpack.c.b16 %v1092, %v1088
        %v1449 = vpack.c.b16 %v1093, %v1089
        %v1450 = vpack.c.b16 %v1094, %v1090
        %v1451 = vpack.c.b16 %v1099, %v1095
        %v1452 = vpack.c.b16 %v1100, %v1096
        %v1453 = vpack.c.b16 %v1101, %v1097
        %v1454 = vpack.c.b16 %v1102, %v1098
        %v1455 = vpack.c.b16 %v1107, %v1103
        %v1456 = vpack.c.b16 %v1108, %v1104
        %v1457 = vpack.c.b16 %v1109, %v1105
        %v1458 = vpack.c.b16 %v1110, %v1106
        %v1459 = vpack.c.b16 %v1115, %v1111
        %v1460 = vpack.c.b16 %v1116, %v1112
        %v1461 = vpack.c.b16 %v1117, %v1113
        %v1462 = vpack.c.b16 %v1118, %v1114
        %v1463 = vpack.c.b16 %v1123, %v1119
        %v1464 = vpack.c.b16 %v1124, %v1120
        %v1465 = vpack.c.b16 %v1125, %v1121
        %v1466 = vpack.c.b16 %v1126, %v1122
        %v1467 = vpack.c.b16 %v1131, %v1127
        %v1468 = vpack.c.b16 %v1132, %v1128
        %v1469 = vpack.c.b16 %v1133, %v1129
        %v1470 = vpack.c.b16 %v1134, %v1130
        %v1471 = vpack.c.b16 %v1139, %v1135
        %v1472 = vpack.c.b16 %v1140, %v1136
        %v1473 = vpack.c.b16 %v1141, %v1137
        %v1474 = vpack.c.b16 %v1142, %v1138
        %v1475 = vpack.c.b16 %v1147, %v1143
        %v1476 = vpack.c.b16 %v1148, %v1144
        %v1477 = vpack.c.b16 %v1149, %v1145
        %v1478 = vpack.c.b16 %v1150, %v1146
        %v1479 = vpack.c.b16 %v1155, %v1151
        %v1480 = vpack.c.b16 %v1156, %v1152
        %v1481 = vpack.c.b16 %v1157, %v1153
        %v1482 = vpack.c.b16 %v1158, %v1154
        %v1483 = vpack.c.b16 %v1163, %v1159
        %v1484 = vpack.c.b16 %v1164, %v1160
        %v1485 = vpack.c.b16 %v1165, %v1161
        %v1486 = vpack.c.b16 %v1166, %v1162
        %v1487 = vpack.c.b16 %v1171, %v1167
        %v1488 = vpack.c.b16 %v1172, %v1168
        %v1489 = vpack.c.b16 %v1173, %v1169
        %v1490 = vpack.c.b16 %v1174, %v1170
        %v1491 = vpack.c.b16 %v1179, %v1175
        %v1492 = vpack.c.b16 %v1180, %v1176
        %v1493 = vpack.c.b16 %v1181, %v1177
        %v1494 = vpack.c.b16 %v1182, %v1178
        %v1495 = vpack.c.b16 %v1187, %v1183
        %v1496 = vpack.c.b16 %v1188, %v1184
        %v1497 = vpack.c.b16 %v1189, %v1185
        %v1498 = vpack.c.b16 %v1190, %v1186
        %v1499 = vpack.c.b16 %v1195, %v1191
        %v1500 = vpack.c.b16 %v1196, %v1192
        %v1501 = vpack.c.b16 %v1197, %v1193
        %v1502 = vpack.c.b16 %v1198, %v1194
        %v1503 = vpack.c.b16 %v1203, %v1199
        %v1504 = vpack.c.b16 %v1204, %v1200
        %v1505 = vpack.c.b16 %v1205, %v1201
        %v1506 = vpack.c.b16 %v1206, %v1202
        %v1507 = vpack.c.b16 %v1211, %v1207
        %v1508 = vpack.c.b16 %v1212, %v1208
        %v1509 = vpack.c.b16 %v1213, %v1209
        %v1510 = vpack.c.b16 %v1214, %v1210
        %v1511 = vpack.c.b16 %v1219, %v1215
        %v1512 = vpack.c.b16 %v1220, %v1216
        %v1513 = vpack.c.b16 %v1221, %v1217
        %v1514 = vpack.c.b16 %v1222, %v1218
        %v1515 = vpack.c.b16 %v1227, %v1223
        %v1516 = vpack.c.b16 %v1228, %v1224
        %v1517 = vpack.c.b16 %v1229, %v1225
        %v1518 = vpack.c.b16 %v1230, %v1226
        %v1519 = vpack.c.b16 %v1235, %v1231
        %v1520 = vpack.c.b16 %v1236, %v1232
        %v1521 = vpack.c.b16 %v1237, %v1233
        %v1522 = vpack.c.b16 %v1238, %v1234
        %v1523 = vpack.c.b16 %v1243, %v1239
        %v1524 = vpack.c.b16 %v1244, %v1240
        %v1525 = vpack.c.b16 %v1245, %v1241
        %v1526 = vpack.c.b16 %v1246, %v1242
        %v1527 = vpack.c.b16 %v1251, %v1247
        %v1528 = vpack.c.b16 %v1252, %v1248
        %v1529 = vpack.c.b16 %v1253, %v1249
        %v1530 = vpack.c.b16 %v1254, %v1250
        %v1531 = vpack.c.b16 %v1259, %v1255
        %v1532 = vpack.c.b16 %v1260, %v1256
        %v1533 = vpack.c.b16 %v1261, %v1257
        %v1534 = vpack.c.b16 %v1262, %v1258
        %v1535 = vpack.c.b16 %v1267, %v1263
        %v1536 = vpack.c.b16 %v1268, %v1264
        %v1537 = vpack.c.b16 %v1269, %v1265
        %v1538 = vpack.c.b16 %v1270, %v1266
        %v1539 = vpack.c.b16 %v1275, %v1271
        %v1540 = vpack.c.b16 %v1276, %v1272
        %v1541 = vpack.c.b16 %v1277, %v1273
        %v1542 = vpack.c.b16 %v1278, %v1274
        %v1543 = vpack.c.b16 %v1283, %v1279
        %v1544 = vpack.c.b16 %v1284, %v1280
        %v1545 = vpack.c.b16 %v1285, %v1281
        %v1546 = vpack.c.b16 %v1286, %v1282
        %v1547 = vpack.c.b16 %v1291, %v1287
        %v1548 = vpack.c.b16 %v1292, %v1288
        %v1549 = vpack.c.b16 %v1293, %v1289
        %v1550 = vpack.c.b16 %v1294, %v1290
        %v1551 = vpack.c.b16 %v1299, %v1295
        %v1552 = vpack.c.b16 %v1300, %v1296
        %v1553 = vpack.c.b16 %v1301, %v1297
        %v1554 = vpack.c.b16 %v1302, %v1298
        %v1555 = vpack.c.b16 %v1307, %v1303
        %v1556 = vpack.c.b16 %v1308, %v1304
        %v1557 = vpack.c.b16 %v1309, %v1305
        %v1558 = vpack.c.b16 %v1310, %v1306
        %v1559 = vpack.c.b16 %v1315, %v1311
        %v1560 = vpack.c.b16 %v1316, %v1312
        %v1561 = vpack.c.b16 %v1317, %v1313
        %v1562 = vpack.c.b16 %v1318, %v1314
        %v1563 = vpack.c.b16 %v1323, %v1319
        %v1564 = vpack.c.b16 %v1324, %v1320
        %v1565 = vpack.c.b16 %v1325, %v1321
        %v1566 = vpack.c.b16 %v1326, %v1322
        %v1567 = vpack.c.b16 %v1331, %v1327
        %v1568 = vpack.c.b16 %v1332, %v1328
        %v1569 = vpack.c.b16 %v1333, %v1329
        %v1570 = vpack.c.b16 %v1334, %v1330
        %v1571 = vpack.c.b16 %v1339, %v1335
        %v1572 = vpack.c.b16 %v1340, %v1336
        %v1573 = vpack.c.b16 %v1341, %v1337
        %v1574 = vpack.c.b16 %v1342, %v1338
        %v1575 = vpack.c.b16 %v1347, %v1343
        %v1576 = vpack.c.b16 %v1348, %v1344
        %v1577 = vpack.c.b16 %v1349, %v1345
        %v1578 = vpack.c.b16 %v1350, %v1346
        %v1579 = vpack.c.b16 %v1355, %v1351
        %v1580 = vpack.c.b16 %v1356, %v1352
        %v1581 = vpack.c.b16 %v1357, %v1353
        %v1582 = vpack.c.b16 %v1358, %v1354
        %v1583 = vpack.c.b16 %v1363, %v1359
        %v1584 = vpack.c.b16 %v1364, %v1360
        %v1585 = vpack.c.b16 %v1365, %v1361
        %v1586 = vpack.c.b16 %v1366, %v1362
        %v1587 = vpack.c.b16 %v1371, %v1367
        %v1588 = vpack.c.b16 %v1372, %v1368
        %v1589 = vpack.c.b16 %v1373, %v1369
        %v1590 = vpack.c.b16 %v1374, %v1370
        %v1591 = vpack.c.b16 %v1379, %v1375
        %v1592 = vpack.c.b16 %v1380, %v1376
        %v1593 = vpack.c.b16 %v1381, %v1377
        %v1594 = vpack.c.b16 %v1382, %v1378
        %v1595 = vpack.c.b16 %v1387, %v1383
        %v1596 = vpack.c.b16 %v1388, %v1384
        %v1597 = vpack.c.b16 %v1389, %v1385
        %v1598 = vpack.c.b16 %v1390, %v1386
        %v1599 = vpack.c.b16 %v1395, %v1391
        %v1600 = vpack.c.b16 %v1396, %v1392
        %v1601 = vpack.c.b16 %v1397, %v1393
        %v1602 = vpack.c.b16 %v1398, %v1394
        %v1603 = vpack.c.b16 %v1403, %v1399
        %v1604 = vpack.c.b16 %v1404, %v1400
        %v1605 = vpack.c.b16 %v1405, %v1401
        %v1606 = vpack.c.b16 %v1406, %v1402
        %v1607 = vpack.c.b16 %v1411, %v1407
        %v1608 = vpack.c.b16 %v1412, %v1408
        %v1609 = vpack.c.b16 %v1413, %v1409
        %v1610 = vpack.c.b16 %v1414, %v1410
        %vm1807 = vcmask 130048
        %v1809 = vsel %vm1807, %v488, 0
        %v1812 = vsel %vm1807, %v495, 0
        %v1815 = vsel %vm1807, %v502, 0
        %v1818 = vsel %vm1807, %v509, 0
        %v1821 = vsel %vm1807, %v516, 0
        %v1824 = vsel %vm1807, %v523, 0
        %v1827 = vsel %vm1807, %v530, 0
        %v1830 = vsel %vm1807, %v537, 0
        %v1833 = vsel %vm1807, %v544, 0
        %v1836 = vsel %vm1807, %v551, 0
        %v1839 = vsel %vm1807, %v558, 0
        %v1842 = vsel %vm1807, %v565, 0
        %v1845 = vsel %vm1807, %v572, 0
        %v1848 = vsel %vm1807, %v579, 0
        %v1851 = vsel %vm1807, %v586, 0
        %v1854 = vsel %vm1807, %v593, 0
        %1856 = vmatprep.subr.bf16.mxu0 %v1416
        %1857 = vmatpush1.bf16.msra.mxu0 %v1415
        %1858 = vmatprep.subr.bf16.mxu0 %v1420
        %1859 = vmatpush1.bf16.msra.mxu0 %v1419
        %1860 = vmatprep.subr.bf16.mxu0 %v1424
        %1861 = vmatpush1.bf16.msra.mxu0 %v1423
        %1862 = vmatprep.subr.bf16.mxu0 %v1428
        %1863 = vmatpush1.bf16.msra.mxu0 %v1427
        %1864 = vmatprep.subr.bf16.mxu0 %v1432
        %1865 = vmatpush1.bf16.msra.mxu0 %v1431
        %1866 = vmatprep.subr.bf16.mxu0 %v1436
        %1867 = vmatpush1.bf16.msra.mxu0 %v1435
        %1868 = vmatprep.subr.bf16.mxu0 %v1440
        %1869 = vmatpush1.bf16.msra.mxu0 %v1439
        %1870 = vmatprep.subr.bf16.mxu0 %v1444
        %1871 = vmatpush1.bf16.msra.mxu0 %v1443
        %1872 = vmatprep.subr.bf16.mxu0 %v1448
        %1873 = vmatpush1.bf16.msra.mxu0 %v1447
        %1874 = vmatprep.subr.bf16.mxu0 %v1452
        %1875 = vmatpush1.bf16.msra.mxu0 %v1451
        %1876 = vmatprep.subr.bf16.mxu0 %v1456
        %1877 = vmatpush1.bf16.msra.mxu0 %v1455
        %1878 = vmatprep.subr.bf16.mxu0 %v1460
        %1879 = vmatpush1.bf16.msra.mxu0 %v1459
        %1880 = vmatprep.subr.bf16.mxu0 %v1464
        %1881 = vmatpush1.bf16.msra.mxu0 %v1463
        %1882 = vmatprep.subr.bf16.mxu0 %v1468
        %1883 = vmatpush1.bf16.msra.mxu0 %v1467
        %1884 = vmatprep.subr.bf16.mxu0 %v1472
        %1885 = vmatpush1.bf16.msra.mxu0 %v1471
        %1886 = vmatprep.subr.bf16.mxu0 %v1476
        %1887 = vmatpush1.bf16.msra.mxu0 %v1475
        %1888 = vmatprep.mubr.bf16.mxu0 %v483
        %1889 = vmatmul.mubr.bf16.gmra.mrb[0].mxu0 %v482
        %v1890 = vpop.f32.mrb[0].mxu0
        %v1891 = vadd.f32 %v814, %v1890
        %v1892 = vpop.f32.mrb[0].mxu0
        %v1893 = vadd.f32 %v818, %v1892
        %v1894 = vpop.f32.mrb[0].mxu0
        %v1895 = vadd.f32 %v814, %v1894
        %v1896 = vpop.f32.mrb[0].mxu0
        %v1897 = vadd.f32 %v818, %v1896
        %1898 = vmatprep.mubr.bf16.mxu0 %v490
        %1899 = vmatmul.mubr.bf16.gmra.mrb[0].mxu0 %v489
        %v1900 = vpop.f32.mrb[0].mxu0
        %v1901 = vadd.f32 %v814, %v1900
        %v1902 = vpop.f32.mrb[0].mxu0
        %v1903 = vadd.f32 %v818, %v1902
        %v1904 = vpop.f32.mrb[0].mxu0
        %v1905 = vadd.f32 %v814, %v1904
        %v1906 = vpop.f32.mrb[0].mxu0
        %v1907 = vadd.f32 %v818, %v1906
        %1908 = vmatprep.mubr.bf16.mxu0 %v497
        %1909 = vmatmul.mubr.bf16.gmra.mrb[0].mxu0 %v496
        %v1910 = vpop.f32.mrb[0].mxu0
        %v1911 = vadd.f32 %v814, %v1910
        %v1912 = vpop.f32.mrb[0].mxu0
        %v1913 = vadd.f32 %v818, %v1912
        %v1914 = vpop.f32.mrb[0].mxu0
        %v1915 = vadd.f32 %v814, %v1914
        %v1916 = vpop.f32.mrb[0].mxu0
        %v1917 = vadd.f32 %v818, %v1916
        %1918 = vmatprep.mubr.bf16.mxu0 %v504
        %1919 = vmatmul.mubr.bf16.gmra.mrb[0].mxu0 %v503
        %v1920 = vpop.f32.mrb[0].mxu0
        %v1921 = vadd.f32 %v814, %v1920
        %v1922 = vpop.f32.mrb[0].mxu0
        %v1923 = vadd.f32 %v818, %v1922
        %v1924 = vpop.f32.mrb[0].mxu0
        %v1925 = vadd.f32 %v814, %v1924
        %v1926 = vpop.f32.mrb[0].mxu0
        %v1927 = vadd.f32 %v818, %v1926
        %1928 = vmatprep.mubr.bf16.mxu0 %v511
        %1929 = vmatmul.mubr.bf16.gmra.mrb[0].mxu0 %v510
        %v1930 = vpop.f32.mrb[0].mxu0
        %v1931 = vadd.f32 %v814, %v1930
        %v1932 = vpop.f32.mrb[0].mxu0
        %v1933 = vadd.f32 %v818, %v1932
        %v1934 = vpop.f32.mrb[0].mxu0
        %v1935 = vadd.f32 %v814, %v1934
        %v1936 = vpop.f32.mrb[0].mxu0
        %v1937 = vadd.f32 %v818, %v1936
        %1938 = vmatprep.mubr.bf16.mxu0 %v518
        %1939 = vmatmul.mubr.bf16.gmra.mrb[0].mxu0 %v517
        %v1940 = vpop.f32.mrb[0].mxu0
        %v1941 = vadd.f32 %v814, %v1940
        %v1942 = vpop.f32.mrb[0].mxu0
        %v1943 = vadd.f32 %v818, %v1942
        %v1944 = vpop.f32.mrb[0].mxu0
        %v1945 = vadd.f32 %v814, %v1944
        %v1946 = vpop.f32.mrb[0].mxu0
        %v1947 = vadd.f32 %v818, %v1946
        %1948 = vmatprep.mubr.bf16.mxu0 %v525
        %1949 = vmatmul.mubr.bf16.gmra.mrb[0].mxu0 %v524
        %v1950 = vpop.f32.mrb[0].mxu0
        %v1951 = vadd.f32 %v814, %v1950
        %v1952 = vpop.f32.mrb[0].mxu0
        %v1953 = vadd.f32 %v818, %v1952
        %v1954 = vpop.f32.mrb[0].mxu0
        %v1955 = vadd.f32 %v814, %v1954
        %v1956 = vpop.f32.mrb[0].mxu0
        %v1957 = vadd.f32 %v818, %v1956
        %1958 = vmatprep.mubr.bf16.mxu0 %v532
        %1959 = vmatmul.mubr.bf16.gmra.mrb[0].mxu0 %v531
        %v1960 = vpop.f32.mrb[0].mxu0
        %v1961 = vadd.f32 %v814, %v1960
        %v1962 = vpop.f32.mrb[0].mxu0
        %v1963 = vadd.f32 %v818, %v1962
        %v1964 = vpop.f32.mrb[0].mxu0
        %v1965 = vadd.f32 %v814, %v1964
        %v1966 = vpop.f32.mrb[0].mxu0
        %v1967 = vadd.f32 %v818, %v1966
        %1968 = vmatprep.mubr.bf16.mxu0 %v539
        %1969 = vmatmul.mubr.bf16.gmra.mrb[0].mxu0 %v538
        %v1970 = vpop.f32.mrb[0].mxu0
        %v1971 = vadd.f32 %v814, %v1970
        %v1972 = vpop.f32.mrb[0].mxu0
        %v1973 = vadd.f32 %v818, %v1972
        %v1974 = vpop.f32.mrb[0].mxu0
        %v1975 = vadd.f32 %v814, %v1974
        %v1976 = vpop.f32.mrb[0].mxu0
        %v1977 = vadd.f32 %v818, %v1976
        %1978 = vmatprep.mubr.bf16.mxu0 %v546
        %1979 = vmatmul.mubr.bf16.gmra.mrb[0].mxu0 %v545
        %v1980 = vpop.f32.mrb[0].mxu0
        %v1981 = vadd.f32 %v814, %v1980
        %v1982 = vpop.f32.mrb[0].mxu0
        %v1983 = vadd.f32 %v818, %v1982
        %v1984 = vpop.f32.mrb[0].mxu0
        %v1985 = vadd.f32 %v814, %v1984
        %v1986 = vpop.f32.mrb[0].mxu0
        %v1987 = vadd.f32 %v818, %v1986
        %1988 = vmatprep.mubr.bf16.mxu0 %v553
        %1989 = vmatmul.mubr.bf16.gmra.mrb[0].mxu0 %v552
        %v1990 = vpop.f32.mrb[0].mxu0
        %v1991 = vadd.f32 %v814, %v1990
        %v1992 = vpop.f32.mrb[0].mxu0
        %v1993 = vadd.f32 %v818, %v1992
        %v1994 = vpop.f32.mrb[0].mxu0
        %v1995 = vadd.f32 %v814, %v1994
        %v1996 = vpop.f32.mrb[0].mxu0
        %v1997 = vadd.f32 %v818, %v1996
        %1998 = vmatprep.mubr.bf16.mxu0 %v560
        %1999 = vmatmul.mubr.bf16.gmra.mrb[0].mxu0 %v559
        %v2000 = vpop.f32.mrb[0].mxu0
        %v2001 = vadd.f32 %v814, %v2000
        %v2002 = vpop.f32.mrb[0].mxu0
        %v2003 = vadd.f32 %v818, %v2002
        %v2004 = vpop.f32.mrb[0].mxu0
        %v2005 = vadd.f32 %v814, %v2004
        %v2006 = vpop.f32.mrb[0].mxu0
        %v2007 = vadd.f32 %v818, %v2006
        %2008 = vmatprep.mubr.bf16.mxu0 %v567
        %2009 = vmatmul.mubr.bf16.gmra.mrb[0].mxu0 %v566
        %v2010 = vpop.f32.mrb[0].mxu0
        %v2011 = vadd.f32 %v814, %v2010
        %v2012 = vpop.f32.mrb[0].mxu0
        %v2013 = vadd.f32 %v818, %v2012
        %v2014 = vpop.f32.mrb[0].mxu0
        %v2015 = vadd.f32 %v814, %v2014
        %v2016 = vpop.f32.mrb[0].mxu0
        %v2017 = vadd.f32 %v818, %v2016
        %2018 = vmatprep.mubr.bf16.mxu0 %v574
        %2019 = vmatmul.mubr.bf16.gmra.mrb[0].mxu0 %v573
        %v2020 = vpop.f32.mrb[0].mxu0
        %v2021 = vadd.f32 %v814, %v2020
        %v2022 = vpop.f32.mrb[0].mxu0
        %v2023 = vadd.f32 %v818, %v2022
        %v2024 = vpop.f32.mrb[0].mxu0
        %v2025 = vadd.f32 %v814, %v2024
        %v2026 = vpop.f32.mrb[0].mxu0
        %v2027 = vadd.f32 %v818, %v2026
        %2028 = vmatprep.mubr.bf16.mxu0 %v581
        %2029 = vmatmul.mubr.bf16.gmra.mrb[0].mxu0 %v580
        %v2030 = vpop.f32.mrb[0].mxu0
        %v2031 = vadd.f32 %v814, %v2030
        %v2032 = vpop.f32.mrb[0].mxu0
        %v2033 = vadd.f32 %v818, %v2032
        %v2034 = vpop.f32.mrb[0].mxu0
        %v2035 = vadd.f32 %v814, %v2034
        %v2036 = vpop.f32.mrb[0].mxu0
        %v2037 = vadd.f32 %v818, %v2036
        %2038 = vmatprep.mubr.bf16.mxu0 %v588
        %2039 = vmatmul.mubr.bf16.gmra.mrb[0].mxu0 %v587
        %v2040 = vpop.f32.mrb[0].mxu0
        %v2041 = vadd.f32 %v814, %v2040
        %v2042 = vpop.f32.mrb[0].mxu0
        %v2043 = vadd.f32 %v818, %v2042
        %v2044 = vpop.f32.mrb[0].mxu0
        %v2045 = vadd.f32 %v814, %v2044
        %v2046 = vpop.f32.mrb[0].mxu0
        %v2047 = vadd.f32 %v818, %v2046
        %2048 = vdwg.mxu0
        %2049 = vmatprep.subr.bf16.mxu0 %v1480
        %2050 = vmatpush1.bf16.msra.mxu0 %v1479
        %2051 = vmatprep.subr.bf16.mxu0 %v1484
        %2052 = vmatpush1.bf16.msra.mxu0 %v1483
        %2053 = vmatprep.subr.bf16.mxu0 %v1488
        %2054 = vmatpush1.bf16.msra.mxu0 %v1487
        %2055 = vmatprep.subr.bf16.mxu0 %v1492
        %2056 = vmatpush1.bf16.msra.mxu0 %v1491
        %2057 = vmatprep.subr.bf16.mxu0 %v1496
        %2058 = vmatpush1.bf16.msra.mxu0 %v1495
        %2059 = vmatprep.subr.bf16.mxu0 %v1500
        %2060 = vmatpush1.bf16.msra.mxu0 %v1499
        %2061 = vmatprep.subr.bf16.mxu0 %v1504
        %2062 = vmatpush1.bf16.msra.mxu0 %v1503
        %2063 = vmatprep.subr.bf16.mxu0 %v1508
        %2064 = vmatpush1.bf16.msra.mxu0 %v1507
        %2065 = vmatprep.subr.bf16.mxu0 %v1512
        %2066 = vmatpush1.bf16.msra.mxu0 %v1511
        %2067 = vmatprep.subr.bf16.mxu0 %v1516
        %2068 = vmatpush1.bf16.msra.mxu0 %v1515
        %2069 = vmatprep.subr.bf16.mxu0 %v1520
        %2070 = vmatpush1.bf16.msra.mxu0 %v1519
        %2071 = vmatprep.subr.bf16.mxu0 %v1524
        %2072 = vmatpush1.bf16.msra.mxu0 %v1523
        %2073 = vmatprep.subr.bf16.mxu0 %v1528
        %2074 = vmatpush1.bf16.msra.mxu0 %v1527
        %2075 = vmatprep.subr.bf16.mxu0 %v1532
        %2076 = vmatpush1.bf16.msra.mxu0 %v1531
        %2077 = vmatprep.subr.bf16.mxu0 %v1536
        %2078 = vmatpush1.bf16.msra.mxu0 %v1535
        %2079 = vmatprep.subr.bf16.mxu0 %v1540
        %2080 = vmatpush1.bf16.msra.mxu0 %v1539
        %2081 = vmatprep.mubr.bf16.mxu0 %v485
        %2082 = vmatmul.mubr.bf16.gmra.mrb[0].mxu0 %v484
        %v2083 = vpop.f32.mrb[0].mxu0
        %v2084 = vadd.f32 %v1891, %v2083
        %v2085 = vpop.f32.mrb[0].mxu0
        %v2086 = vadd.f32 %v1893, %v2085
        %v2087 = vpop.f32.mrb[0].mxu0
        %v2088 = vadd.f32 %v1895, %v2087
        %v2089 = vpop.f32.mrb[0].mxu0
        %v2090 = vadd.f32 %v1897, %v2089
        %2091 = vmatprep.mubr.bf16.mxu0 %v492
        %2092 = vmatmul.mubr.bf16.gmra.mrb[0].mxu0 %v491
        %v2093 = vpop.f32.mrb[0].mxu0
        %v2094 = vadd.f32 %v1901, %v2093
        %v2095 = vpop.f32.mrb[0].mxu0
        %v2096 = vadd.f32 %v1903, %v2095
        %v2097 = vpop.f32.mrb[0].mxu0
        %v2098 = vadd.f32 %v1905, %v2097
        %v2099 = vpop.f32.mrb[0].mxu0
        %v2100 = vadd.f32 %v1907, %v2099
        %2101 = vmatprep.mubr.bf16.mxu0 %v499
        %2102 = vmatmul.mubr.bf16.gmra.mrb[0].mxu0 %v498
        %v2103 = vpop.f32.mrb[0].mxu0
        %v2104 = vadd.f32 %v1911, %v2103
        %v2105 = vpop.f32.mrb[0].mxu0
        %v2106 = vadd.f32 %v1913, %v2105
        %v2107 = vpop.f32.mrb[0].mxu0
        %v2108 = vadd.f32 %v1915, %v2107
        %v2109 = vpop.f32.mrb[0].mxu0
        %v2110 = vadd.f32 %v1917, %v2109
        %2111 = vmatprep.mubr.bf16.mxu0 %v506
        %2112 = vmatmul.mubr.bf16.gmra.mrb[0].mxu0 %v505
        %v2113 = vpop.f32.mrb[0].mxu0
        %v2114 = vadd.f32 %v1921, %v2113
        %v2115 = vpop.f32.mrb[0].mxu0
        %v2116 = vadd.f32 %v1923, %v2115
        %v2117 = vpop.f32.mrb[0].mxu0
        %v2118 = vadd.f32 %v1925, %v2117
        %v2119 = vpop.f32.mrb[0].mxu0
        %v2120 = vadd.f32 %v1927, %v2119
        %2121 = vmatprep.mubr.bf16.mxu0 %v513
        %2122 = vmatmul.mubr.bf16.gmra.mrb[0].mxu0 %v512
        %v2123 = vpop.f32.mrb[0].mxu0
        %v2124 = vadd.f32 %v1931, %v2123
        %v2125 = vpop.f32.mrb[0].mxu0
        %v2126 = vadd.f32 %v1933, %v2125
        %v2127 = vpop.f32.mrb[0].mxu0
        %v2128 = vadd.f32 %v1935, %v2127
        %v2129 = vpop.f32.mrb[0].mxu0
        %v2130 = vadd.f32 %v1937, %v2129
        %2131 = vmatprep.mubr.bf16.mxu0 %v520
        %2132 = vmatmul.mubr.bf16.gmra.mrb[0].mxu0 %v519
        %v2133 = vpop.f32.mrb[0].mxu0
        %v2134 = vadd.f32 %v1941, %v2133
        %v2135 = vpop.f32.mrb[0].mxu0
        %v2136 = vadd.f32 %v1943, %v2135
        %v2137 = vpop.f32.mrb[0].mxu0
        %v2138 = vadd.f32 %v1945, %v2137
        %v2139 = vpop.f32.mrb[0].mxu0
        %v2140 = vadd.f32 %v1947, %v2139
        %2141 = vmatprep.mubr.bf16.mxu0 %v527
        %2142 = vmatmul.mubr.bf16.gmra.mrb[0].mxu0 %v526
        %v2143 = vpop.f32.mrb[0].mxu0
        %v2144 = vadd.f32 %v1951, %v2143
        %v2145 = vpop.f32.mrb[0].mxu0
        %v2146 = vadd.f32 %v1953, %v2145
        %v2147 = vpop.f32.mrb[0].mxu0
        %v2148 = vadd.f32 %v1955, %v2147
        %v2149 = vpop.f32.mrb[0].mxu0
        %v2150 = vadd.f32 %v1957, %v2149
        %2151 = vmatprep.mubr.bf16.mxu0 %v534
        %2152 = vmatmul.mubr.bf16.gmra.mrb[0].mxu0 %v533
        %v2153 = vpop.f32.mrb[0].mxu0
        %v2154 = vadd.f32 %v1961, %v2153
        %v2155 = vpop.f32.mrb[0].mxu0
        %v2156 = vadd.f32 %v1963, %v2155
        %v2157 = vpop.f32.mrb[0].mxu0
        %v2158 = vadd.f32 %v1965, %v2157
        %v2159 = vpop.f32.mrb[0].mxu0
        %v2160 = vadd.f32 %v1967, %v2159
        %2161 = vmatprep.mubr.bf16.mxu0 %v541
        %2162 = vmatmul.mubr.bf16.gmra.mrb[0].mxu0 %v540
        %v2163 = vpop.f32.mrb[0].mxu0
        %v2164 = vadd.f32 %v1971, %v2163
        %v2165 = vpop.f32.mrb[0].mxu0
        %v2166 = vadd.f32 %v1973, %v2165
        %v2167 = vpop.f32.mrb[0].mxu0
        %v2168 = vadd.f32 %v1975, %v2167
        %v2169 = vpop.f32.mrb[0].mxu0
        %v2170 = vadd.f32 %v1977, %v2169
        %2171 = vmatprep.mubr.bf16.mxu0 %v548
        %2172 = vmatmul.mubr.bf16.gmra.mrb[0].mxu0 %v547
        %v2173 = vpop.f32.mrb[0].mxu0
        %v2174 = vadd.f32 %v1981, %v2173
        %v2175 = vpop.f32.mrb[0].mxu0
        %v2176 = vadd.f32 %v1983, %v2175
        %v2177 = vpop.f32.mrb[0].mxu0
        %v2178 = vadd.f32 %v1985, %v2177
        %v2179 = vpop.f32.mrb[0].mxu0
        %v2180 = vadd.f32 %v1987, %v2179
        %2181 = vmatprep.mubr.bf16.mxu0 %v555
        %2182 = vmatmul.mubr.bf16.gmra.mrb[0].mxu0 %v554
        %v2183 = vpop.f32.mrb[0].mxu0
        %v2184 = vadd.f32 %v1991, %v2183
        %v2185 = vpop.f32.mrb[0].mxu0
        %v2186 = vadd.f32 %v1993, %v2185
        %v2187 = vpop.f32.mrb[0].mxu0
        %v2188 = vadd.f32 %v1995, %v2187
        %v2189 = vpop.f32.mrb[0].mxu0
        %v2190 = vadd.f32 %v1997, %v2189
        %2191 = vmatprep.mubr.bf16.mxu0 %v562
        %2192 = vmatmul.mubr.bf16.gmra.mrb[0].mxu0 %v561
        %v2193 = vpop.f32.mrb[0].mxu0
        %v2194 = vadd.f32 %v2001, %v2193
        %v2195 = vpop.f32.mrb[0].mxu0
        %v2196 = vadd.f32 %v2003, %v2195
        %v2197 = vpop.f32.mrb[0].mxu0
        %v2198 = vadd.f32 %v2005, %v2197
        %v2199 = vpop.f32.mrb[0].mxu0
        %v2200 = vadd.f32 %v2007, %v2199
        %2201 = vmatprep.mubr.bf16.mxu0 %v569
        %2202 = vmatmul.mubr.bf16.gmra.mrb[0].mxu0 %v568
        %v2203 = vpop.f32.mrb[0].mxu0
        %v2204 = vadd.f32 %v2011, %v2203
        %v2205 = vpop.f32.mrb[0].mxu0
        %v2206 = vadd.f32 %v2013, %v2205
        %v2207 = vpop.f32.mrb[0].mxu0
        %v2208 = vadd.f32 %v2015, %v2207
        %v2209 = vpop.f32.mrb[0].mxu0
        %v2210 = vadd.f32 %v2017, %v2209
        %2211 = vmatprep.mubr.bf16.mxu0 %v576
        %2212 = vmatmul.mubr.bf16.gmra.mrb[0].mxu0 %v575
        %v2213 = vpop.f32.mrb[0].mxu0
        %v2214 = vadd.f32 %v2021, %v2213
        %v2215 = vpop.f32.mrb[0].mxu0
        %v2216 = vadd.f32 %v2023, %v2215
        %v2217 = vpop.f32.mrb[0].mxu0
        %v2218 = vadd.f32 %v2025, %v2217
        %v2219 = vpop.f32.mrb[0].mxu0
        %v2220 = vadd.f32 %v2027, %v2219
        %2221 = vmatprep.mubr.bf16.mxu0 %v583
        %2222 = vmatmul.mubr.bf16.gmra.mrb[0].mxu0 %v582
        %v2223 = vpop.f32.mrb[0].mxu0
        %v2224 = vadd.f32 %v2031, %v2223
        %v2225 = vpop.f32.mrb[0].mxu0
        %v2226 = vadd.f32 %v2033, %v2225
        %v2227 = vpop.f32.mrb[0].mxu0
        %v2228 = vadd.f32 %v2035, %v2227
        %v2229 = vpop.f32.mrb[0].mxu0
        %v2230 = vadd.f32 %v2037, %v2229
        %2231 = vmatprep.mubr.bf16.mxu0 %v590
        %2232 = vmatmul.mubr.bf16.gmra.mrb[0].mxu0 %v589
        %v2233 = vpop.f32.mrb[0].mxu0
        %v2234 = vadd.f32 %v2041, %v2233
        %v2235 = vpop.f32.mrb[0].mxu0
        %v2236 = vadd.f32 %v2043, %v2235
        %v2237 = vpop.f32.mrb[0].mxu0
        %v2238 = vadd.f32 %v2045, %v2237
        %v2239 = vpop.f32.mrb[0].mxu0
        %v2240 = vadd.f32 %v2047, %v2239
        %2241 = vdwg.mxu0
        %2242 = vmatprep.subr.bf16.mxu0 %v1544
        %2243 = vmatpush1.bf16.msra.mxu0 %v1543
        %2244 = vmatprep.subr.bf16.mxu0 %v1548
        %2245 = vmatpush1.bf16.msra.mxu0 %v1547
        %2246 = vmatprep.subr.bf16.mxu0 %v1552
        %2247 = vmatpush1.bf16.msra.mxu0 %v1551
        %2248 = vmatprep.subr.bf16.mxu0 %v1556
        %2249 = vmatpush1.bf16.msra.mxu0 %v1555
        %2250 = vmatprep.subr.bf16.mxu0 %v1560
        %2251 = vmatpush1.bf16.msra.mxu0 %v1559
        %2252 = vmatprep.subr.bf16.mxu0 %v1564
        %2253 = vmatpush1.bf16.msra.mxu0 %v1563
        %2254 = vmatprep.subr.bf16.mxu0 %v1568
        %2255 = vmatpush1.bf16.msra.mxu0 %v1567
        %2256 = vmatprep.subr.bf16.mxu0 %v1572
        %2257 = vmatpush1.bf16.msra.mxu0 %v1571
        %2258 = vmatprep.subr.bf16.mxu0 %v1576
        %2259 = vmatpush1.bf16.msra.mxu0 %v1575
        %2260 = vmatprep.subr.bf16.mxu0 %v1580
        %2261 = vmatpush1.bf16.msra.mxu0 %v1579
        %2262 = vmatprep.subr.bf16.mxu0 %v1584
        %2263 = vmatpush1.bf16.msra.mxu0 %v1583
        %2264 = vmatprep.subr.bf16.mxu0 %v1588
        %2265 = vmatpush1.bf16.msra.mxu0 %v1587
        %2266 = vmatprep.subr.bf16.mxu0 %v1592
        %2267 = vmatpush1.bf16.msra.mxu0 %v1591
        %2268 = vmatprep.subr.bf16.mxu0 %v1596
        %2269 = vmatpush1.bf16.msra.mxu0 %v1595
        %2270 = vmatprep.subr.bf16.mxu0 %v1600
        %2271 = vmatpush1.bf16.msra.mxu0 %v1599
        %2272 = vmatprep.subr.bf16.mxu0 %v1604
        %2273 = vmatpush1.bf16.msra.mxu0 %v1603
        %2274 = vmatprep.mubr.bf16.mxu0 %v487
        %2275 = vmatmul.mubr.bf16.gmra.mrb[0].mxu0 %v486
        %v2276 = vpop.f32.mrb[0].mxu0
        %v2277 = vadd.f32 %v2084, %v2276
        %v2278 = vpop.f32.mrb[0].mxu0
        %v2279 = vadd.f32 %v2086, %v2278
        %v2280 = vpop.f32.mrb[0].mxu0
        %v2281 = vadd.f32 %v2088, %v2280
        %v2282 = vpop.f32.mrb[0].mxu0
        %v2283 = vadd.f32 %v2090, %v2282
        %2284 = vmatprep.mubr.bf16.mxu0 %v494
        %2285 = vmatmul.mubr.bf16.gmra.mrb[0].mxu0 %v493
        %v2286 = vpop.f32.mrb[0].mxu0
        %v2287 = vadd.f32 %v2094, %v2286
        %v2288 = vpop.f32.mrb[0].mxu0
        %v2289 = vadd.f32 %v2096, %v2288
        %v2290 = vpop.f32.mrb[0].mxu0
        %v2291 = vadd.f32 %v2098, %v2290
        %v2292 = vpop.f32.mrb[0].mxu0
        %v2293 = vadd.f32 %v2100, %v2292
        %2294 = vmatprep.mubr.bf16.mxu0 %v501
        %2295 = vmatmul.mubr.bf16.gmra.mrb[0].mxu0 %v500
        %v2296 = vpop.f32.mrb[0].mxu0
        %v2297 = vadd.f32 %v2104, %v2296
        %v2298 = vpop.f32.mrb[0].mxu0
        %v2299 = vadd.f32 %v2106, %v2298
        %v2300 = vpop.f32.mrb[0].mxu0
        %v2301 = vadd.f32 %v2108, %v2300
        %v2302 = vpop.f32.mrb[0].mxu0
        %v2303 = vadd.f32 %v2110, %v2302
        %2304 = vmatprep.mubr.bf16.mxu0 %v508
        %2305 = vmatmul.mubr.bf16.gmra.mrb[0].mxu0 %v507
        %v2306 = vpop.f32.mrb[0].mxu0
        %v2307 = vadd.f32 %v2114, %v2306
        %v2308 = vpop.f32.mrb[0].mxu0
        %v2309 = vadd.f32 %v2116, %v2308
        %v2310 = vpop.f32.mrb[0].mxu0
        %v2311 = vadd.f32 %v2118, %v2310
        %v2312 = vpop.f32.mrb[0].mxu0
        %v2313 = vadd.f32 %v2120, %v2312
        %2314 = vmatprep.mubr.bf16.mxu0 %v515
        %2315 = vmatmul.mubr.bf16.gmra.mrb[0].mxu0 %v514
        %v2316 = vpop.f32.mrb[0].mxu0
        %v2317 = vadd.f32 %v2124, %v2316
        %v2318 = vpop.f32.mrb[0].mxu0
        %v2319 = vadd.f32 %v2126, %v2318
        %v2320 = vpop.f32.mrb[0].mxu0
        %v2321 = vadd.f32 %v2128, %v2320
        %v2322 = vpop.f32.mrb[0].mxu0
        %v2323 = vadd.f32 %v2130, %v2322
        %2324 = vmatprep.mubr.bf16.mxu0 %v522
        %2325 = vmatmul.mubr.bf16.gmra.mrb[0].mxu0 %v521
        %v2326 = vpop.f32.mrb[0].mxu0
        %v2327 = vadd.f32 %v2134, %v2326
        %v2328 = vpop.f32.mrb[0].mxu0
        %v2329 = vadd.f32 %v2136, %v2328
        %v2330 = vpop.f32.mrb[0].mxu0
        %v2331 = vadd.f32 %v2138, %v2330
        %v2332 = vpop.f32.mrb[0].mxu0
        %v2333 = vadd.f32 %v2140, %v2332
        %2334 = vmatprep.mubr.bf16.mxu0 %v529
        %2335 = vmatmul.mubr.bf16.gmra.mrb[0].mxu0 %v528
        %v2336 = vpop.f32.mrb[0].mxu0
        %v2337 = vadd.f32 %v2144, %v2336
        %v2338 = vpop.f32.mrb[0].mxu0
        %v2339 = vadd.f32 %v2146, %v2338
        %v2340 = vpop.f32.mrb[0].mxu0
        %v2341 = vadd.f32 %v2148, %v2340
        %v2342 = vpop.f32.mrb[0].mxu0
        %v2343 = vadd.f32 %v2150, %v2342
        %2344 = vmatprep.mubr.bf16.mxu0 %v536
        %2345 = vmatmul.mubr.bf16.gmra.mrb[0].mxu0 %v535
        %v2346 = vpop.f32.mrb[0].mxu0
        %v2347 = vadd.f32 %v2154, %v2346
        %v2348 = vpop.f32.mrb[0].mxu0
        %v2349 = vadd.f32 %v2156, %v2348
        %v2350 = vpop.f32.mrb[0].mxu0
        %v2351 = vadd.f32 %v2158, %v2350
        %v2352 = vpop.f32.mrb[0].mxu0
        %v2353 = vadd.f32 %v2160, %v2352
        %2354 = vmatprep.mubr.bf16.mxu0 %v543
        %2355 = vmatmul.mubr.bf16.gmra.mrb[0].mxu0 %v542
        %v2356 = vpop.f32.mrb[0].mxu0
        %v2357 = vadd.f32 %v2164, %v2356
        %v2358 = vpop.f32.mrb[0].mxu0
        %v2359 = vadd.f32 %v2166, %v2358
        %v2360 = vpop.f32.mrb[0].mxu0
        %v2361 = vadd.f32 %v2168, %v2360
        %v2362 = vpop.f32.mrb[0].mxu0
        %v2363 = vadd.f32 %v2170, %v2362
        %2364 = vmatprep.mubr.bf16.mxu0 %v550
        %2365 = vmatmul.mubr.bf16.gmra.mrb[0].mxu0 %v549
        %v2366 = vpop.f32.mrb[0].mxu0
        %v2367 = vadd.f32 %v2174, %v2366
        %v2368 = vpop.f32.mrb[0].mxu0
        %v2369 = vadd.f32 %v2176, %v2368
        %v2370 = vpop.f32.mrb[0].mxu0
        %v2371 = vadd.f32 %v2178, %v2370
        %v2372 = vpop.f32.mrb[0].mxu0
        %v2373 = vadd.f32 %v2180, %v2372
        %2374 = vmatprep.mubr.bf16.mxu0 %v557
        %2375 = vmatmul.mubr.bf16.gmra.mrb[0].mxu0 %v556
        %v2376 = vpop.f32.mrb[0].mxu0
        %v2377 = vadd.f32 %v2184, %v2376
        %v2378 = vpop.f32.mrb[0].mxu0
        %v2379 = vadd.f32 %v2186, %v2378
        %v2380 = vpop.f32.mrb[0].mxu0
        %v2381 = vadd.f32 %v2188, %v2380
        %v2382 = vpop.f32.mrb[0].mxu0
        %v2383 = vadd.f32 %v2190, %v2382
        %2384 = vmatprep.mubr.bf16.mxu0 %v564
        %2385 = vmatmul.mubr.bf16.gmra.mrb[0].mxu0 %v563
        %v2386 = vpop.f32.mrb[0].mxu0
        %v2387 = vadd.f32 %v2194, %v2386
        %v2388 = vpop.f32.mrb[0].mxu0
        %v2389 = vadd.f32 %v2196, %v2388
        %v2390 = vpop.f32.mrb[0].mxu0
        %v2391 = vadd.f32 %v2198, %v2390
        %v2392 = vpop.f32.mrb[0].mxu0
        %v2393 = vadd.f32 %v2200, %v2392
        %2394 = vmatprep.mubr.bf16.mxu0 %v571
        %2395 = vmatmul.mubr.bf16.gmra.mrb[0].mxu0 %v570
        %v2396 = vpop.f32.mrb[0].mxu0
        %v2397 = vadd.f32 %v2204, %v2396
        %v2398 = vpop.f32.mrb[0].mxu0
        %v2399 = vadd.f32 %v2206, %v2398
        %v2400 = vpop.f32.mrb[0].mxu0
        %v2401 = vadd.f32 %v2208, %v2400
        %v2402 = vpop.f32.mrb[0].mxu0
        %v2403 = vadd.f32 %v2210, %v2402
        %2404 = vmatprep.mubr.bf16.mxu0 %v578
        %2405 = vmatmul.mubr.bf16.gmra.mrb[0].mxu0 %v577
        %v2406 = vpop.f32.mrb[0].mxu0
        %v2407 = vadd.f32 %v2214, %v2406
        %v2408 = vpop.f32.mrb[0].mxu0
        %v2409 = vadd.f32 %v2216, %v2408
        %v2410 = vpop.f32.mrb[0].mxu0
        %v2411 = vadd.f32 %v2218, %v2410
        %v2412 = vpop.f32.mrb[0].mxu0
        %v2413 = vadd.f32 %v2220, %v2412
        %2414 = vmatprep.mubr.bf16.mxu0 %v585
        %2415 = vmatmul.mubr.bf16.gmra.mrb[0].mxu0 %v584
        %v2416 = vpop.f32.mrb[0].mxu0
        %v2417 = vadd.f32 %v2224, %v2416
        %v2418 = vpop.f32.mrb[0].mxu0
        %v2419 = vadd.f32 %v2226, %v2418
        %v2420 = vpop.f32.mrb[0].mxu0
        %v2421 = vadd.f32 %v2228, %v2420
        %v2422 = vpop.f32.mrb[0].mxu0
        %v2423 = vadd.f32 %v2230, %v2422
        %2424 = vmatprep.mubr.bf16.mxu0 %v592
        %2425 = vmatmul.mubr.bf16.gmra.mrb[0].mxu0 %v591
        %v2426 = vpop.f32.mrb[0].mxu0
        %v2427 = vadd.f32 %v2234, %v2426
        %v2428 = vpop.f32.mrb[0].mxu0
        %v2429 = vadd.f32 %v2236, %v2428
        %v2430 = vpop.f32.mrb[0].mxu0
        %v2431 = vadd.f32 %v2238, %v2430
        %v2432 = vpop.f32.mrb[0].mxu0
        %v2433 = vadd.f32 %v2240, %v2432
        %2434 = vdwg.mxu0
        %2435 = vmatprep.subr.bf16.mxu0 %v1608
        %2436 = vmatpush1.bf16.msra.mxu0 %v1607
        %2437 = vmatprep.subr.bf16.mxu0 0
        %2438 = vmatpush1.bf16.msra.mxu0 0
        %2439 = vmatprep.subr.bf16.mxu0 0
        %2440 = vmatpush1.bf16.msra.mxu0 0
        %2441 = vmatprep.subr.bf16.mxu0 0
        %2442 = vmatpush1.bf16.msra.mxu0 0
        %2443 = vmatprep.subr.bf16.mxu0 0
        %2444 = vmatpush1.bf16.msra.mxu0 0
        %2445 = vmatprep.subr.bf16.mxu0 0
        %2446 = vmatpush1.bf16.msra.mxu0 0
        %2447 = vmatprep.subr.bf16.mxu0 0
        %2448 = vmatpush1.bf16.msra.mxu0 0
        %2449 = vmatprep.subr.bf16.mxu0 0
        %2450 = vmatpush1.bf16.msra.mxu0 0
        %2451 = vmatprep.subr.bf16.mxu0 0
        %2452 = vmatpush1.bf16.msra.mxu0 0
        %2453 = vmatprep.subr.bf16.mxu0 0
        %2454 = vmatpush1.bf16.msra.mxu0 0
        %2455 = vmatprep.subr.bf16.mxu0 0
        %2456 = vmatpush1.bf16.msra.mxu0 0
        %2457 = vmatprep.subr.bf16.mxu0 0
        %2458 = vmatpush1.bf16.msra.mxu0 0
        %2459 = vmatprep.subr.bf16.mxu0 0
        %2460 = vmatpush1.bf16.msra.mxu0 0
        %2461 = vmatprep.subr.bf16.mxu0 0
        %2462 = vmatpush1.bf16.msra.mxu0 0
        %2463 = vmatprep.subr.bf16.mxu0 0
        %2464 = vmatpush1.bf16.msra.mxu0 0
        %2465 = vmatprep.subr.bf16.mxu0 0
        %2466 = vmatpush1.bf16.msra.mxu0 0
        %2467 = vmatprep.mubr.bf16.mxu0 0
        %2468 = vmatmul.mubr.bf16.gmra.mrb[0].mxu0 %v1809
        %v2469 = vpop.f32.mrb[0].mxu0
        %v2470 = vadd.f32 %v2277, %v2469
        %v2471 = vpop.f32.mrb[0].mxu0
        %v2472 = vadd.f32 %v2279, %v2471
        %v2473 = vpop.f32.mrb[0].mxu0
        %v2474 = vadd.f32 %v2281, %v2473
        %v2475 = vpop.f32.mrb[0].mxu0
        %v2476 = vadd.f32 %v2283, %v2475
        %2477 = vmatprep.mubr.bf16.mxu0 0
        %2478 = vmatmul.mubr.bf16.gmra.mrb[0].mxu0 %v1812
        %v2479 = vpop.f32.mrb[0].mxu0
        %v2480 = vadd.f32 %v2287, %v2479
        %v2481 = vpop.f32.mrb[0].mxu0
        %v2482 = vadd.f32 %v2289, %v2481
        %v2483 = vpop.f32.mrb[0].mxu0
        %v2484 = vadd.f32 %v2291, %v2483
        %v2485 = vpop.f32.mrb[0].mxu0
        %v2486 = vadd.f32 %v2293, %v2485
        %2487 = vmatprep.mubr.bf16.mxu0 0
        %2488 = vmatmul.mubr.bf16.gmra.mrb[0].mxu0 %v1815
        %v2489 = vpop.f32.mrb[0].mxu0
        %v2490 = vadd.f32 %v2297, %v2489
        %v2491 = vpop.f32.mrb[0].mxu0
        %v2492 = vadd.f32 %v2299, %v2491
        %v2493 = vpop.f32.mrb[0].mxu0
        %v2494 = vadd.f32 %v2301, %v2493
        %v2495 = vpop.f32.mrb[0].mxu0
        %v2496 = vadd.f32 %v2303, %v2495
        %2497 = vmatprep.mubr.bf16.mxu0 0
        %2498 = vmatmul.mubr.bf16.gmra.mrb[0].mxu0 %v1818
        %v2499 = vpop.f32.mrb[0].mxu0
        %v2500 = vadd.f32 %v2307, %v2499
        %v2501 = vpop.f32.mrb[0].mxu0
        %v2502 = vadd.f32 %v2309, %v2501
        %v2503 = vpop.f32.mrb[0].mxu0
        %v2504 = vadd.f32 %v2311, %v2503
        %v2505 = vpop.f32.mrb[0].mxu0
        %v2506 = vadd.f32 %v2313, %v2505
        %2507 = vmatprep.mubr.bf16.mxu0 0
        %2508 = vmatmul.mubr.bf16.gmra.mrb[0].mxu0 %v1821
        %v2509 = vpop.f32.mrb[0].mxu0
        %v2510 = vadd.f32 %v2317, %v2509
        %v2511 = vpop.f32.mrb[0].mxu0
        %v2512 = vadd.f32 %v2319, %v2511
        %v2513 = vpop.f32.mrb[0].mxu0
        %v2514 = vadd.f32 %v2321, %v2513
        %v2515 = vpop.f32.mrb[0].mxu0
        %v2516 = vadd.f32 %v2323, %v2515
        %2517 = vmatprep.mubr.bf16.mxu0 0
        %2518 = vmatmul.mubr.bf16.gmra.mrb[0].mxu0 %v1824
        %v2519 = vpop.f32.mrb[0].mxu0
        %v2520 = vadd.f32 %v2327, %v2519
        %v2521 = vpop.f32.mrb[0].mxu0
        %v2522 = vadd.f32 %v2329, %v2521
        %v2523 = vpop.f32.mrb[0].mxu0
        %v2524 = vadd.f32 %v2331, %v2523
        %v2525 = vpop.f32.mrb[0].mxu0
        %v2526 = vadd.f32 %v2333, %v2525
        %2527 = vmatprep.mubr.bf16.mxu0 0
        %2528 = vmatmul.mubr.bf16.gmra.mrb[0].mxu0 %v1827
        %v2529 = vpop.f32.mrb[0].mxu0
        %v2530 = vadd.f32 %v2337, %v2529
        %v2531 = vpop.f32.mrb[0].mxu0
        %v2532 = vadd.f32 %v2339, %v2531
        %v2533 = vpop.f32.mrb[0].mxu0
        %v2534 = vadd.f32 %v2341, %v2533
        %v2535 = vpop.f32.mrb[0].mxu0
        %v2536 = vadd.f32 %v2343, %v2535
        %2537 = vmatprep.mubr.bf16.mxu0 0
        %2538 = vmatmul.mubr.bf16.gmra.mrb[0].mxu0 %v1830
        %v2539 = vpop.f32.mrb[0].mxu0
        %v2540 = vadd.f32 %v2347, %v2539
        %v2541 = vpop.f32.mrb[0].mxu0
        %v2542 = vadd.f32 %v2349, %v2541
        %v2543 = vpop.f32.mrb[0].mxu0
        %v2544 = vadd.f32 %v2351, %v2543
        %v2545 = vpop.f32.mrb[0].mxu0
        %v2546 = vadd.f32 %v2353, %v2545
        %2547 = vmatprep.mubr.bf16.mxu0 0
        %2548 = vmatmul.mubr.bf16.gmra.mrb[0].mxu0 %v1833
        %v2549 = vpop.f32.mrb[0].mxu0
        %v2550 = vadd.f32 %v2357, %v2549
        %v2551 = vpop.f32.mrb[0].mxu0
        %v2552 = vadd.f32 %v2359, %v2551
        %v2553 = vpop.f32.mrb[0].mxu0
        %v2554 = vadd.f32 %v2361, %v2553
        %v2555 = vpop.f32.mrb[0].mxu0
        %v2556 = vadd.f32 %v2363, %v2555
        %2557 = vmatprep.mubr.bf16.mxu0 0
        %2558 = vmatmul.mubr.bf16.gmra.mrb[0].mxu0 %v1836
        %v2559 = vpop.f32.mrb[0].mxu0
        %v2560 = vadd.f32 %v2367, %v2559
        %v2561 = vpop.f32.mrb[0].mxu0
        %v2562 = vadd.f32 %v2369, %v2561
        %v2563 = vpop.f32.mrb[0].mxu0
        %v2564 = vadd.f32 %v2371, %v2563
        %v2565 = vpop.f32.mrb[0].mxu0
        %v2566 = vadd.f32 %v2373, %v2565
        %2567 = vmatprep.mubr.bf16.mxu0 0
        %2568 = vmatmul.mubr.bf16.gmra.mrb[0].mxu0 %v1839
        %v2569 = vpop.f32.mrb[0].mxu0
        %v2570 = vadd.f32 %v2377, %v2569
        %v2571 = vpop.f32.mrb[0].mxu0
        %v2572 = vadd.f32 %v2379, %v2571
        %v2573 = vpop.f32.mrb[0].mxu0
        %v2574 = vadd.f32 %v2381, %v2573
        %v2575 = vpop.f32.mrb[0].mxu0
        %v2576 = vadd.f32 %v2383, %v2575
        %2577 = vmatprep.mubr.bf16.mxu0 0
        %2578 = vmatmul.mubr.bf16.gmra.mrb[0].mxu0 %v1842
        %v2579 = vpop.f32.mrb[0].mxu0
        %v2580 = vadd.f32 %v2387, %v2579
        %v2581 = vpop.f32.mrb[0].mxu0
        %v2582 = vadd.f32 %v2389, %v2581
        %v2583 = vpop.f32.mrb[0].mxu0
        %v2584 = vadd.f32 %v2391, %v2583
        %v2585 = vpop.f32.mrb[0].mxu0
        %v2586 = vadd.f32 %v2393, %v2585
        %2587 = vmatprep.mubr.bf16.mxu0 0
        %2588 = vmatmul.mubr.bf16.gmra.mrb[0].mxu0 %v1845
        %v2589 = vpop.f32.mrb[0].mxu0
        %v2590 = vadd.f32 %v2397, %v2589
        %v2591 = vpop.f32.mrb[0].mxu0
        %v2592 = vadd.f32 %v2399, %v2591
        %v2593 = vpop.f32.mrb[0].mxu0
        %v2594 = vadd.f32 %v2401, %v2593
        %v2595 = vpop.f32.mrb[0].mxu0
        %v2596 = vadd.f32 %v2403, %v2595
        %2597 = vmatprep.mubr.bf16.mxu0 0
        %2598 = vmatmul.mubr.bf16.gmra.mrb[0].mxu0 %v1848
        %v2599 = vpop.f32.mrb[0].mxu0
        %v2600 = vadd.f32 %v2407, %v2599
        %v2601 = vpop.f32.mrb[0].mxu0
        %v2602 = vadd.f32 %v2409, %v2601
        %v2603 = vpop.f32.mrb[0].mxu0
        %v2604 = vadd.f32 %v2411, %v2603
        %v2605 = vpop.f32.mrb[0].mxu0
        %v2606 = vadd.f32 %v2413, %v2605
        %2607 = vmatprep.mubr.bf16.mxu0 0
        %2608 = vmatmul.mubr.bf16.gmra.mrb[0].mxu0 %v1851
        %v2609 = vpop.f32.mrb[0].mxu0
        %v2610 = vadd.f32 %v2417, %v2609
        %v2611 = vpop.f32.mrb[0].mxu0
        %v2612 = vadd.f32 %v2419, %v2611
        %v2613 = vpop.f32.mrb[0].mxu0
        %v2614 = vadd.f32 %v2421, %v2613
        %v2615 = vpop.f32.mrb[0].mxu0
        %v2616 = vadd.f32 %v2423, %v2615
        %2617 = vmatprep.mubr.bf16.mxu0 0
        %2618 = vmatmul.mubr.bf16.gmra.mrb[0].mxu0 %v1854
        %v2619 = vpop.f32.mrb[0].mxu0
        %v2620 = vadd.f32 %v2427, %v2619
        %v2621 = vpop.f32.mrb[0].mxu0
        %v2622 = vadd.f32 %v2429, %v2621
        %v2623 = vpop.f32.mrb[0].mxu0
        %v2624 = vadd.f32 %v2431, %v2623
        %v2625 = vpop.f32.mrb[0].mxu0
        %v2626 = vadd.f32 %v2433, %v2625
        %2627 = vdwg.mxu0
        %2628 = vmatprep.subr.bf16.mxu0 %v1418
        %2629 = vmatpush1.bf16.msra.mxu0 %v1417
        %2630 = vmatprep.subr.bf16.mxu0 %v1422
        %2631 = vmatpush1.bf16.msra.mxu0 %v1421
        %2632 = vmatprep.subr.bf16.mxu0 %v1426
        %2633 = vmatpush1.bf16.msra.mxu0 %v1425
        %2634 = vmatprep.subr.bf16.mxu0 %v1430
        %2635 = vmatpush1.bf16.msra.mxu0 %v1429
        %2636 = vmatprep.subr.bf16.mxu0 %v1434
        %2637 = vmatpush1.bf16.msra.mxu0 %v1433
        %2638 = vmatprep.subr.bf16.mxu0 %v1438
        %2639 = vmatpush1.bf16.msra.mxu0 %v1437
        %2640 = vmatprep.subr.bf16.mxu0 %v1442
        %2641 = vmatpush1.bf16.msra.mxu0 %v1441
        %2642 = vmatprep.subr.bf16.mxu0 %v1446
        %2643 = vmatpush1.bf16.msra.mxu0 %v1445
        %2644 = vmatprep.subr.bf16.mxu0 %v1450
        %2645 = vmatpush1.bf16.msra.mxu0 %v1449
        %2646 = vmatprep.subr.bf16.mxu0 %v1454
        %2647 = vmatpush1.bf16.msra.mxu0 %v1453
        %2648 = vmatprep.subr.bf16.mxu0 %v1458
        %2649 = vmatpush1.bf16.msra.mxu0 %v1457
        %2650 = vmatprep.subr.bf16.mxu0 %v1462
        %2651 = vmatpush1.bf16.msra.mxu0 %v1461
        %2652 = vmatprep.subr.bf16.mxu0 %v1466
        %2653 = vmatpush1.bf16.msra.mxu0 %v1465
        %2654 = vmatprep.subr.bf16.mxu0 %v1470
        %2655 = vmatpush1.bf16.msra.mxu0 %v1469
        %2656 = vmatprep.subr.bf16.mxu0 %v1474
        %2657 = vmatpush1.bf16.msra.mxu0 %v1473
        %2658 = vmatprep.subr.bf16.mxu0 %v1478
        %2659 = vmatpush1.bf16.msra.mxu0 %v1477
        %2660 = vmatprep.mubr.bf16.mxu0 %v483
        %2661 = vmatmul.mubr.bf16.gmra.mrb[0].mxu0 %v482
        %v2662 = vpop.f32.mrb[0].mxu0
        %v2663 = vadd.f32 %v822, %v2662
        %v2664 = vpop.f32.mrb[0].mxu0
        %v2665 = vadd.f32 %v826, %v2664
        %v2666 = vpop.f32.mrb[0].mxu0
        %v2667 = vadd.f32 %v822, %v2666
        %v2668 = vpop.f32.mrb[0].mxu0
        %v2669 = vadd.f32 %v826, %v2668
        %2670 = vmatprep.mubr.bf16.mxu0 %v490
        %2671 = vmatmul.mubr.bf16.gmra.mrb[0].mxu0 %v489
        %v2672 = vpop.f32.mrb[0].mxu0
        %v2673 = vadd.f32 %v822, %v2672
        %v2674 = vpop.f32.mrb[0].mxu0
        %v2675 = vadd.f32 %v826, %v2674
        %v2676 = vpop.f32.mrb[0].mxu0
        %v2677 = vadd.f32 %v822, %v2676
        %v2678 = vpop.f32.mrb[0].mxu0
        %v2679 = vadd.f32 %v826, %v2678
        %2680 = vmatprep.mubr.bf16.mxu0 %v497
        %2681 = vmatmul.mubr.bf16.gmra.mrb[0].mxu0 %v496
        %v2682 = vpop.f32.mrb[0].mxu0
        %v2683 = vadd.f32 %v822, %v2682
        %v2684 = vpop.f32.mrb[0].mxu0
        %v2685 = vadd.f32 %v826, %v2684
        %v2686 = vpop.f32.mrb[0].mxu0
        %v2687 = vadd.f32 %v822, %v2686
        %v2688 = vpop.f32.mrb[0].mxu0
        %v2689 = vadd.f32 %v826, %v2688
        %2690 = vmatprep.mubr.bf16.mxu0 %v504
        %2691 = vmatmul.mubr.bf16.gmra.mrb[0].mxu0 %v503
        %v2692 = vpop.f32.mrb[0].mxu0
        %v2693 = vadd.f32 %v822, %v2692
        %v2694 = vpop.f32.mrb[0].mxu0
        %v2695 = vadd.f32 %v826, %v2694
        %v2696 = vpop.f32.mrb[0].mxu0
        %v2697 = vadd.f32 %v822, %v2696
        %v2698 = vpop.f32.mrb[0].mxu0
        %v2699 = vadd.f32 %v826, %v2698
        %2700 = vmatprep.mubr.bf16.mxu0 %v511
        %2701 = vmatmul.mubr.bf16.gmra.mrb[0].mxu0 %v510
        %v2702 = vpop.f32.mrb[0].mxu0
        %v2703 = vadd.f32 %v822, %v2702
        %v2704 = vpop.f32.mrb[0].mxu0
        %v2705 = vadd.f32 %v826, %v2704
        %v2706 = vpop.f32.mrb[0].mxu0
        %v2707 = vadd.f32 %v822, %v2706
        %v2708 = vpop.f32.mrb[0].mxu0
        %v2709 = vadd.f32 %v826, %v2708
        %2710 = vmatprep.mubr.bf16.mxu0 %v518
        %2711 = vmatmul.mubr.bf16.gmra.mrb[0].mxu0 %v517
        %v2712 = vpop.f32.mrb[0].mxu0
        %v2713 = vadd.f32 %v822, %v2712
        %v2714 = vpop.f32.mrb[0].mxu0
        %v2715 = vadd.f32 %v826, %v2714
        %v2716 = vpop.f32.mrb[0].mxu0
        %v2717 = vadd.f32 %v822, %v2716
        %v2718 = vpop.f32.mrb[0].mxu0
        %v2719 = vadd.f32 %v826, %v2718
        %2720 = vmatprep.mubr.bf16.mxu0 %v525
        %2721 = vmatmul.mubr.bf16.gmra.mrb[0].mxu0 %v524
        %v2722 = vpop.f32.mrb[0].mxu0
        %v2723 = vadd.f32 %v822, %v2722
        %v2724 = vpop.f32.mrb[0].mxu0
        %v2725 = vadd.f32 %v826, %v2724
        %v2726 = vpop.f32.mrb[0].mxu0
        %v2727 = vadd.f32 %v822, %v2726
        %v2728 = vpop.f32.mrb[0].mxu0
        %v2729 = vadd.f32 %v826, %v2728
        %2730 = vmatprep.mubr.bf16.mxu0 %v532
        %2731 = vmatmul.mubr.bf16.gmra.mrb[0].mxu0 %v531
        %v2732 = vpop.f32.mrb[0].mxu0
        %v2733 = vadd.f32 %v822, %v2732
        %v2734 = vpop.f32.mrb[0].mxu0
        %v2735 = vadd.f32 %v826, %v2734
        %v2736 = vpop.f32.mrb[0].mxu0
        %v2737 = vadd.f32 %v822, %v2736
        %v2738 = vpop.f32.mrb[0].mxu0
        %v2739 = vadd.f32 %v826, %v2738
        %2740 = vmatprep.mubr.bf16.mxu0 %v539
        %2741 = vmatmul.mubr.bf16.gmra.mrb[0].mxu0 %v538
        %v2742 = vpop.f32.mrb[0].mxu0
        %v2743 = vadd.f32 %v822, %v2742
        %v2744 = vpop.f32.mrb[0].mxu0
        %v2745 = vadd.f32 %v826, %v2744
        %v2746 = vpop.f32.mrb[0].mxu0
        %v2747 = vadd.f32 %v822, %v2746
        %v2748 = vpop.f32.mrb[0].mxu0
        %v2749 = vadd.f32 %v826, %v2748
        %2750 = vmatprep.mubr.bf16.mxu0 %v546
        %2751 = vmatmul.mubr.bf16.gmra.mrb[0].mxu0 %v545
        %v2752 = vpop.f32.mrb[0].mxu0
        %v2753 = vadd.f32 %v822, %v2752
        %v2754 = vpop.f32.mrb[0].mxu0
        %v2755 = vadd.f32 %v826, %v2754
        %v2756 = vpop.f32.mrb[0].mxu0
        %v2757 = vadd.f32 %v822, %v2756
        %v2758 = vpop.f32.mrb[0].mxu0
        %v2759 = vadd.f32 %v826, %v2758
        %2760 = vmatprep.mubr.bf16.mxu0 %v553
        %2761 = vmatmul.mubr.bf16.gmra.mrb[0].mxu0 %v552
        %v2762 = vpop.f32.mrb[0].mxu0
        %v2763 = vadd.f32 %v822, %v2762
        %v2764 = vpop.f32.mrb[0].mxu0
        %v2765 = vadd.f32 %v826, %v2764
        %v2766 = vpop.f32.mrb[0].mxu0
        %v2767 = vadd.f32 %v822, %v2766
        %v2768 = vpop.f32.mrb[0].mxu0
        %v2769 = vadd.f32 %v826, %v2768
        %2770 = vmatprep.mubr.bf16.mxu0 %v560
        %2771 = vmatmul.mubr.bf16.gmra.mrb[0].mxu0 %v559
        %v2772 = vpop.f32.mrb[0].mxu0
        %v2773 = vadd.f32 %v822, %v2772
        %v2774 = vpop.f32.mrb[0].mxu0
        %v2775 = vadd.f32 %v826, %v2774
        %v2776 = vpop.f32.mrb[0].mxu0
        %v2777 = vadd.f32 %v822, %v2776
        %v2778 = vpop.f32.mrb[0].mxu0
        %v2779 = vadd.f32 %v826, %v2778
        %2780 = vmatprep.mubr.bf16.mxu0 %v567
        %2781 = vmatmul.mubr.bf16.gmra.mrb[0].mxu0 %v566
        %v2782 = vpop.f32.mrb[0].mxu0
        %v2783 = vadd.f32 %v822, %v2782
        %v2784 = vpop.f32.mrb[0].mxu0
        %v2785 = vadd.f32 %v826, %v2784
        %v2786 = vpop.f32.mrb[0].mxu0
        %v2787 = vadd.f32 %v822, %v2786
        %v2788 = vpop.f32.mrb[0].mxu0
        %v2789 = vadd.f32 %v826, %v2788
        %2790 = vmatprep.mubr.bf16.mxu0 %v574
        %2791 = vmatmul.mubr.bf16.gmra.mrb[0].mxu0 %v573
        %v2792 = vpop.f32.mrb[0].mxu0
        %v2793 = vadd.f32 %v822, %v2792
        %v2794 = vpop.f32.mrb[0].mxu0
        %v2795 = vadd.f32 %v826, %v2794
        %v2796 = vpop.f32.mrb[0].mxu0
        %v2797 = vadd.f32 %v822, %v2796
        %v2798 = vpop.f32.mrb[0].mxu0
        %v2799 = vadd.f32 %v826, %v2798
        %2800 = vmatprep.mubr.bf16.mxu0 %v581
        %2801 = vmatmul.mubr.bf16.gmra.mrb[0].mxu0 %v580
        %v2802 = vpop.f32.mrb[0].mxu0
        %v2803 = vadd.f32 %v822, %v2802
        %v2804 = vpop.f32.mrb[0].mxu0
        %v2805 = vadd.f32 %v826, %v2804
        %v2806 = vpop.f32.mrb[0].mxu0
        %v2807 = vadd.f32 %v822, %v2806
        %v2808 = vpop.f32.mrb[0].mxu0
        %v2809 = vadd.f32 %v826, %v2808
        %2810 = vmatprep.mubr.bf16.mxu0 %v588
        %2811 = vmatmul.mubr.bf16.gmra.mrb[0].mxu0 %v587
        %v2812 = vpop.f32.mrb[0].mxu0
        %v2813 = vadd.f32 %v822, %v2812
        %v2814 = vpop.f32.mrb[0].mxu0
        %v2815 = vadd.f32 %v826, %v2814
        %v2816 = vpop.f32.mrb[0].mxu0
        %v2817 = vadd.f32 %v822, %v2816
        %v2818 = vpop.f32.mrb[0].mxu0
        %v2819 = vadd.f32 %v826, %v2818
        %2820 = vdwg.mxu0
        %2821 = vmatprep.subr.bf16.mxu0 %v1482
        %2822 = vmatpush1.bf16.msra.mxu0 %v1481
        %2823 = vmatprep.subr.bf16.mxu0 %v1486
        %2824 = vmatpush1.bf16.msra.mxu0 %v1485
        %2825 = vmatprep.subr.bf16.mxu0 %v1490
        %2826 = vmatpush1.bf16.msra.mxu0 %v1489
        %2827 = vmatprep.subr.bf16.mxu0 %v1494
        %2828 = vmatpush1.bf16.msra.mxu0 %v1493
        %2829 = vmatprep.subr.bf16.mxu0 %v1498
        %2830 = vmatpush1.bf16.msra.mxu0 %v1497
        %2831 = vmatprep.subr.bf16.mxu0 %v1502
        %2832 = vmatpush1.bf16.msra.mxu0 %v1501
        %2833 = vmatprep.subr.bf16.mxu0 %v1506
        %2834 = vmatpush1.bf16.msra.mxu0 %v1505
        %2835 = vmatprep.subr.bf16.mxu0 %v1510
        %2836 = vmatpush1.bf16.msra.mxu0 %v1509
        %2837 = vmatprep.subr.bf16.mxu0 %v1514
        %2838 = vmatpush1.bf16.msra.mxu0 %v1513
        %2839 = vmatprep.subr.bf16.mxu0 %v1518
        %2840 = vmatpush1.bf16.msra.mxu0 %v1517
        %2841 = vmatprep.subr.bf16.mxu0 %v1522
        %2842 = vmatpush1.bf16.msra.mxu0 %v1521
        %2843 = vmatprep.subr.bf16.mxu0 %v1526
        %2844 = vmatpush1.bf16.msra.mxu0 %v1525
        %2845 = vmatprep.subr.bf16.mxu0 %v1530
        %2846 = vmatpush1.bf16.msra.mxu0 %v1529
        %2847 = vmatprep.subr.bf16.mxu0 %v1534
        %2848 = vmatpush1.bf16.msra.mxu0 %v1533
        %2849 = vmatprep.subr.bf16.mxu0 %v1538
        %2850 = vmatpush1.bf16.msra.mxu0 %v1537
        %2851 = vmatprep.subr.bf16.mxu0 %v1542
        %2852 = vmatpush1.bf16.msra.mxu0 %v1541
        %2853 = vmatprep.mubr.bf16.mxu0 %v485
        %2854 = vmatmul.mubr.bf16.gmra.mrb[0].mxu0 %v484
        %v2855 = vpop.f32.mrb[0].mxu0
        %v2856 = vadd.f32 %v2663, %v2855
        %v2857 = vpop.f32.mrb[0].mxu0
        %v2858 = vadd.f32 %v2665, %v2857
        %v2859 = vpop.f32.mrb[0].mxu0
        %v2860 = vadd.f32 %v2667, %v2859
        %v2861 = vpop.f32.mrb[0].mxu0
        %v2862 = vadd.f32 %v2669, %v2861
        %2863 = vmatprep.mubr.bf16.mxu0 %v492
        %2864 = vmatmul.mubr.bf16.gmra.mrb[0].mxu0 %v491
        %v2865 = vpop.f32.mrb[0].mxu0
        %v2866 = vadd.f32 %v2673, %v2865
        %v2867 = vpop.f32.mrb[0].mxu0
        %v2868 = vadd.f32 %v2675, %v2867
        %v2869 = vpop.f32.mrb[0].mxu0
        %v2870 = vadd.f32 %v2677, %v2869
        %v2871 = vpop.f32.mrb[0].mxu0
        %v2872 = vadd.f32 %v2679, %v2871
        %2873 = vmatprep.mubr.bf16.mxu0 %v499
        %2874 = vmatmul.mubr.bf16.gmra.mrb[0].mxu0 %v498
        %v2875 = vpop.f32.mrb[0].mxu0
        %v2876 = vadd.f32 %v2683, %v2875
        %v2877 = vpop.f32.mrb[0].mxu0
        %v2878 = vadd.f32 %v2685, %v2877
        %v2879 = vpop.f32.mrb[0].mxu0
        %v2880 = vadd.f32 %v2687, %v2879
        %v2881 = vpop.f32.mrb[0].mxu0
        %v2882 = vadd.f32 %v2689, %v2881
        %2883 = vmatprep.mubr.bf16.mxu0 %v506
        %2884 = vmatmul.mubr.bf16.gmra.mrb[0].mxu0 %v505
        %v2885 = vpop.f32.mrb[0].mxu0
        %v2886 = vadd.f32 %v2693, %v2885
        %v2887 = vpop.f32.mrb[0].mxu0
        %v2888 = vadd.f32 %v2695, %v2887
        %v2889 = vpop.f32.mrb[0].mxu0
        %v2890 = vadd.f32 %v2697, %v2889
        %v2891 = vpop.f32.mrb[0].mxu0
        %v2892 = vadd.f32 %v2699, %v2891
        %2893 = vmatprep.mubr.bf16.mxu0 %v513
        %2894 = vmatmul.mubr.bf16.gmra.mrb[0].mxu0 %v512
        %v2895 = vpop.f32.mrb[0].mxu0
        %v2896 = vadd.f32 %v2703, %v2895
        %v2897 = vpop.f32.mrb[0].mxu0
        %v2898 = vadd.f32 %v2705, %v2897
        %v2899 = vpop.f32.mrb[0].mxu0
        %v2900 = vadd.f32 %v2707, %v2899
        %v2901 = vpop.f32.mrb[0].mxu0
        %v2902 = vadd.f32 %v2709, %v2901
        %2903 = vmatprep.mubr.bf16.mxu0 %v520
        %2904 = vmatmul.mubr.bf16.gmra.mrb[0].mxu0 %v519
        %v2905 = vpop.f32.mrb[0].mxu0
        %v2906 = vadd.f32 %v2713, %v2905
        %v2907 = vpop.f32.mrb[0].mxu0
        %v2908 = vadd.f32 %v2715, %v2907
        %v2909 = vpop.f32.mrb[0].mxu0
        %v2910 = vadd.f32 %v2717, %v2909
        %v2911 = vpop.f32.mrb[0].mxu0
        %v2912 = vadd.f32 %v2719, %v2911
        %2913 = vmatprep.mubr.bf16.mxu0 %v527
        %2914 = vmatmul.mubr.bf16.gmra.mrb[0].mxu0 %v526
        %v2915 = vpop.f32.mrb[0].mxu0
        %v2916 = vadd.f32 %v2723, %v2915
        %v2917 = vpop.f32.mrb[0].mxu0
        %v2918 = vadd.f32 %v2725, %v2917
        %v2919 = vpop.f32.mrb[0].mxu0
        %v2920 = vadd.f32 %v2727, %v2919
        %v2921 = vpop.f32.mrb[0].mxu0
        %v2922 = vadd.f32 %v2729, %v2921
        %2923 = vmatprep.mubr.bf16.mxu0 %v534
        %2924 = vmatmul.mubr.bf16.gmra.mrb[0].mxu0 %v533
        %v2925 = vpop.f32.mrb[0].mxu0
        %v2926 = vadd.f32 %v2733, %v2925
        %v2927 = vpop.f32.mrb[0].mxu0
        %v2928 = vadd.f32 %v2735, %v2927
        %v2929 = vpop.f32.mrb[0].mxu0
        %v2930 = vadd.f32 %v2737, %v2929
        %v2931 = vpop.f32.mrb[0].mxu0
        %v2932 = vadd.f32 %v2739, %v2931
        %2933 = vmatprep.mubr.bf16.mxu0 %v541
        %2934 = vmatmul.mubr.bf16.gmra.mrb[0].mxu0 %v540
        %v2935 = vpop.f32.mrb[0].mxu0
        %v2936 = vadd.f32 %v2743, %v2935
        %v2937 = vpop.f32.mrb[0].mxu0
        %v2938 = vadd.f32 %v2745, %v2937
        %v2939 = vpop.f32.mrb[0].mxu0
        %v2940 = vadd.f32 %v2747, %v2939
        %v2941 = vpop.f32.mrb[0].mxu0
        %v2942 = vadd.f32 %v2749, %v2941
        %2943 = vmatprep.mubr.bf16.mxu0 %v548
        %2944 = vmatmul.mubr.bf16.gmra.mrb[0].mxu0 %v547
        %v2945 = vpop.f32.mrb[0].mxu0
        %v2946 = vadd.f32 %v2753, %v2945
        %v2947 = vpop.f32.mrb[0].mxu0
        %v2948 = vadd.f32 %v2755, %v2947
        %v2949 = vpop.f32.mrb[0].mxu0
        %v2950 = vadd.f32 %v2757, %v2949
        %v2951 = vpop.f32.mrb[0].mxu0
        %v2952 = vadd.f32 %v2759, %v2951
        %2953 = vmatprep.mubr.bf16.mxu0 %v555
        %2954 = vmatmul.mubr.bf16.gmra.mrb[0].mxu0 %v554
        %v2955 = vpop.f32.mrb[0].mxu0
        %v2956 = vadd.f32 %v2763, %v2955
        %v2957 = vpop.f32.mrb[0].mxu0
        %v2958 = vadd.f32 %v2765, %v2957
        %v2959 = vpop.f32.mrb[0].mxu0
        %v2960 = vadd.f32 %v2767, %v2959
        %v2961 = vpop.f32.mrb[0].mxu0
        %v2962 = vadd.f32 %v2769, %v2961
        %2963 = vmatprep.mubr.bf16.mxu0 %v562
        %2964 = vmatmul.mubr.bf16.gmra.mrb[0].mxu0 %v561
        %v2965 = vpop.f32.mrb[0].mxu0
        %v2966 = vadd.f32 %v2773, %v2965
        %v2967 = vpop.f32.mrb[0].mxu0
        %v2968 = vadd.f32 %v2775, %v2967
        %v2969 = vpop.f32.mrb[0].mxu0
        %v2970 = vadd.f32 %v2777, %v2969
        %v2971 = vpop.f32.mrb[0].mxu0
        %v2972 = vadd.f32 %v2779, %v2971
        %2973 = vmatprep.mubr.bf16.mxu0 %v569
        %2974 = vmatmul.mubr.bf16.gmra.mrb[0].mxu0 %v568
        %v2975 = vpop.f32.mrb[0].mxu0
        %v2976 = vadd.f32 %v2783, %v2975
        %v2977 = vpop.f32.mrb[0].mxu0
        %v2978 = vadd.f32 %v2785, %v2977
        %v2979 = vpop.f32.mrb[0].mxu0
        %v2980 = vadd.f32 %v2787, %v2979
        %v2981 = vpop.f32.mrb[0].mxu0
        %v2982 = vadd.f32 %v2789, %v2981
        %2983 = vmatprep.mubr.bf16.mxu0 %v576
        %2984 = vmatmul.mubr.bf16.gmra.mrb[0].mxu0 %v575
        %v2985 = vpop.f32.mrb[0].mxu0
        %v2986 = vadd.f32 %v2793, %v2985
        %v2987 = vpop.f32.mrb[0].mxu0
        %v2988 = vadd.f32 %v2795, %v2987
        %v2989 = vpop.f32.mrb[0].mxu0
        %v2990 = vadd.f32 %v2797, %v2989
        %v2991 = vpop.f32.mrb[0].mxu0
        %v2992 = vadd.f32 %v2799, %v2991
        %2993 = vmatprep.mubr.bf16.mxu0 %v583
        %2994 = vmatmul.mubr.bf16.gmra.mrb[0].mxu0 %v582
        %v2995 = vpop.f32.mrb[0].mxu0
        %v2996 = vadd.f32 %v2803, %v2995
        %v2997 = vpop.f32.mrb[0].mxu0
        %v2998 = vadd.f32 %v2805, %v2997
        %v2999 = vpop.f32.mrb[0].mxu0
        %v3000 = vadd.f32 %v2807, %v2999
        %v3001 = vpop.f32.mrb[0].mxu0
        %v3002 = vadd.f32 %v2809, %v3001
        %3003 = vmatprep.mubr.bf16.mxu0 %v590
        %3004 = vmatmul.mubr.bf16.gmra.mrb[0].mxu0 %v589
        %v3005 = vpop.f32.mrb[0].mxu0
        %v3006 = vadd.f32 %v2813, %v3005
        %v3007 = vpop.f32.mrb[0].mxu0
        %v3008 = vadd.f32 %v2815, %v3007
        %v3009 = vpop.f32.mrb[0].mxu0
        %v3010 = vadd.f32 %v2817, %v3009
        %v3011 = vpop.f32.mrb[0].mxu0
        %v3012 = vadd.f32 %v2819, %v3011
        %3013 = vdwg.mxu0
        %3014 = vmatprep.subr.bf16.mxu0 %v1546
        %3015 = vmatpush1.bf16.msra.mxu0 %v1545
        %3016 = vmatprep.subr.bf16.mxu0 %v1550
        %3017 = vmatpush1.bf16.msra.mxu0 %v1549
        %3018 = vmatprep.subr.bf16.mxu0 %v1554
        %3019 = vmatpush1.bf16.msra.mxu0 %v1553
        %3020 = vmatprep.subr.bf16.mxu0 %v1558
        %3021 = vmatpush1.bf16.msra.mxu0 %v1557
        %3022 = vmatprep.subr.bf16.mxu0 %v1562
        %3023 = vmatpush1.bf16.msra.mxu0 %v1561
        %3024 = vmatprep.subr.bf16.mxu0 %v1566
        %3025 = vmatpush1.bf16.msra.mxu0 %v1565
        %3026 = vmatprep.subr.bf16.mxu0 %v1570
        %3027 = vmatpush1.bf16.msra.mxu0 %v1569
        %3028 = vmatprep.subr.bf16.mxu0 %v1574
        %3029 = vmatpush1.bf16.msra.mxu0 %v1573
        %3030 = vmatprep.subr.bf16.mxu0 %v1578
        %3031 = vmatpush1.bf16.msra.mxu0 %v1577
        %3032 = vmatprep.subr.bf16.mxu0 %v1582
        %3033 = vmatpush1.bf16.msra.mxu0 %v1581
        %3034 = vmatprep.subr.bf16.mxu0 %v1586
        %3035 = vmatpush1.bf16.msra.mxu0 %v1585
        %3036 = vmatprep.subr.bf16.mxu0 %v1590
        %3037 = vmatpush1.bf16.msra.mxu0 %v1589
        %3038 = vmatprep.subr.bf16.mxu0 %v1594
        %3039 = vmatpush1.bf16.msra.mxu0 %v1593
        %3040 = vmatprep.subr.bf16.mxu0 %v1598
        %3041 = vmatpush1.bf16.msra.mxu0 %v1597
        %3042 = vmatprep.subr.bf16.mxu0 %v1602
        %3043 = vmatpush1.bf16.msra.mxu0 %v1601
        %3044 = vmatprep.subr.bf16.mxu0 %v1606
        %3045 = vmatpush1.bf16.msra.mxu0 %v1605
        %3046 = vmatprep.mubr.bf16.mxu0 %v487
        %3047 = vmatmul.mubr.bf16.gmra.mrb[0].mxu0 %v486
        %v3048 = vpop.f32.mrb[0].mxu0
        %v3049 = vadd.f32 %v2856, %v3048
        %v3050 = vpop.f32.mrb[0].mxu0
        %v3051 = vadd.f32 %v2858, %v3050
        %v3052 = vpop.f32.mrb[0].mxu0
        %v3053 = vadd.f32 %v2860, %v3052
        %v3054 = vpop.f32.mrb[0].mxu0
        %v3055 = vadd.f32 %v2862, %v3054
        %3056 = vmatprep.mubr.bf16.mxu0 %v494
        %3057 = vmatmul.mubr.bf16.gmra.mrb[0].mxu0 %v493
        %v3058 = vpop.f32.mrb[0].mxu0
        %v3059 = vadd.f32 %v2866, %v3058
        %v3060 = vpop.f32.mrb[0].mxu0
        %v3061 = vadd.f32 %v2868, %v3060
        %v3062 = vpop.f32.mrb[0].mxu0
        %v3063 = vadd.f32 %v2870, %v3062
        %v3064 = vpop.f32.mrb[0].mxu0
        %v3065 = vadd.f32 %v2872, %v3064
        %3066 = vmatprep.mubr.bf16.mxu0 %v501
        %3067 = vmatmul.mubr.bf16.gmra.mrb[0].mxu0 %v500
        %v3068 = vpop.f32.mrb[0].mxu0
        %v3069 = vadd.f32 %v2876, %v3068
        %v3070 = vpop.f32.mrb[0].mxu0
        %v3071 = vadd.f32 %v2878, %v3070
        %v3072 = vpop.f32.mrb[0].mxu0
        %v3073 = vadd.f32 %v2880, %v3072
        %v3074 = vpop.f32.mrb[0].mxu0
        %v3075 = vadd.f32 %v2882, %v3074
        %3076 = vmatprep.mubr.bf16.mxu0 %v508
        %3077 = vmatmul.mubr.bf16.gmra.mrb[0].mxu0 %v507
        %v3078 = vpop.f32.mrb[0].mxu0
        %v3079 = vadd.f32 %v2886, %v3078
        %v3080 = vpop.f32.mrb[0].mxu0
        %v3081 = vadd.f32 %v2888, %v3080
        %v3082 = vpop.f32.mrb[0].mxu0
        %v3083 = vadd.f32 %v2890, %v3082
        %v3084 = vpop.f32.mrb[0].mxu0
        %v3085 = vadd.f32 %v2892, %v3084
        %3086 = vmatprep.mubr.bf16.mxu0 %v515
        %3087 = vmatmul.mubr.bf16.gmra.mrb[0].mxu0 %v514
        %v3088 = vpop.f32.mrb[0].mxu0
        %v3089 = vadd.f32 %v2896, %v3088
        %v3090 = vpop.f32.mrb[0].mxu0
        %v3091 = vadd.f32 %v2898, %v3090
        %v3092 = vpop.f32.mrb[0].mxu0
        %v3093 = vadd.f32 %v2900, %v3092
        %v3094 = vpop.f32.mrb[0].mxu0
        %v3095 = vadd.f32 %v2902, %v3094
        %3096 = vmatprep.mubr.bf16.mxu0 %v522
        %3097 = vmatmul.mubr.bf16.gmra.mrb[0].mxu0 %v521
        %v3098 = vpop.f32.mrb[0].mxu0
        %v3099 = vadd.f32 %v2906, %v3098
        %v3100 = vpop.f32.mrb[0].mxu0
        %v3101 = vadd.f32 %v2908, %v3100
        %v3102 = vpop.f32.mrb[0].mxu0
        %v3103 = vadd.f32 %v2910, %v3102
        %v3104 = vpop.f32.mrb[0].mxu0
        %v3105 = vadd.f32 %v2912, %v3104
        %3106 = vmatprep.mubr.bf16.mxu0 %v529
        %3107 = vmatmul.mubr.bf16.gmra.mrb[0].mxu0 %v528
        %v3108 = vpop.f32.mrb[0].mxu0
        %v3109 = vadd.f32 %v2916, %v3108
        %v3110 = vpop.f32.mrb[0].mxu0
        %v3111 = vadd.f32 %v2918, %v3110
        %v3112 = vpop.f32.mrb[0].mxu0
        %v3113 = vadd.f32 %v2920, %v3112
        %v3114 = vpop.f32.mrb[0].mxu0
        %v3115 = vadd.f32 %v2922, %v3114
        %3116 = vmatprep.mubr.bf16.mxu0 %v536
        %3117 = vmatmul.mubr.bf16.gmra.mrb[0].mxu0 %v535
        %v3118 = vpop.f32.mrb[0].mxu0
        %v3119 = vadd.f32 %v2926, %v3118
        %v3120 = vpop.f32.mrb[0].mxu0
        %v3121 = vadd.f32 %v2928, %v3120
        %v3122 = vpop.f32.mrb[0].mxu0
        %v3123 = vadd.f32 %v2930, %v3122
        %v3124 = vpop.f32.mrb[0].mxu0
        %v3125 = vadd.f32 %v2932, %v3124
        %3126 = vmatprep.mubr.bf16.mxu0 %v543
        %3127 = vmatmul.mubr.bf16.gmra.mrb[0].mxu0 %v542
        %v3128 = vpop.f32.mrb[0].mxu0
        %v3129 = vadd.f32 %v2936, %v3128
        %v3130 = vpop.f32.mrb[0].mxu0
        %v3131 = vadd.f32 %v2938, %v3130
        %v3132 = vpop.f32.mrb[0].mxu0
        %v3133 = vadd.f32 %v2940, %v3132
        %v3134 = vpop.f32.mrb[0].mxu0
        %v3135 = vadd.f32 %v2942, %v3134
        %3136 = vmatprep.mubr.bf16.mxu0 %v550
        %3137 = vmatmul.mubr.bf16.gmra.mrb[0].mxu0 %v549
        %v3138 = vpop.f32.mrb[0].mxu0
        %v3139 = vadd.f32 %v2946, %v3138
        %v3140 = vpop.f32.mrb[0].mxu0
        %v3141 = vadd.f32 %v2948, %v3140
        %v3142 = vpop.f32.mrb[0].mxu0
        %v3143 = vadd.f32 %v2950, %v3142
        %v3144 = vpop.f32.mrb[0].mxu0
        %v3145 = vadd.f32 %v2952, %v3144
        %3146 = vmatprep.mubr.bf16.mxu0 %v557
        %3147 = vmatmul.mubr.bf16.gmra.mrb[0].mxu0 %v556
        %v3148 = vpop.f32.mrb[0].mxu0
        %v3149 = vadd.f32 %v2956, %v3148
        %v3150 = vpop.f32.mrb[0].mxu0
        %v3151 = vadd.f32 %v2958, %v3150
        %v3152 = vpop.f32.mrb[0].mxu0
        %v3153 = vadd.f32 %v2960, %v3152
        %v3154 = vpop.f32.mrb[0].mxu0
        %v3155 = vadd.f32 %v2962, %v3154
        %3156 = vmatprep.mubr.bf16.mxu0 %v564
        %3157 = vmatmul.mubr.bf16.gmra.mrb[0].mxu0 %v563
        %v3158 = vpop.f32.mrb[0].mxu0
        %v3159 = vadd.f32 %v2966, %v3158
        %v3160 = vpop.f32.mrb[0].mxu0
        %v3161 = vadd.f32 %v2968, %v3160
        %v3162 = vpop.f32.mrb[0].mxu0
        %v3163 = vadd.f32 %v2970, %v3162
        %v3164 = vpop.f32.mrb[0].mxu0
        %v3165 = vadd.f32 %v2972, %v3164
        %3166 = vmatprep.mubr.bf16.mxu0 %v571
        %3167 = vmatmul.mubr.bf16.gmra.mrb[0].mxu0 %v570
        %v3168 = vpop.f32.mrb[0].mxu0
        %v3169 = vadd.f32 %v2976, %v3168
        %v3170 = vpop.f32.mrb[0].mxu0
        %v3171 = vadd.f32 %v2978, %v3170
        %v3172 = vpop.f32.mrb[0].mxu0
        %v3173 = vadd.f32 %v2980, %v3172
        %v3174 = vpop.f32.mrb[0].mxu0
        %v3175 = vadd.f32 %v2982, %v3174
        %3176 = vmatprep.mubr.bf16.mxu0 %v578
        %3177 = vmatmul.mubr.bf16.gmra.mrb[0].mxu0 %v577
        %v3178 = vpop.f32.mrb[0].mxu0
        %v3179 = vadd.f32 %v2986, %v3178
        %v3180 = vpop.f32.mrb[0].mxu0
        %v3181 = vadd.f32 %v2988, %v3180
        %v3182 = vpop.f32.mrb[0].mxu0
        %v3183 = vadd.f32 %v2990, %v3182
        %v3184 = vpop.f32.mrb[0].mxu0
        %v3185 = vadd.f32 %v2992, %v3184
        %3186 = vmatprep.mubr.bf16.mxu0 %v585
        %3187 = vmatmul.mubr.bf16.gmra.mrb[0].mxu0 %v584
        %v3188 = vpop.f32.mrb[0].mxu0
        %v3189 = vadd.f32 %v2996, %v3188
        %v3190 = vpop.f32.mrb[0].mxu0
        %v3191 = vadd.f32 %v2998, %v3190
        %v3192 = vpop.f32.mrb[0].mxu0
        %v3193 = vadd.f32 %v3000, %v3192
        %v3194 = vpop.f32.mrb[0].mxu0
        %v3195 = vadd.f32 %v3002, %v3194
        %3196 = vmatprep.mubr.bf16.mxu0 %v592
        %3197 = vmatmul.mubr.bf16.gmra.mrb[0].mxu0 %v591
        %v3198 = vpop.f32.mrb[0].mxu0
        %v3199 = vadd.f32 %v3006, %v3198
        %v3200 = vpop.f32.mrb[0].mxu0
        %v3201 = vadd.f32 %v3008, %v3200
        %v3202 = vpop.f32.mrb[0].mxu0
        %v3203 = vadd.f32 %v3010, %v3202
        %v3204 = vpop.f32.mrb[0].mxu0
        %v3205 = vadd.f32 %v3012, %v3204
        %3206 = vdwg.mxu0
        %3207 = vmatprep.subr.bf16.mxu0 %v1610
        %3208 = vmatpush1.bf16.msra.mxu0 %v1609
        %3209 = vmatprep.subr.bf16.mxu0 0
        %3210 = vmatpush1.bf16.msra.mxu0 0
        %3211 = vmatprep.subr.bf16.mxu0 0
        %3212 = vmatpush1.bf16.msra.mxu0 0
        %3213 = vmatprep.subr.bf16.mxu0 0
        %3214 = vmatpush1.bf16.msra.mxu0 0
        %3215 = vmatprep.subr.bf16.mxu0 0
        %3216 = vmatpush1.bf16.msra.mxu0 0
        %3217 = vmatprep.subr.bf16.mxu0 0
        %3218 = vmatpush1.bf16.msra.mxu0 0
        %3219 = vmatprep.subr.bf16.mxu0 0
        %3220 = vmatpush1.bf16.msra.mxu0 0
        %3221 = vmatprep.subr.bf16.mxu0 0
        %3222 = vmatpush1.bf16.msra.mxu0 0
        %3223 = vmatprep.subr.bf16.mxu0 0
        %3224 = vmatpush1.bf16.msra.mxu0 0
        %3225 = vmatprep.subr.bf16.mxu0 0
        %3226 = vmatpush1.bf16.msra.mxu0 0
        %3227 = vmatprep.subr.bf16.mxu0 0
        %3228 = vmatpush1.bf16.msra.mxu0 0
        %3229 = vmatprep.subr.bf16.mxu0 0
        %3230 = vmatpush1.bf16.msra.mxu0 0
        %3231 = vmatprep.subr.bf16.mxu0 0
        %3232 = vmatpush1.bf16.msra.mxu0 0
        %3233 = vmatprep.subr.bf16.mxu0 0
        %3234 = vmatpush1.bf16.msra.mxu0 0
        %3235 = vmatprep.subr.bf16.mxu0 0
        %3236 = vmatpush1.bf16.msra.mxu0 0
        %3237 = vmatprep.subr.bf16.mxu0 0
        %3238 = vmatpush1.bf16.msra.mxu0 0
        %3239 = vmatprep.mubr.bf16.mxu0 0
        %3240 = vmatmul.mubr.bf16.gmra.mrb[0].mxu0 %v1809
        %v3241 = vpop.f32.mrb[0].mxu0
        %v3242 = vadd.f32 %v3049, %v3241
        %v3243 = vpop.f32.mrb[0].mxu0
        %v3244 = vadd.f32 %v3051, %v3243
        %v3245 = vpop.f32.mrb[0].mxu0
        %v3246 = vadd.f32 %v3053, %v3245
        %v3247 = vpop.f32.mrb[0].mxu0
        %v3248 = vadd.f32 %v3055, %v3247
        %3249 = vmatprep.mubr.bf16.mxu0 0
        %3250 = vmatmul.mubr.bf16.gmra.mrb[0].mxu0 %v1812
        %v3251 = vpop.f32.mrb[0].mxu0
        %v3252 = vadd.f32 %v3059, %v3251
        %v3253 = vpop.f32.mrb[0].mxu0
        %v3254 = vadd.f32 %v3061, %v3253
        %v3255 = vpop.f32.mrb[0].mxu0
        %v3256 = vadd.f32 %v3063, %v3255
        %v3257 = vpop.f32.mrb[0].mxu0
        %v3258 = vadd.f32 %v3065, %v3257
        %3259 = vmatprep.mubr.bf16.mxu0 0
        %3260 = vmatmul.mubr.bf16.gmra.mrb[0].mxu0 %v1815
        %v3261 = vpop.f32.mrb[0].mxu0
        %v3262 = vadd.f32 %v3069, %v3261
        %v3263 = vpop.f32.mrb[0].mxu0
        %v3264 = vadd.f32 %v3071, %v3263
        %v3265 = vpop.f32.mrb[0].mxu0
        %v3266 = vadd.f32 %v3073, %v3265
        %v3267 = vpop.f32.mrb[0].mxu0
        %v3268 = vadd.f32 %v3075, %v3267
        %3269 = vmatprep.mubr.bf16.mxu0 0
        %3270 = vmatmul.mubr.bf16.gmra.mrb[0].mxu0 %v1818
        %v3271 = vpop.f32.mrb[0].mxu0
        %v3272 = vadd.f32 %v3079, %v3271
        %v3273 = vpop.f32.mrb[0].mxu0
        %v3274 = vadd.f32 %v3081, %v3273
        %v3275 = vpop.f32.mrb[0].mxu0
        %v3276 = vadd.f32 %v3083, %v3275
        %v3277 = vpop.f32.mrb[0].mxu0
        %v3278 = vadd.f32 %v3085, %v3277
        %3279 = vmatprep.mubr.bf16.mxu0 0
        %3280 = vmatmul.mubr.bf16.gmra.mrb[0].mxu0 %v1821
        %v3281 = vpop.f32.mrb[0].mxu0
        %v3282 = vadd.f32 %v3089, %v3281
        %v3283 = vpop.f32.mrb[0].mxu0
        %v3284 = vadd.f32 %v3091, %v3283
        %v3285 = vpop.f32.mrb[0].mxu0
        %v3286 = vadd.f32 %v3093, %v3285
        %v3287 = vpop.f32.mrb[0].mxu0
        %v3288 = vadd.f32 %v3095, %v3287
        %3289 = vmatprep.mubr.bf16.mxu0 0
        %3290 = vmatmul.mubr.bf16.gmra.mrb[0].mxu0 %v1824
        %v3291 = vpop.f32.mrb[0].mxu0
        %v3292 = vadd.f32 %v3099, %v3291
        %v3293 = vpop.f32.mrb[0].mxu0
        %v3294 = vadd.f32 %v3101, %v3293
        %v3295 = vpop.f32.mrb[0].mxu0
        %v3296 = vadd.f32 %v3103, %v3295
        %v3297 = vpop.f32.mrb[0].mxu0
        %v3298 = vadd.f32 %v3105, %v3297
        %3299 = vmatprep.mubr.bf16.mxu0 0
        %3300 = vmatmul.mubr.bf16.gmra.mrb[0].mxu0 %v1827
        %v3301 = vpop.f32.mrb[0].mxu0
        %v3302 = vadd.f32 %v3109, %v3301
        %v3303 = vpop.f32.mrb[0].mxu0
        %v3304 = vadd.f32 %v3111, %v3303
        %v3305 = vpop.f32.mrb[0].mxu0
        %v3306 = vadd.f32 %v3113, %v3305
        %v3307 = vpop.f32.mrb[0].mxu0
        %v3308 = vadd.f32 %v3115, %v3307
        %3309 = vmatprep.mubr.bf16.mxu0 0
        %3310 = vmatmul.mubr.bf16.gmra.mrb[0].mxu0 %v1830
        %v3311 = vpop.f32.mrb[0].mxu0
        %v3312 = vadd.f32 %v3119, %v3311
        %v3313 = vpop.f32.mrb[0].mxu0
        %v3314 = vadd.f32 %v3121, %v3313
        %v3315 = vpop.f32.mrb[0].mxu0
        %v3316 = vadd.f32 %v3123, %v3315
        %v3317 = vpop.f32.mrb[0].mxu0
        %v3318 = vadd.f32 %v3125, %v3317
        %3319 = vmatprep.mubr.bf16.mxu0 0
        %3320 = vmatmul.mubr.bf16.gmra.mrb[0].mxu0 %v1833
        %v3321 = vpop.f32.mrb[0].mxu0
        %v3322 = vadd.f32 %v3129, %v3321
        %v3323 = vpop.f32.mrb[0].mxu0
        %v3324 = vadd.f32 %v3131, %v3323
        %v3325 = vpop.f32.mrb[0].mxu0
        %v3326 = vadd.f32 %v3133, %v3325
        %v3327 = vpop.f32.mrb[0].mxu0
        %v3328 = vadd.f32 %v3135, %v3327
        %3329 = vmatprep.mubr.bf16.mxu0 0
        %3330 = vmatmul.mubr.bf16.gmra.mrb[0].mxu0 %v1836
        %v3331 = vpop.f32.mrb[0].mxu0
        %v3332 = vadd.f32 %v3139, %v3331
        %v3333 = vpop.f32.mrb[0].mxu0
        %v3334 = vadd.f32 %v3141, %v3333
        %v3335 = vpop.f32.mrb[0].mxu0
        %v3336 = vadd.f32 %v3143, %v3335
        %v3337 = vpop.f32.mrb[0].mxu0
        %v3338 = vadd.f32 %v3145, %v3337
        %3339 = vmatprep.mubr.bf16.mxu0 0
        %3340 = vmatmul.mubr.bf16.gmra.mrb[0].mxu0 %v1839
        %v3341 = vpop.f32.mrb[0].mxu0
        %v3342 = vadd.f32 %v3149, %v3341
        %v3343 = vpop.f32.mrb[0].mxu0
        %v3344 = vadd.f32 %v3151, %v3343
        %v3345 = vpop.f32.mrb[0].mxu0
        %v3346 = vadd.f32 %v3153, %v3345
        %v3347 = vpop.f32.mrb[0].mxu0
        %v3348 = vadd.f32 %v3155, %v3347
        %3349 = vmatprep.mubr.bf16.mxu0 0
        %3350 = vmatmul.mubr.bf16.gmra.mrb[0].mxu0 %v1842
        %v3351 = vpop.f32.mrb[0].mxu0
        %v3352 = vadd.f32 %v3159, %v3351
        %v3353 = vpop.f32.mrb[0].mxu0
        %v3354 = vadd.f32 %v3161, %v3353
        %v3355 = vpop.f32.mrb[0].mxu0
        %v3356 = vadd.f32 %v3163, %v3355
        %v3357 = vpop.f32.mrb[0].mxu0
        %v3358 = vadd.f32 %v3165, %v3357
        %3359 = vmatprep.mubr.bf16.mxu0 0
        %3360 = vmatmul.mubr.bf16.gmra.mrb[0].mxu0 %v1845
        %v3361 = vpop.f32.mrb[0].mxu0
        %v3362 = vadd.f32 %v3169, %v3361
        %v3363 = vpop.f32.mrb[0].mxu0
        %v3364 = vadd.f32 %v3171, %v3363
        %v3365 = vpop.f32.mrb[0].mxu0
        %v3366 = vadd.f32 %v3173, %v3365
        %v3367 = vpop.f32.mrb[0].mxu0
        %v3368 = vadd.f32 %v3175, %v3367
        %3369 = vmatprep.mubr.bf16.mxu0 0
        %3370 = vmatmul.mubr.bf16.gmra.mrb[0].mxu0 %v1848
        %v3371 = vpop.f32.mrb[0].mxu0
        %v3372 = vadd.f32 %v3179, %v3371
        %v3373 = vpop.f32.mrb[0].mxu0
        %v3374 = vadd.f32 %v3181, %v3373
        %v3375 = vpop.f32.mrb[0].mxu0
        %v3376 = vadd.f32 %v3183, %v3375
        %v3377 = vpop.f32.mrb[0].mxu0
        %v3378 = vadd.f32 %v3185, %v3377
        %3379 = vmatprep.mubr.bf16.mxu0 0
        %3380 = vmatmul.mubr.bf16.gmra.mrb[0].mxu0 %v1851
        %v3381 = vpop.f32.mrb[0].mxu0
        %v3382 = vadd.f32 %v3189, %v3381
        %v3383 = vpop.f32.mrb[0].mxu0
        %v3384 = vadd.f32 %v3191, %v3383
        %v3385 = vpop.f32.mrb[0].mxu0
        %v3386 = vadd.f32 %v3193, %v3385
        %v3387 = vpop.f32.mrb[0].mxu0
        %v3388 = vadd.f32 %v3195, %v3387
        %3389 = vmatprep.mubr.bf16.mxu0 0
        %3390 = vmatmul.mubr.bf16.gmra.mrb[0].mxu0 %v1854
        %v3391 = vpop.f32.mrb[0].mxu0
        %v3392 = vadd.f32 %v3199, %v3391
        %v3393 = vpop.f32.mrb[0].mxu0
        %v3394 = vadd.f32 %v3201, %v3393
        %v3395 = vpop.f32.mrb[0].mxu0
        %v3396 = vadd.f32 %v3203, %v3395
        %v3397 = vpop.f32.mrb[0].mxu0
        %v3398 = vadd.f32 %v3205, %v3397
        %3399 = vdwg.mxu0
        %v3400 = vtanh.pop %v2470
        %v3401 = vtanh.pop %v2472
        %v3402 = vtanh.pop %v3242
        %v3403 = vtanh.pop %v3244
        %v3404 = vtanh.pop %v2474
        %v3405 = vtanh.pop %v2476
        %v3406 = vtanh.pop %v3246
        %v3407 = vtanh.pop %v3248
        %v3408 = vtanh.pop %v2480
        %v3409 = vtanh.pop %v2482
        %v3410 = vtanh.pop %v3252
        %v3411 = vtanh.pop %v3254
        %v3412 = vtanh.pop %v2484
        %v3413 = vtanh.pop %v2486
        %v3414 = vtanh.pop %v3256
        %v3415 = vtanh.pop %v3258
        %v3416 = vtanh.pop %v2490
        %v3417 = vtanh.pop %v2492
        %v3418 = vtanh.pop %v3262
        %v3419 = vtanh.pop %v3264
        %v3420 = vtanh.pop %v2494
        %v3421 = vtanh.pop %v2496
        %v3422 = vtanh.pop %v3266
        %v3423 = vtanh.pop %v3268
        %v3424 = vtanh.pop %v2500
        %v3425 = vtanh.pop %v2502
        %v3426 = vtanh.pop %v3272
        %v3427 = vtanh.pop %v3274
        %v3428 = vtanh.pop %v2504
        %v3429 = vtanh.pop %v2506
        %v3430 = vtanh.pop %v3276
        %v3431 = vtanh.pop %v3278
        %v3432 = vtanh.pop %v2510
        %v3433 = vtanh.pop %v2512
        %v3434 = vtanh.pop %v3282
        %v3435 = vtanh.pop %v3284
        %v3436 = vtanh.pop %v2514
        %v3437 = vtanh.pop %v2516
        %v3438 = vtanh.pop %v3286
        %v3439 = vtanh.pop %v3288
        %v3440 = vtanh.pop %v2520
        %v3441 = vtanh.pop %v2522
        %v3442 = vtanh.pop %v3292
        %v3443 = vtanh.pop %v3294
        %v3444 = vtanh.pop %v2524
        %v3445 = vtanh.pop %v2526
        %v3446 = vtanh.pop %v3296
        %v3447 = vtanh.pop %v3298
        %v3448 = vtanh.pop %v2530
        %v3449 = vtanh.pop %v2532
        %v3450 = vtanh.pop %v3302
        %v3451 = vtanh.pop %v3304
        %v3452 = vtanh.pop %v2534
        %v3453 = vtanh.pop %v2536
        %v3454 = vtanh.pop %v3306
        %v3455 = vtanh.pop %v3308
        %v3456 = vtanh.pop %v2540
        %v3457 = vtanh.pop %v2542
        %v3458 = vtanh.pop %v3312
        %v3459 = vtanh.pop %v3314
        %v3460 = vtanh.pop %v2544
        %v3461 = vtanh.pop %v2546
        %v3462 = vtanh.pop %v3316
        %v3463 = vtanh.pop %v3318
        %v3464 = vtanh.pop %v2550
        %v3465 = vtanh.pop %v2552
        %v3466 = vtanh.pop %v3322
        %v3467 = vtanh.pop %v3324
        %v3468 = vtanh.pop %v2554
        %v3469 = vtanh.pop %v2556
        %v3470 = vtanh.pop %v3326
        %v3471 = vtanh.pop %v3328
        %v3472 = vtanh.pop %v2560
        %v3473 = vtanh.pop %v2562
        %v3474 = vtanh.pop %v3332
        %v3475 = vtanh.pop %v3334
        %v3476 = vtanh.pop %v2564
        %v3477 = vtanh.pop %v2566
        %v3478 = vtanh.pop %v3336
        %v3479 = vtanh.pop %v3338
        %v3480 = vtanh.pop %v2570
        %v3481 = vtanh.pop %v2572
        %v3482 = vtanh.pop %v3342
        %v3483 = vtanh.pop %v3344
        %v3484 = vtanh.pop %v2574
        %v3485 = vtanh.pop %v2576
        %v3486 = vtanh.pop %v3346
        %v3487 = vtanh.pop %v3348
        %v3488 = vtanh.pop %v2580
        %v3489 = vtanh.pop %v2582
        %v3490 = vtanh.pop %v3352
        %v3491 = vtanh.pop %v3354
        %v3492 = vtanh.pop %v2584
        %v3493 = vtanh.pop %v2586
        %v3494 = vtanh.pop %v3356
        %v3495 = vtanh.pop %v3358
        %v3496 = vtanh.pop %v2590
        %v3497 = vtanh.pop %v2592
        %v3498 = vtanh.pop %v3362
        %v3499 = vtanh.pop %v3364
        %v3500 = vtanh.pop %v2594
        %v3501 = vtanh.pop %v2596
        %v3502 = vtanh.pop %v3366
        %v3503 = vtanh.pop %v3368
        %v3504 = vtanh.pop %v2600
        %v3505 = vtanh.pop %v2602
        %v3506 = vtanh.pop %v3372
        %v3507 = vtanh.pop %v3374
        %v3508 = vtanh.pop %v2604
        %v3509 = vtanh.pop %v2606
        %v3510 = vtanh.pop %v3376
        %v3511 = vtanh.pop %v3378
        %v3512 = vtanh.pop %v2610
        %v3513 = vtanh.pop %v2612
        %v3514 = vtanh.pop %v3382
        %v3515 = vtanh.pop %v3384
        %v3516 = vtanh.pop %v2614
        %v3517 = vtanh.pop %v2616
        %v3518 = vtanh.pop %v3386
        %v3519 = vtanh.pop %v3388
        %v3520 = vtanh.pop %v2620
        %v3521 = vtanh.pop %v2622
        %v3522 = vtanh.pop %v3392
        %v3523 = vtanh.pop %v3394
        %v3524 = vtanh.pop %v2624
        %v3525 = vtanh.pop %v2626
        %v3526 = vtanh.pop %v3396
        %v3527 = vtanh.pop %v3398
        %v3528 = vpack.c.bf16 %v3404, %v3400
        %v3529 = vpack.c.bf16 %v3405, %v3401
        %v3530 = vpack.c.bf16 %v3406, %v3402
        %v3531 = vpack.c.bf16 %v3407, %v3403
        %v3532 = vpack.c.bf16 %v3412, %v3408
        %v3533 = vpack.c.bf16 %v3413, %v3409
        %v3534 = vpack.c.bf16 %v3414, %v3410
        %v3535 = vpack.c.bf16 %v3415, %v3411
        %v3536 = vpack.c.bf16 %v3420, %v3416
        %v3537 = vpack.c.bf16 %v3421, %v3417
        %v3538 = vpack.c.bf16 %v3422, %v3418
        %v3539 = vpack.c.bf16 %v3423, %v3419
        %v3540 = vpack.c.bf16 %v3428, %v3424
        %v3541 = vpack.c.bf16 %v3429, %v3425
        %v3542 = vpack.c.bf16 %v3430, %v3426
        %v3543 = vpack.c.bf16 %v3431, %v3427
        %v3544 = vpack.c.bf16 %v3436, %v3432
        %v3545 = vpack.c.bf16 %v3437, %v3433
        %v3546 = vpack.c.bf16 %v3438, %v3434
        %v3547 = vpack.c.bf16 %v3439, %v3435
        %v3548 = vpack.c.bf16 %v3444, %v3440
        %v3549 = vpack.c.bf16 %v3445, %v3441
        %v3550 = vpack.c.bf16 %v3446, %v3442
        %v3551 = vpack.c.bf16 %v3447, %v3443
        %v3552 = vpack.c.bf16 %v3452, %v3448
        %v3553 = vpack.c.bf16 %v3453, %v3449
        %v3554 = vpack.c.bf16 %v3454, %v3450
        %v3555 = vpack.c.bf16 %v3455, %v3451
        %v3556 = vpack.c.bf16 %v3460, %v3456
        %v3557 = vpack.c.bf16 %v3461, %v3457
        %v3558 = vpack.c.bf16 %v3462, %v3458
        %v3559 = vpack.c.bf16 %v3463, %v3459
        %v3560 = vpack.c.bf16 %v3468, %v3464
        %v3561 = vpack.c.bf16 %v3469, %v3465
        %v3562 = vpack.c.bf16 %v3470, %v3466
        %v3563 = vpack.c.bf16 %v3471, %v3467
        %v3564 = vpack.c.bf16 %v3476, %v3472
        %v3565 = vpack.c.bf16 %v3477, %v3473
        %v3566 = vpack.c.bf16 %v3478, %v3474
        %v3567 = vpack.c.bf16 %v3479, %v3475
        %v3568 = vpack.c.bf16 %v3484, %v3480
        %v3569 = vpack.c.bf16 %v3485, %v3481
        %v3570 = vpack.c.bf16 %v3486, %v3482
        %v3571 = vpack.c.bf16 %v3487, %v3483
        %v3572 = vpack.c.bf16 %v3492, %v3488
        %v3573 = vpack.c.bf16 %v3493, %v3489
        %v3574 = vpack.c.bf16 %v3494, %v3490
        %v3575 = vpack.c.bf16 %v3495, %v3491
        %v3576 = vpack.c.bf16 %v3500, %v3496
        %v3577 = vpack.c.bf16 %v3501, %v3497
        %v3578 = vpack.c.bf16 %v3502, %v3498
        %v3579 = vpack.c.bf16 %v3503, %v3499
        %v3580 = vpack.c.bf16 %v3508, %v3504
        %v3581 = vpack.c.bf16 %v3509, %v3505
        %v3582 = vpack.c.bf16 %v3510, %v3506
        %v3583 = vpack.c.bf16 %v3511, %v3507
        %v3584 = vpack.c.bf16 %v3516, %v3512
        %v3585 = vpack.c.bf16 %v3517, %v3513
        %v3586 = vpack.c.bf16 %v3518, %v3514
        %v3587 = vpack.c.bf16 %v3519, %v3515
        %v3588 = vpack.c.bf16 %v3524, %v3520
        %v3589 = vpack.c.bf16 %v3525, %v3521
        %v3590 = vpack.c.bf16 %v3526, %v3522
        %v3591 = vpack.c.bf16 %v3527, %v3523
        %v3592 = vld [vmem:[%s3] sm:$0xff]
        %v3593 = vld [vmem:[%s3 + $0x8] sm:$0xff]
        %v3594 = vld [vmem:[%s3 + $0x10] sm:$0xff]
        %v3595 = vld [vmem:[%s3 + $0x18] sm:$0xff]
        %v3596 = vld [vmem:[%s3 + $0x20] sm:$0xff]
        %v3597 = vld [vmem:[%s3 + $0x28] sm:$0xff]
        %v3598 = vld [vmem:[%s3 + $0x30] sm:$0xff]
        %v3599 = vld [vmem:[%s3 + $0x38] sm:$0xff]
        %v3600 = vld [vmem:[%s3 + $0x40] sm:$0xff]
        %v3601 = vld [vmem:[%s3 + $0x48] sm:$0xff]
        %v3602 = vld [vmem:[%s3 + $0x50] sm:$0xff]
        %v3603 = vld [vmem:[%s3 + $0x58] sm:$0xff]
        %v3604 = vld [vmem:[%s3 + $0x60] sm:$0xff]
        %v3605 = vld [vmem:[%s3 + $0x68] sm:$0xff]
        %v3606 = vld [vmem:[%s3 + $0x70] sm:$0xff]
        %v3607 = vld [vmem:[%s3 + $0x78] sm:$0xff]
        %v3608 = vld [vmem:[%s3 + $0x80] sm:$0xff]
        %v3609 = vld [vmem:[%s3 + $0x88] sm:$0xff]
        %v3610 = vld [vmem:[%s3 + $0x90] sm:$0xff]
        %v3611 = vld [vmem:[%s3 + $0x98] sm:$0xff]
        %v3612 = vld [vmem:[%s3 + $0xa0] sm:$0xff]
        %v3613 = vld [vmem:[%s3 + $0xa8] sm:$0xff]
        %v3614 = vld [vmem:[%s3 + $0xb0] sm:$0xff]
        %v3615 = vld [vmem:[%s3 + $0xb8] sm:$0xff]
        %v3616 = vld [vmem:[%s3 + $0xc0] sm:$0xff]
        %v3617 = vld [vmem:[%s3 + $0xc8] sm:$0xff]
        %v3618 = vld [vmem:[%s3 + $0xd0] sm:$0xff]
        %v3619 = vld [vmem:[%s3 + $0xd8] sm:$0xff]
        %v3620 = vld [vmem:[%s3 + $0xe0] sm:$0xff]
        %v3621 = vld [vmem:[%s3 + $0xe8] sm:$0xff]
        %v3622 = vld [vmem:[%s3 + $0xf0] sm:$0xff]
        %v3623 = vld [vmem:[%s3 + $0xf8] sm:$0xff]
        %v3624 = vld [vmem:[%s3 + $0x100] sm:$0xff]
        %v3625 = vld [vmem:[%s3 + $0x108] sm:$0xff]
        %v3626 = vld [vmem:[%s3 + $0x110] sm:$0xff]
        %v3627 = vld [vmem:[%s3 + $0x118] sm:$0xff]
        %v3628 = vld [vmem:[%s3 + $0x120] sm:$0xff]
        %v3629 = vld [vmem:[%s3 + $0x128] sm:$0xff]
        %v3630 = vld [vmem:[%s3 + $0x130] sm:$0xff]
        %v3631 = vld [vmem:[%s3 + $0x138] sm:$0xff]
        %v3632 = vld [vmem:[%s3 + $0x140] sm:$0xff]
        %v3633 = vld [vmem:[%s3 + $0x148] sm:$0xff]
        %v3634 = vld [vmem:[%s3 + $0x150] sm:$0xff]
        %v3635 = vld [vmem:[%s3 + $0x158] sm:$0xff]
        %v3636 = vld [vmem:[%s3 + $0x160] sm:$0xff]
        %v3637 = vld [vmem:[%s3 + $0x168] sm:$0xff]
        %v3638 = vld [vmem:[%s3 + $0x170] sm:$0xff]
        %v3639 = vld [vmem:[%s3 + $0x178] sm:$0xff]
        %v3640 = vld [vmem:[%s3 + $0x180] sm:$0xff]
        %v3641 = vld [vmem:[%s3 + $0x188] sm:$0xff]
        %v3642 = vld [vmem:[%s3 + $0x190] sm:$0xff]
        %v3643 = vld [vmem:[%s3 + $0x198] sm:$0xff]
        %v3644 = vld [vmem:[%s3 + $0x1a0] sm:$0xff]
        %v3645 = vld [vmem:[%s3 + $0x1a8] sm:$0xff]
        %v3646 = vld [vmem:[%s3 + $0x1b0] sm:$0xff]
        %v3647 = vld [vmem:[%s3 + $0x1b8] sm:$0xff]
        %v3648 = vld [vmem:[%s3 + $0x1c0] sm:$0xff]
        %v3649 = vld [vmem:[%s3 + $0x1c8] sm:$0xff]
        %v3650 = vld [vmem:[%s3 + $0x1d0] sm:$0xff]
        %v3651 = vld [vmem:[%s3 + $0x1d8] sm:$0xff]
        %v3652 = vld [vmem:[%s3 + $0x1e0] sm:$0xff]
        %v3653 = vld [vmem:[%s3 + $0x1e8] sm:$0xff]
        %v3654 = vld [vmem:[%s3 + $0x1f0] sm:$0xff]
        %v3655 = vld [vmem:[%s3 + $0x1f8] sm:$0xff]
        %v3656 = vld [vmem:[%s3 + $0x200] sm:$0xff]
        %v3657 = vld [vmem:[%s3 + $0x208] sm:$0xff]
        %v3658 = vld [vmem:[%s3 + $0x210] sm:$0xff]
        %v3659 = vld [vmem:[%s3 + $0x218] sm:$0xff]
        %v3660 = vld [vmem:[%s3 + $0x220] sm:$0xff]
        %v3661 = vld [vmem:[%s3 + $0x228] sm:$0xff]
        %v3662 = vld [vmem:[%s3 + $0x230] sm:$0xff]
        %v3663 = vld [vmem:[%s3 + $0x238] sm:$0xff]
        %v3664 = vld [vmem:[%s3 + $0x240] sm:$0xff]
        %v3665 = vld [vmem:[%s3 + $0x248] sm:$0xff]
        %v3666 = vld [vmem:[%s3 + $0x250] sm:$0xff]
        %v3667 = vld [vmem:[%s3 + $0x258] sm:$0xff]
        %v3668 = vld [vmem:[%s3 + $0x260] sm:$0xff]
        %v3669 = vld [vmem:[%s3 + $0x268] sm:$0xff]
        %v3670 = vld [vmem:[%s3 + $0x270] sm:$0xff]
        %v3671 = vld [vmem:[%s3 + $0x278] sm:$0xff]
        %v3672 = vld [vmem:[%s3 + $0x280] sm:$0xff]
        %v3673 = vld [vmem:[%s3 + $0x288] sm:$0xff]
        %v3674 = vld [vmem:[%s3 + $0x290] sm:$0xff]
        %v3675 = vld [vmem:[%s3 + $0x298] sm:$0xff]
        %v3676 = vld [vmem:[%s3 + $0x2a0] sm:$0xff]
        %v3677 = vld [vmem:[%s3 + $0x2a8] sm:$0xff]
        %v3678 = vld [vmem:[%s3 + $0x2b0] sm:$0xff]
        %v3679 = vld [vmem:[%s3 + $0x2b8] sm:$0xff]
        %v3680 = vld [vmem:[%s3 + $0x2c0] sm:$0xff]
        %v3681 = vld [vmem:[%s3 + $0x2c8] sm:$0xff]
        %v3682 = vld [vmem:[%s3 + $0x2d0] sm:$0xff]
        %v3683 = vld [vmem:[%s3 + $0x2d8] sm:$0xff]
        %v3684 = vld [vmem:[%s3 + $0x2e0] sm:$0xff]
        %v3685 = vld [vmem:[%s3 + $0x2e8] sm:$0xff]
        %v3686 = vld [vmem:[%s3 + $0x2f0] sm:$0xff]
        %v3687 = vld [vmem:[%s3 + $0x2f8] sm:$0xff]
        %v3688 = vld [vmem:[%s3 + $0x300] sm:$0xff]
        %v3689 = vld [vmem:[%s3 + $0x308] sm:$0xff]
        %v3690 = vld [vmem:[%s3 + $0x310] sm:$0xff]
        %v3691 = vld [vmem:[%s3 + $0x318] sm:$0xff]
        %v3692 = vld [vmem:[%s3 + $0x320] sm:$0xff]
        %v3693 = vld [vmem:[%s3 + $0x328] sm:$0xff]
        %v3694 = vld [vmem:[%s3 + $0x330] sm:$0xff]
        %v3695 = vld [vmem:[%s3 + $0x338] sm:$0xff]
        %v3696 = vld [vmem:[%s3 + $0x340] sm:$0xff]
        %v3697 = vld [vmem:[%s3 + $0x348] sm:$0xff]
        %v3698 = vld [vmem:[%s3 + $0x350] sm:$0xff]
        %v3699 = vld [vmem:[%s3 + $0x358] sm:$0xff]
        %v3700 = vld [vmem:[%s3 + $0x360] sm:$0xff]
        %v3701 = vld [vmem:[%s3 + $0x368] sm:$0xff]
        %v3702 = vld [vmem:[%s3 + $0x370] sm:$0xff]
        %v3703 = vld [vmem:[%s3 + $0x378] sm:$0xff]
        %v3704 = vld [vmem:[%s3 + $0x380] sm:$0xff]
        %v3705 = vld [vmem:[%s3 + $0x388] sm:$0xff]
        %v3706 = vld [vmem:[%s3 + $0x390] sm:$0xff]
        %v3707 = vld [vmem:[%s3 + $0x398] sm:$0xff]
        %v3708 = vld [vmem:[%s3 + $0x3a0] sm:$0xff]
        %v3709 = vld [vmem:[%s3 + $0x3a8] sm:$0xff]
        %v3710 = vld [vmem:[%s3 + $0x3b0] sm:$0xff]
        %v3711 = vld [vmem:[%s3 + $0x3b8] sm:$0xff]
        %v3712 = vld [vmem:[%s3 + $0x3c0] sm:$0xff]
        %v3713 = vld [vmem:[%s3 + $0x3c8] sm:$0xff]
        %v3714 = vld [vmem:[%s3 + $0x3d0] sm:$0xff]
        %v3715 = vld [vmem:[%s3 + $0x3d8] sm:$0xff]
        %v3716 = vld [vmem:[%s3 + $0x3e0] sm:$0xff]
        %v3717 = vld [vmem:[%s3 + $0x3e8] sm:$0xff]
        %v3718 = vld [vmem:[%s3 + $0x3f0] sm:$0xff]
        %v3719 = vld [vmem:[%s3 + $0x3f8] sm:$0xff]
        %v3720 = vlaneseq
        %v3721 = vshrl.u32 %v3720, 7
        %v3722 = vsub.s32 1, %v3721
        %v3723 = vrot.slane %v257, %v3722
        %v3724 = vlaneseq
        %v3725 = vshrl.u32 %v3724, 7
        %v3726 = vsub.s32 3, %v3725
        %v3727 = vrot.slane %v257, %v3726
        %v3728 = vlaneseq
        %v3729 = vshrl.u32 %v3728, 7
        %v3730 = vsub.s32 5, %v3729
        %v3731 = vrot.slane %v257, %v3730
        %v3732 = vlaneseq
        %v3733 = vshrl.u32 %v3732, 7
        %v3734 = vsub.s32 7, %v3733
        %v3735 = vrot.slane %v257, %v3734
        %v3740 = vlaneseq
        %v3741 = vshrl.u32 %v3740, 7
        %v3742 = vsub.s32 1, %v3741
        %v3743 = vrot.slane %v3723, %v3742
        %v3744 = vlaneseq
        %v3745 = vshrl.u32 %v3744, 7
        %v3746 = vsub.s32 1, %v3745
        %v3747 = vrot.slane %v3727, %v3746
        %v3748 = vlaneseq
        %v3749 = vshrl.u32 %v3748, 7
        %v3750 = vsub.s32 1, %v3749
        %v3751 = vrot.slane %v3731, %v3750
        %v3752 = vlaneseq
        %v3753 = vshrl.u32 %v3752, 7
        %v3754 = vsub.s32 1, %v3753
        %v3755 = vrot.slane %v3735, %v3754
        %v3884 = vunpack.c.l.b16 %v3592
        %v3885 = vunpack.c.h.b16 %v3592
        %v3886 = vunpack.c.l.b16 %v3593
        %v3887 = vunpack.c.h.b16 %v3593
        %v3888 = vunpack.c.l.b16 %v3594
        %v3889 = vunpack.c.h.b16 %v3594
        %v3890 = vunpack.c.l.b16 %v3595
        %v3891 = vunpack.c.h.b16 %v3595
        %v3892 = vunpack.c.l.b16 %v3596
        %v3893 = vunpack.c.h.b16 %v3596
        %v3894 = vunpack.c.l.b16 %v3597
        %v3895 = vunpack.c.h.b16 %v3597
        %v3896 = vunpack.c.l.b16 %v3598
        %v3897 = vunpack.c.h.b16 %v3598
        %v3898 = vunpack.c.l.b16 %v3599
        %v3899 = vunpack.c.h.b16 %v3599
        %v3900 = vunpack.c.l.b16 %v3600
        %v3901 = vunpack.c.h.b16 %v3600
        %v3902 = vunpack.c.l.b16 %v3601
        %v3903 = vunpack.c.h.b16 %v3601
        %v3904 = vunpack.c.l.b16 %v3602
        %v3905 = vunpack.c.h.b16 %v3602
        %v3906 = vunpack.c.l.b16 %v3603
        %v3907 = vunpack.c.h.b16 %v3603
        %v3908 = vunpack.c.l.b16 %v3604
        %v3909 = vunpack.c.h.b16 %v3604
        %v3910 = vunpack.c.l.b16 %v3605
        %v3911 = vunpack.c.h.b16 %v3605
        %v3912 = vunpack.c.l.b16 %v3606
        %v3913 = vunpack.c.h.b16 %v3606
        %v3914 = vunpack.c.l.b16 %v3607
        %v3915 = vunpack.c.h.b16 %v3607
        %v3916 = vunpack.c.l.b16 %v3608
        %v3917 = vunpack.c.h.b16 %v3608
        %v3918 = vunpack.c.l.b16 %v3609
        %v3919 = vunpack.c.h.b16 %v3609
        %v3920 = vunpack.c.l.b16 %v3610
        %v3921 = vunpack.c.h.b16 %v3610
        %v3922 = vunpack.c.l.b16 %v3611
        %v3923 = vunpack.c.h.b16 %v3611
        %v3924 = vunpack.c.l.b16 %v3612
        %v3925 = vunpack.c.h.b16 %v3612
        %v3926 = vunpack.c.l.b16 %v3613
        %v3927 = vunpack.c.h.b16 %v3613
        %v3928 = vunpack.c.l.b16 %v3614
        %v3929 = vunpack.c.h.b16 %v3614
        %v3930 = vunpack.c.l.b16 %v3615
        %v3931 = vunpack.c.h.b16 %v3615
        %v3932 = vunpack.c.l.b16 %v3616
        %v3933 = vunpack.c.h.b16 %v3616
        %v3934 = vunpack.c.l.b16 %v3617
        %v3935 = vunpack.c.h.b16 %v3617
        %v3936 = vunpack.c.l.b16 %v3618
        %v3937 = vunpack.c.h.b16 %v3618
        %v3938 = vunpack.c.l.b16 %v3619
        %v3939 = vunpack.c.h.b16 %v3619
        %v3940 = vunpack.c.l.b16 %v3620
        %v3941 = vunpack.c.h.b16 %v3620
        %v3942 = vunpack.c.l.b16 %v3621
        %v3943 = vunpack.c.h.b16 %v3621
        %v3944 = vunpack.c.l.b16 %v3622
        %v3945 = vunpack.c.h.b16 %v3622
        %v3946 = vunpack.c.l.b16 %v3623
        %v3947 = vunpack.c.h.b16 %v3623
        %v3948 = vunpack.c.l.b16 %v3624
        %v3949 = vunpack.c.h.b16 %v3624
        %v3950 = vunpack.c.l.b16 %v3625
        %v3951 = vunpack.c.h.b16 %v3625
        %v3952 = vunpack.c.l.b16 %v3626
        %v3953 = vunpack.c.h.b16 %v3626
        %v3954 = vunpack.c.l.b16 %v3627
        %v3955 = vunpack.c.h.b16 %v3627
        %v3956 = vunpack.c.l.b16 %v3628
        %v3957 = vunpack.c.h.b16 %v3628
        %v3958 = vunpack.c.l.b16 %v3629
        %v3959 = vunpack.c.h.b16 %v3629
        %v3960 = vunpack.c.l.b16 %v3630
        %v3961 = vunpack.c.h.b16 %v3630
        %v3962 = vunpack.c.l.b16 %v3631
        %v3963 = vunpack.c.h.b16 %v3631
        %v3964 = vunpack.c.l.b16 %v3632
        %v3965 = vunpack.c.h.b16 %v3632
        %v3966 = vunpack.c.l.b16 %v3633
        %v3967 = vunpack.c.h.b16 %v3633
        %v3968 = vunpack.c.l.b16 %v3634
        %v3969 = vunpack.c.h.b16 %v3634
        %v3970 = vunpack.c.l.b16 %v3635
        %v3971 = vunpack.c.h.b16 %v3635
        %v3972 = vunpack.c.l.b16 %v3636
        %v3973 = vunpack.c.h.b16 %v3636
        %v3974 = vunpack.c.l.b16 %v3637
        %v3975 = vunpack.c.h.b16 %v3637
        %v3976 = vunpack.c.l.b16 %v3638
        %v3977 = vunpack.c.h.b16 %v3638
        %v3978 = vunpack.c.l.b16 %v3639
        %v3979 = vunpack.c.h.b16 %v3639
        %v3980 = vunpack.c.l.b16 %v3640
        %v3981 = vunpack.c.h.b16 %v3640
        %v3982 = vunpack.c.l.b16 %v3641
        %v3983 = vunpack.c.h.b16 %v3641
        %v3984 = vunpack.c.l.b16 %v3642
        %v3985 = vunpack.c.h.b16 %v3642
        %v3986 = vunpack.c.l.b16 %v3643
        %v3987 = vunpack.c.h.b16 %v3643
        %v3988 = vunpack.c.l.b16 %v3644
        %v3989 = vunpack.c.h.b16 %v3644
        %v3990 = vunpack.c.l.b16 %v3645
        %v3991 = vunpack.c.h.b16 %v3645
        %v3992 = vunpack.c.l.b16 %v3646
        %v3993 = vunpack.c.h.b16 %v3646
        %v3994 = vunpack.c.l.b16 %v3647
        %v3995 = vunpack.c.h.b16 %v3647
        %v3996 = vunpack.c.l.b16 %v3648
        %v3997 = vunpack.c.h.b16 %v3648
        %v3998 = vunpack.c.l.b16 %v3649
        %v3999 = vunpack.c.h.b16 %v3649
        %v4000 = vunpack.c.l.b16 %v3650
        %v4001 = vunpack.c.h.b16 %v3650
        %v4002 = vunpack.c.l.b16 %v3651
        %v4003 = vunpack.c.h.b16 %v3651
        %v4004 = vunpack.c.l.b16 %v3652
        %v4005 = vunpack.c.h.b16 %v3652
        %v4006 = vunpack.c.l.b16 %v3653
        %v4007 = vunpack.c.h.b16 %v3653
        %v4008 = vunpack.c.l.b16 %v3654
        %v4009 = vunpack.c.h.b16 %v3654
        %v4010 = vunpack.c.l.b16 %v3655
        %v4011 = vunpack.c.h.b16 %v3655
        %v4012 = vunpack.c.l.b16 %v3656
        %v4013 = vunpack.c.h.b16 %v3656
        %v4014 = vunpack.c.l.b16 %v3657
        %v4015 = vunpack.c.h.b16 %v3657
        %v4016 = vunpack.c.l.b16 %v3658
        %v4017 = vunpack.c.h.b16 %v3658
        %v4018 = vunpack.c.l.b16 %v3659
        %v4019 = vunpack.c.h.b16 %v3659
        %v4020 = vunpack.c.l.b16 %v3660
        %v4021 = vunpack.c.h.b16 %v3660
        %v4022 = vunpack.c.l.b16 %v3661
        %v4023 = vunpack.c.h.b16 %v3661
        %v4024 = vunpack.c.l.b16 %v3662
        %v4025 = vunpack.c.h.b16 %v3662
        %v4026 = vunpack.c.l.b16 %v3663
        %v4027 = vunpack.c.h.b16 %v3663
        %v4028 = vunpack.c.l.b16 %v3664
        %v4029 = vunpack.c.h.b16 %v3664
        %v4030 = vunpack.c.l.b16 %v3665
        %v4031 = vunpack.c.h.b16 %v3665
        %v4032 = vunpack.c.l.b16 %v3666
        %v4033 = vunpack.c.h.b16 %v3666
        %v4034 = vunpack.c.l.b16 %v3667
        %v4035 = vunpack.c.h.b16 %v3667
        %v4036 = vunpack.c.l.b16 %v3668
        %v4037 = vunpack.c.h.b16 %v3668
        %v4038 = vunpack.c.l.b16 %v3669
        %v4039 = vunpack.c.h.b16 %v3669
        %v4040 = vunpack.c.l.b16 %v3670
        %v4041 = vunpack.c.h.b16 %v3670
        %v4042 = vunpack.c.l.b16 %v3671
        %v4043 = vunpack.c.h.b16 %v3671
        %v4044 = vunpack.c.l.b16 %v3672
        %v4045 = vunpack.c.h.b16 %v3672
        %v4046 = vunpack.c.l.b16 %v3673
        %v4047 = vunpack.c.h.b16 %v3673
        %v4048 = vunpack.c.l.b16 %v3674
        %v4049 = vunpack.c.h.b16 %v3674
        %v4050 = vunpack.c.l.b16 %v3675
        %v4051 = vunpack.c.h.b16 %v3675
        %v4052 = vunpack.c.l.b16 %v3676
        %v4053 = vunpack.c.h.b16 %v3676
        %v4054 = vunpack.c.l.b16 %v3677
        %v4055 = vunpack.c.h.b16 %v3677
        %v4056 = vunpack.c.l.b16 %v3678
        %v4057 = vunpack.c.h.b16 %v3678
        %v4058 = vunpack.c.l.b16 %v3679
        %v4059 = vunpack.c.h.b16 %v3679
        %v4060 = vunpack.c.l.b16 %v3680
        %v4061 = vunpack.c.h.b16 %v3680
        %v4062 = vunpack.c.l.b16 %v3681
        %v4063 = vunpack.c.h.b16 %v3681
        %v4064 = vunpack.c.l.b16 %v3682
        %v4065 = vunpack.c.h.b16 %v3682
        %v4066 = vunpack.c.l.b16 %v3683
        %v4067 = vunpack.c.h.b16 %v3683
        %v4068 = vunpack.c.l.b16 %v3684
        %v4069 = vunpack.c.h.b16 %v3684
        %v4070 = vunpack.c.l.b16 %v3685
        %v4071 = vunpack.c.h.b16 %v3685
        %v4072 = vunpack.c.l.b16 %v3686
        %v4073 = vunpack.c.h.b16 %v3686
        %v4074 = vunpack.c.l.b16 %v3687
        %v4075 = vunpack.c.h.b16 %v3687
        %v4076 = vunpack.c.l.b16 %v3688
        %v4077 = vunpack.c.h.b16 %v3688
        %v4078 = vunpack.c.l.b16 %v3689
        %v4079 = vunpack.c.h.b16 %v3689
        %v4080 = vunpack.c.l.b16 %v3690
        %v4081 = vunpack.c.h.b16 %v3690
        %v4082 = vunpack.c.l.b16 %v3691
        %v4083 = vunpack.c.h.b16 %v3691
        %v4084 = vunpack.c.l.b16 %v3692
        %v4085 = vunpack.c.h.b16 %v3692
        %v4086 = vunpack.c.l.b16 %v3693
        %v4087 = vunpack.c.h.b16 %v3693
        %v4088 = vunpack.c.l.b16 %v3694
        %v4089 = vunpack.c.h.b16 %v3694
        %v4090 = vunpack.c.l.b16 %v3695
        %v4091 = vunpack.c.h.b16 %v3695
        %v4092 = vunpack.c.l.b16 %v3696
        %v4093 = vunpack.c.h.b16 %v3696
        %v4094 = vunpack.c.l.b16 %v3697
        %v4095 = vunpack.c.h.b16 %v3697
        %v4096 = vunpack.c.l.b16 %v3698
        %v4097 = vunpack.c.h.b16 %v3698
        %v4098 = vunpack.c.l.b16 %v3699
        %v4099 = vunpack.c.h.b16 %v3699
        %v4100 = vunpack.c.l.b16 %v3700
        %v4101 = vunpack.c.h.b16 %v3700
        %v4102 = vunpack.c.l.b16 %v3701
        %v4103 = vunpack.c.h.b16 %v3701
        %v4104 = vunpack.c.l.b16 %v3702
        %v4105 = vunpack.c.h.b16 %v3702
        %v4106 = vunpack.c.l.b16 %v3703
        %v4107 = vunpack.c.h.b16 %v3703
        %v4108 = vunpack.c.l.b16 %v3704
        %v4109 = vunpack.c.h.b16 %v3704
        %v4110 = vunpack.c.l.b16 %v3705
        %v4111 = vunpack.c.h.b16 %v3705
        %v4112 = vunpack.c.l.b16 %v3706
        %v4113 = vunpack.c.h.b16 %v3706
        %v4114 = vunpack.c.l.b16 %v3707
        %v4115 = vunpack.c.h.b16 %v3707
        %v4116 = vunpack.c.l.b16 %v3708
        %v4117 = vunpack.c.h.b16 %v3708
        %v4118 = vunpack.c.l.b16 %v3709
        %v4119 = vunpack.c.h.b16 %v3709
        %v4120 = vunpack.c.l.b16 %v3710
        %v4121 = vunpack.c.h.b16 %v3710
        %v4122 = vunpack.c.l.b16 %v3711
        %v4123 = vunpack.c.h.b16 %v3711
        %v4124 = vunpack.c.l.b16 %v3712
        %v4125 = vunpack.c.h.b16 %v3712
        %v4126 = vunpack.c.l.b16 %v3713
        %v4127 = vunpack.c.h.b16 %v3713
        %v4128 = vunpack.c.l.b16 %v3714
        %v4129 = vunpack.c.h.b16 %v3714
        %v4130 = vunpack.c.l.b16 %v3715
        %v4131 = vunpack.c.h.b16 %v3715
        %v4132 = vunpack.c.l.b16 %v3716
        %v4133 = vunpack.c.h.b16 %v3716
        %v4134 = vunpack.c.l.b16 %v3717
        %v4135 = vunpack.c.h.b16 %v3717
        %v4136 = vunpack.c.l.b16 %v3718
        %v4137 = vunpack.c.h.b16 %v3718
        %v4138 = vunpack.c.l.b16 %v3719
        %v4139 = vunpack.c.h.b16 %v3719
        %v4140 = vpack.c.b16 %v3888, %v3884
        %v4141 = vpack.c.b16 %v3889, %v3885
        %v4142 = vpack.c.b16 %v3890, %v3886
        %v4143 = vpack.c.b16 %v3891, %v3887
        %v4144 = vpack.c.b16 %v3896, %v3892
        %v4145 = vpack.c.b16 %v3897, %v3893
        %v4146 = vpack.c.b16 %v3898, %v3894
        %v4147 = vpack.c.b16 %v3899, %v3895
        %v4148 = vpack.c.b16 %v3904, %v3900
        %v4149 = vpack.c.b16 %v3905, %v3901
        %v4150 = vpack.c.b16 %v3906, %v3902
        %v4151 = vpack.c.b16 %v3907, %v3903
        %v4152 = vpack.c.b16 %v3912, %v3908
        %v4153 = vpack.c.b16 %v3913, %v3909
        %v4154 = vpack.c.b16 %v3914, %v3910
        %v4155 = vpack.c.b16 %v3915, %v3911
        %v4156 = vpack.c.b16 %v3920, %v3916
        %v4157 = vpack.c.b16 %v3921, %v3917
        %v4158 = vpack.c.b16 %v3922, %v3918
        %v4159 = vpack.c.b16 %v3923, %v3919
        %v4160 = vpack.c.b16 %v3928, %v3924
        %v4161 = vpack.c.b16 %v3929, %v3925
        %v4162 = vpack.c.b16 %v3930, %v3926
        %v4163 = vpack.c.b16 %v3931, %v3927
        %v4164 = vpack.c.b16 %v3936, %v3932
        %v4165 = vpack.c.b16 %v3937, %v3933
        %v4166 = vpack.c.b16 %v3938, %v3934
        %v4167 = vpack.c.b16 %v3939, %v3935
        %v4168 = vpack.c.b16 %v3944, %v3940
        %v4169 = vpack.c.b16 %v3945, %v3941
        %v4170 = vpack.c.b16 %v3946, %v3942
        %v4171 = vpack.c.b16 %v3947, %v3943
        %v4172 = vpack.c.b16 %v3952, %v3948
        %v4173 = vpack.c.b16 %v3953, %v3949
        %v4174 = vpack.c.b16 %v3954, %v3950
        %v4175 = vpack.c.b16 %v3955, %v3951
        %v4176 = vpack.c.b16 %v3960, %v3956
        %v4177 = vpack.c.b16 %v3961, %v3957
        %v4178 = vpack.c.b16 %v3962, %v3958
        %v4179 = vpack.c.b16 %v3963, %v3959
        %v4180 = vpack.c.b16 %v3968, %v3964
        %v4181 = vpack.c.b16 %v3969, %v3965
        %v4182 = vpack.c.b16 %v3970, %v3966
        %v4183 = vpack.c.b16 %v3971, %v3967
        %v4184 = vpack.c.b16 %v3976, %v3972
        %v4185 = vpack.c.b16 %v3977, %v3973
        %v4186 = vpack.c.b16 %v3978, %v3974
        %v4187 = vpack.c.b16 %v3979, %v3975
        %v4188 = vpack.c.b16 %v3984, %v3980
        %v4189 = vpack.c.b16 %v3985, %v3981
        %v4190 = vpack.c.b16 %v3986, %v3982
        %v4191 = vpack.c.b16 %v3987, %v3983
        %v4192 = vpack.c.b16 %v3992, %v3988
        %v4193 = vpack.c.b16 %v3993, %v3989
        %v4194 = vpack.c.b16 %v3994, %v3990
        %v4195 = vpack.c.b16 %v3995, %v3991
        %v4196 = vpack.c.b16 %v4000, %v3996
        %v4197 = vpack.c.b16 %v4001, %v3997
        %v4198 = vpack.c.b16 %v4002, %v3998
        %v4199 = vpack.c.b16 %v4003, %v3999
        %v4200 = vpack.c.b16 %v4008, %v4004
        %v4201 = vpack.c.b16 %v4009, %v4005
        %v4202 = vpack.c.b16 %v4010, %v4006
        %v4203 = vpack.c.b16 %v4011, %v4007
        %v4204 = vpack.c.b16 %v4016, %v4012
        %v4205 = vpack.c.b16 %v4017, %v4013
        %v4206 = vpack.c.b16 %v4018, %v4014
        %v4207 = vpack.c.b16 %v4019, %v4015
        %v4208 = vpack.c.b16 %v4024, %v4020
        %v4209 = vpack.c.b16 %v4025, %v4021
        %v4210 = vpack.c.b16 %v4026, %v4022
        %v4211 = vpack.c.b16 %v4027, %v4023
        %v4212 = vpack.c.b16 %v4032, %v4028
        %v4213 = vpack.c.b16 %v4033, %v4029
        %v4214 = vpack.c.b16 %v4034, %v4030
        %v4215 = vpack.c.b16 %v4035, %v4031
        %v4216 = vpack.c.b16 %v4040, %v4036
        %v4217 = vpack.c.b16 %v4041, %v4037
        %v4218 = vpack.c.b16 %v4042, %v4038
        %v4219 = vpack.c.b16 %v4043, %v4039
        %v4220 = vpack.c.b16 %v4048, %v4044
        %v4221 = vpack.c.b16 %v4049, %v4045
        %v4222 = vpack.c.b16 %v4050, %v4046
        %v4223 = vpack.c.b16 %v4051, %v4047
        %v4224 = vpack.c.b16 %v4056, %v4052
        %v4225 = vpack.c.b16 %v4057, %v4053
        %v4226 = vpack.c.b16 %v4058, %v4054
        %v4227 = vpack.c.b16 %v4059, %v4055
        %v4228 = vpack.c.b16 %v4064, %v4060
        %v4229 = vpack.c.b16 %v4065, %v4061
        %v4230 = vpack.c.b16 %v4066, %v4062
        %v4231 = vpack.c.b16 %v4067, %v4063
        %v4232 = vpack.c.b16 %v4072, %v4068
        %v4233 = vpack.c.b16 %v4073, %v4069
        %v4234 = vpack.c.b16 %v4074, %v4070
        %v4235 = vpack.c.b16 %v4075, %v4071
        %v4236 = vpack.c.b16 %v4080, %v4076
        %v4237 = vpack.c.b16 %v4081, %v4077
        %v4238 = vpack.c.b16 %v4082, %v4078
        %v4239 = vpack.c.b16 %v4083, %v4079
        %v4240 = vpack.c.b16 %v4088, %v4084
        %v4241 = vpack.c.b16 %v4089, %v4085
        %v4242 = vpack.c.b16 %v4090, %v4086
        %v4243 = vpack.c.b16 %v4091, %v4087
        %v4244 = vpack.c.b16 %v4096, %v4092
        %v4245 = vpack.c.b16 %v4097, %v4093
        %v4246 = vpack.c.b16 %v4098, %v4094
        %v4247 = vpack.c.b16 %v4099, %v4095
        %v4248 = vpack.c.b16 %v4104, %v4100
        %v4249 = vpack.c.b16 %v4105, %v4101
        %v4250 = vpack.c.b16 %v4106, %v4102
        %v4251 = vpack.c.b16 %v4107, %v4103
        %v4252 = vpack.c.b16 %v4112, %v4108
        %v4253 = vpack.c.b16 %v4113, %v4109
        %v4254 = vpack.c.b16 %v4114, %v4110
        %v4255 = vpack.c.b16 %v4115, %v4111
        %v4256 = vpack.c.b16 %v4120, %v4116
        %v4257 = vpack.c.b16 %v4121, %v4117
        %v4258 = vpack.c.b16 %v4122, %v4118
        %v4259 = vpack.c.b16 %v4123, %v4119
        %v4260 = vpack.c.b16 %v4128, %v4124
        %v4261 = vpack.c.b16 %v4129, %v4125
        %v4262 = vpack.c.b16 %v4130, %v4126
        %v4263 = vpack.c.b16 %v4131, %v4127
        %v4264 = vpack.c.b16 %v4136, %v4132
        %v4265 = vpack.c.b16 %v4137, %v4133
        %v4266 = vpack.c.b16 %v4138, %v4134
        %v4267 = vpack.c.b16 %v4139, %v4135
        %4396 = vmatprep.subr.bf16.mxu0 %v4141
        %4397 = vmatpush1.bf16.msra.mxu0 %v4140
        %4398 = vmatprep.subr.bf16.mxu0 %v4145
        %4399 = vmatpush1.bf16.msra.mxu0 %v4144
        %4400 = vmatprep.subr.bf16.mxu0 %v4149
        %4401 = vmatpush1.bf16.msra.mxu0 %v4148
        %4402 = vmatprep.subr.bf16.mxu0 %v4153
        %4403 = vmatpush1.bf16.msra.mxu0 %v4152
        %4404 = vmatprep.subr.bf16.mxu0 %v4157
        %4405 = vmatpush1.bf16.msra.mxu0 %v4156
        %4406 = vmatprep.subr.bf16.mxu0 %v4161
        %4407 = vmatpush1.bf16.msra.mxu0 %v4160
        %4408 = vmatprep.subr.bf16.mxu0 %v4165
        %4409 = vmatpush1.bf16.msra.mxu0 %v4164
        %4410 = vmatprep.subr.bf16.mxu0 %v4169
        %4411 = vmatpush1.bf16.msra.mxu0 %v4168
        %4412 = vmatprep.subr.bf16.mxu0 %v4173
        %4413 = vmatpush1.bf16.msra.mxu0 %v4172
        %4414 = vmatprep.subr.bf16.mxu0 %v4177
        %4415 = vmatpush1.bf16.msra.mxu0 %v4176
        %4416 = vmatprep.subr.bf16.mxu0 %v4181
        %4417 = vmatpush1.bf16.msra.mxu0 %v4180
        %4418 = vmatprep.subr.bf16.mxu0 %v4185
        %4419 = vmatpush1.bf16.msra.mxu0 %v4184
        %4420 = vmatprep.subr.bf16.mxu0 %v4189
        %4421 = vmatpush1.bf16.msra.mxu0 %v4188
        %4422 = vmatprep.subr.bf16.mxu0 %v4193
        %4423 = vmatpush1.bf16.msra.mxu0 %v4192
        %4424 = vmatprep.subr.bf16.mxu0 %v4197
        %4425 = vmatpush1.bf16.msra.mxu0 %v4196
        %4426 = vmatprep.subr.bf16.mxu0 %v4201
        %4427 = vmatpush1.bf16.msra.mxu0 %v4200
        %4428 = vmatprep.mubr.bf16.mxu0 %v3529
        %4429 = vmatmul.mubr.bf16.gmra.mrb[0].mxu0 %v3528
        %v4430 = vpop.f32.mrb[0].mxu0
        %v4431 = vadd.f32 %v3743, %v4430
        %v4432 = vpop.f32.mrb[0].mxu0
        %v4433 = vadd.f32 %v3747, %v4432
        %v4434 = vpop.f32.mrb[0].mxu0
        %v4435 = vadd.f32 %v3743, %v4434
        %v4436 = vpop.f32.mrb[0].mxu0
        %v4437 = vadd.f32 %v3747, %v4436
        %4438 = vmatprep.mubr.bf16.mxu0 %v3533
        %4439 = vmatmul.mubr.bf16.gmra.mrb[0].mxu0 %v3532
        %v4440 = vpop.f32.mrb[0].mxu0
        %v4441 = vadd.f32 %v3743, %v4440
        %v4442 = vpop.f32.mrb[0].mxu0
        %v4443 = vadd.f32 %v3747, %v4442
        %v4444 = vpop.f32.mrb[0].mxu0
        %v4445 = vadd.f32 %v3743, %v4444
        %v4446 = vpop.f32.mrb[0].mxu0
        %v4447 = vadd.f32 %v3747, %v4446
        %4448 = vmatprep.mubr.bf16.mxu0 %v3537
        %4449 = vmatmul.mubr.bf16.gmra.mrb[0].mxu0 %v3536
        %v4450 = vpop.f32.mrb[0].mxu0
        %v4451 = vadd.f32 %v3743, %v4450
        %v4452 = vpop.f32.mrb[0].mxu0
        %v4453 = vadd.f32 %v3747, %v4452
        %v4454 = vpop.f32.mrb[0].mxu0
        %v4455 = vadd.f32 %v3743, %v4454
        %v4456 = vpop.f32.mrb[0].mxu0
        %v4457 = vadd.f32 %v3747, %v4456
        %4458 = vmatprep.mubr.bf16.mxu0 %v3541
        %4459 = vmatmul.mubr.bf16.gmra.mrb[0].mxu0 %v3540
        %v4460 = vpop.f32.mrb[0].mxu0
        %v4461 = vadd.f32 %v3743, %v4460
        %v4462 = vpop.f32.mrb[0].mxu0
        %v4463 = vadd.f32 %v3747, %v4462
        %v4464 = vpop.f32.mrb[0].mxu0
        %v4465 = vadd.f32 %v3743, %v4464
        %v4466 = vpop.f32.mrb[0].mxu0
        %v4467 = vadd.f32 %v3747, %v4466
        %4468 = vmatprep.mubr.bf16.mxu0 %v3545
        %4469 = vmatmul.mubr.bf16.gmra.mrb[0].mxu0 %v3544
        %v4470 = vpop.f32.mrb[0].mxu0
        %v4471 = vadd.f32 %v3743, %v4470
        %v4472 = vpop.f32.mrb[0].mxu0
        %v4473 = vadd.f32 %v3747, %v4472
        %v4474 = vpop.f32.mrb[0].mxu0
        %v4475 = vadd.f32 %v3743, %v4474
        %v4476 = vpop.f32.mrb[0].mxu0
        %v4477 = vadd.f32 %v3747, %v4476
        %4478 = vmatprep.mubr.bf16.mxu0 %v3549
        %4479 = vmatmul.mubr.bf16.gmra.mrb[0].mxu0 %v3548
        %v4480 = vpop.f32.mrb[0].mxu0
        %v4481 = vadd.f32 %v3743, %v4480
        %v4482 = vpop.f32.mrb[0].mxu0
        %v4483 = vadd.f32 %v3747, %v4482
        %v4484 = vpop.f32.mrb[0].mxu0
        %v4485 = vadd.f32 %v3743, %v4484
        %v4486 = vpop.f32.mrb[0].mxu0
        %v4487 = vadd.f32 %v3747, %v4486
        %4488 = vmatprep.mubr.bf16.mxu0 %v3553
        %4489 = vmatmul.mubr.bf16.gmra.mrb[0].mxu0 %v3552
        %v4490 = vpop.f32.mrb[0].mxu0
        %v4491 = vadd.f32 %v3743, %v4490
        %v4492 = vpop.f32.mrb[0].mxu0
        %v4493 = vadd.f32 %v3747, %v4492
        %v4494 = vpop.f32.mrb[0].mxu0
        %v4495 = vadd.f32 %v3743, %v4494
        %v4496 = vpop.f32.mrb[0].mxu0
        %v4497 = vadd.f32 %v3747, %v4496
        %4498 = vmatprep.mubr.bf16.mxu0 %v3557
        %4499 = vmatmul.mubr.bf16.gmra.mrb[0].mxu0 %v3556
        %v4500 = vpop.f32.mrb[0].mxu0
        %v4501 = vadd.f32 %v3743, %v4500
        %v4502 = vpop.f32.mrb[0].mxu0
        %v4503 = vadd.f32 %v3747, %v4502
        %v4504 = vpop.f32.mrb[0].mxu0
        %v4505 = vadd.f32 %v3743, %v4504
        %v4506 = vpop.f32.mrb[0].mxu0
        %v4507 = vadd.f32 %v3747, %v4506
        %4508 = vmatprep.mubr.bf16.mxu0 %v3561
        %4509 = vmatmul.mubr.bf16.gmra.mrb[0].mxu0 %v3560
        %v4510 = vpop.f32.mrb[0].mxu0
        %v4511 = vadd.f32 %v3743, %v4510
        %v4512 = vpop.f32.mrb[0].mxu0
        %v4513 = vadd.f32 %v3747, %v4512
        %v4514 = vpop.f32.mrb[0].mxu0
        %v4515 = vadd.f32 %v3743, %v4514
        %v4516 = vpop.f32.mrb[0].mxu0
        %v4517 = vadd.f32 %v3747, %v4516
        %4518 = vmatprep.mubr.bf16.mxu0 %v3565
        %4519 = vmatmul.mubr.bf16.gmra.mrb[0].mxu0 %v3564
        %v4520 = vpop.f32.mrb[0].mxu0
        %v4521 = vadd.f32 %v3743, %v4520
        %v4522 = vpop.f32.mrb[0].mxu0
        %v4523 = vadd.f32 %v3747, %v4522
        %v4524 = vpop.f32.mrb[0].mxu0
        %v4525 = vadd.f32 %v3743, %v4524
        %v4526 = vpop.f32.mrb[0].mxu0
        %v4527 = vadd.f32 %v3747, %v4526
        %4528 = vmatprep.mubr.bf16.mxu0 %v3569
        %4529 = vmatmul.mubr.bf16.gmra.mrb[0].mxu0 %v3568
        %v4530 = vpop.f32.mrb[0].mxu0
        %v4531 = vadd.f32 %v3743, %v4530
        %v4532 = vpop.f32.mrb[0].mxu0
        %v4533 = vadd.f32 %v3747, %v4532
        %v4534 = vpop.f32.mrb[0].mxu0
        %v4535 = vadd.f32 %v3743, %v4534
        %v4536 = vpop.f32.mrb[0].mxu0
        %v4537 = vadd.f32 %v3747, %v4536
        %4538 = vmatprep.mubr.bf16.mxu0 %v3573
        %4539 = vmatmul.mubr.bf16.gmra.mrb[0].mxu0 %v3572
        %v4540 = vpop.f32.mrb[0].mxu0
        %v4541 = vadd.f32 %v3743, %v4540
        %v4542 = vpop.f32.mrb[0].mxu0
        %v4543 = vadd.f32 %v3747, %v4542
        %v4544 = vpop.f32.mrb[0].mxu0
        %v4545 = vadd.f32 %v3743, %v4544
        %v4546 = vpop.f32.mrb[0].mxu0
        %v4547 = vadd.f32 %v3747, %v4546
        %4548 = vmatprep.mubr.bf16.mxu0 %v3577
        %4549 = vmatmul.mubr.bf16.gmra.mrb[0].mxu0 %v3576
        %v4550 = vpop.f32.mrb[0].mxu0
        %v4551 = vadd.f32 %v3743, %v4550
        %v4552 = vpop.f32.mrb[0].mxu0
        %v4553 = vadd.f32 %v3747, %v4552
        %v4554 = vpop.f32.mrb[0].mxu0
        %v4555 = vadd.f32 %v3743, %v4554
        %v4556 = vpop.f32.mrb[0].mxu0
        %v4557 = vadd.f32 %v3747, %v4556
        %4558 = vmatprep.mubr.bf16.mxu0 %v3581
        %4559 = vmatmul.mubr.bf16.gmra.mrb[0].mxu0 %v3580
        %v4560 = vpop.f32.mrb[0].mxu0
        %v4561 = vadd.f32 %v3743, %v4560
        %v4562 = vpop.f32.mrb[0].mxu0
        %v4563 = vadd.f32 %v3747, %v4562
        %v4564 = vpop.f32.mrb[0].mxu0
        %v4565 = vadd.f32 %v3743, %v4564
        %v4566 = vpop.f32.mrb[0].mxu0
        %v4567 = vadd.f32 %v3747, %v4566
        %4568 = vmatprep.mubr.bf16.mxu0 %v3585
        %4569 = vmatmul.mubr.bf16.gmra.mrb[0].mxu0 %v3584
        %v4570 = vpop.f32.mrb[0].mxu0
        %v4571 = vadd.f32 %v3743, %v4570
        %v4572 = vpop.f32.mrb[0].mxu0
        %v4573 = vadd.f32 %v3747, %v4572
        %v4574 = vpop.f32.mrb[0].mxu0
        %v4575 = vadd.f32 %v3743, %v4574
        %v4576 = vpop.f32.mrb[0].mxu0
        %v4577 = vadd.f32 %v3747, %v4576
        %4578 = vmatprep.mubr.bf16.mxu0 %v3589
        %4579 = vmatmul.mubr.bf16.gmra.mrb[0].mxu0 %v3588
        %v4580 = vpop.f32.mrb[0].mxu0
        %v4581 = vadd.f32 %v3743, %v4580
        %v4582 = vpop.f32.mrb[0].mxu0
        %v4583 = vadd.f32 %v3747, %v4582
        %v4584 = vpop.f32.mrb[0].mxu0
        %v4585 = vadd.f32 %v3743, %v4584
        %v4586 = vpop.f32.mrb[0].mxu0
        %v4587 = vadd.f32 %v3747, %v4586
        %4588 = vdwg.mxu0
        %4589 = vmatprep.subr.bf16.mxu0 %v4205
        %4590 = vmatpush1.bf16.msra.mxu0 %v4204
        %4591 = vmatprep.subr.bf16.mxu0 %v4209
        %4592 = vmatpush1.bf16.msra.mxu0 %v4208
        %4593 = vmatprep.subr.bf16.mxu0 %v4213
        %4594 = vmatpush1.bf16.msra.mxu0 %v4212
        %4595 = vmatprep.subr.bf16.mxu0 %v4217
        %4596 = vmatpush1.bf16.msra.mxu0 %v4216
        %4597 = vmatprep.subr.bf16.mxu0 %v4221
        %4598 = vmatpush1.bf16.msra.mxu0 %v4220
        %4599 = vmatprep.subr.bf16.mxu0 %v4225
        %4600 = vmatpush1.bf16.msra.mxu0 %v4224
        %4601 = vmatprep.subr.bf16.mxu0 %v4229
        %4602 = vmatpush1.bf16.msra.mxu0 %v4228
        %4603 = vmatprep.subr.bf16.mxu0 %v4233
        %4604 = vmatpush1.bf16.msra.mxu0 %v4232
        %4605 = vmatprep.subr.bf16.mxu0 %v4237
        %4606 = vmatpush1.bf16.msra.mxu0 %v4236
        %4607 = vmatprep.subr.bf16.mxu0 %v4241
        %4608 = vmatpush1.bf16.msra.mxu0 %v4240
        %4609 = vmatprep.subr.bf16.mxu0 %v4245
        %4610 = vmatpush1.bf16.msra.mxu0 %v4244
        %4611 = vmatprep.subr.bf16.mxu0 %v4249
        %4612 = vmatpush1.bf16.msra.mxu0 %v4248
        %4613 = vmatprep.subr.bf16.mxu0 %v4253
        %4614 = vmatpush1.bf16.msra.mxu0 %v4252
        %4615 = vmatprep.subr.bf16.mxu0 %v4257
        %4616 = vmatpush1.bf16.msra.mxu0 %v4256
        %4617 = vmatprep.subr.bf16.mxu0 %v4261
        %4618 = vmatpush1.bf16.msra.mxu0 %v4260
        %4619 = vmatprep.subr.bf16.mxu0 %v4265
        %4620 = vmatpush1.bf16.msra.mxu0 %v4264
        %4621 = vmatprep.mubr.bf16.mxu0 %v3531
        %4622 = vmatmul.mubr.bf16.gmra.mrb[0].mxu0 %v3530
        %v4623 = vpop.f32.mrb[0].mxu0
        %v4624 = vadd.f32 %v4431, %v4623
        %v4625 = vpop.f32.mrb[0].mxu0
        %v4626 = vadd.f32 %v4433, %v4625
        %v4627 = vpop.f32.mrb[0].mxu0
        %v4628 = vadd.f32 %v4435, %v4627
        %v4629 = vpop.f32.mrb[0].mxu0
        %v4630 = vadd.f32 %v4437, %v4629
        %4631 = vmatprep.mubr.bf16.mxu0 %v3535
        %4632 = vmatmul.mubr.bf16.gmra.mrb[0].mxu0 %v3534
        %v4633 = vpop.f32.mrb[0].mxu0
        %v4634 = vadd.f32 %v4441, %v4633
        %v4635 = vpop.f32.mrb[0].mxu0
        %v4636 = vadd.f32 %v4443, %v4635
        %v4637 = vpop.f32.mrb[0].mxu0
        %v4638 = vadd.f32 %v4445, %v4637
        %v4639 = vpop.f32.mrb[0].mxu0
        %v4640 = vadd.f32 %v4447, %v4639
        %4641 = vmatprep.mubr.bf16.mxu0 %v3539
        %4642 = vmatmul.mubr.bf16.gmra.mrb[0].mxu0 %v3538
        %v4643 = vpop.f32.mrb[0].mxu0
        %v4644 = vadd.f32 %v4451, %v4643
        %v4645 = vpop.f32.mrb[0].mxu0
        %v4646 = vadd.f32 %v4453, %v4645
        %v4647 = vpop.f32.mrb[0].mxu0
        %v4648 = vadd.f32 %v4455, %v4647
        %v4649 = vpop.f32.mrb[0].mxu0
        %v4650 = vadd.f32 %v4457, %v4649
        %4651 = vmatprep.mubr.bf16.mxu0 %v3543
        %4652 = vmatmul.mubr.bf16.gmra.mrb[0].mxu0 %v3542
        %v4653 = vpop.f32.mrb[0].mxu0
        %v4654 = vadd.f32 %v4461, %v4653
        %v4655 = vpop.f32.mrb[0].mxu0
        %v4656 = vadd.f32 %v4463, %v4655
        %v4657 = vpop.f32.mrb[0].mxu0
        %v4658 = vadd.f32 %v4465, %v4657
        %v4659 = vpop.f32.mrb[0].mxu0
        %v4660 = vadd.f32 %v4467, %v4659
        %4661 = vmatprep.mubr.bf16.mxu0 %v3547
        %4662 = vmatmul.mubr.bf16.gmra.mrb[0].mxu0 %v3546
        %v4663 = vpop.f32.mrb[0].mxu0
        %v4664 = vadd.f32 %v4471, %v4663
        %v4665 = vpop.f32.mrb[0].mxu0
        %v4666 = vadd.f32 %v4473, %v4665
        %v4667 = vpop.f32.mrb[0].mxu0
        %v4668 = vadd.f32 %v4475, %v4667
        %v4669 = vpop.f32.mrb[0].mxu0
        %v4670 = vadd.f32 %v4477, %v4669
        %4671 = vmatprep.mubr.bf16.mxu0 %v3551
        %4672 = vmatmul.mubr.bf16.gmra.mrb[0].mxu0 %v3550
        %v4673 = vpop.f32.mrb[0].mxu0
        %v4674 = vadd.f32 %v4481, %v4673
        %v4675 = vpop.f32.mrb[0].mxu0
        %v4676 = vadd.f32 %v4483, %v4675
        %v4677 = vpop.f32.mrb[0].mxu0
        %v4678 = vadd.f32 %v4485, %v4677
        %v4679 = vpop.f32.mrb[0].mxu0
        %v4680 = vadd.f32 %v4487, %v4679
        %4681 = vmatprep.mubr.bf16.mxu0 %v3555
        %4682 = vmatmul.mubr.bf16.gmra.mrb[0].mxu0 %v3554
        %v4683 = vpop.f32.mrb[0].mxu0
        %v4684 = vadd.f32 %v4491, %v4683
        %v4685 = vpop.f32.mrb[0].mxu0
        %v4686 = vadd.f32 %v4493, %v4685
        %v4687 = vpop.f32.mrb[0].mxu0
        %v4688 = vadd.f32 %v4495, %v4687
        %v4689 = vpop.f32.mrb[0].mxu0
        %v4690 = vadd.f32 %v4497, %v4689
        %4691 = vmatprep.mubr.bf16.mxu0 %v3559
        %4692 = vmatmul.mubr.bf16.gmra.mrb[0].mxu0 %v3558
        %v4693 = vpop.f32.mrb[0].mxu0
        %v4694 = vadd.f32 %v4501, %v4693
        %v4695 = vpop.f32.mrb[0].mxu0
        %v4696 = vadd.f32 %v4503, %v4695
        %v4697 = vpop.f32.mrb[0].mxu0
        %v4698 = vadd.f32 %v4505, %v4697
        %v4699 = vpop.f32.mrb[0].mxu0
        %v4700 = vadd.f32 %v4507, %v4699
        %4701 = vmatprep.mubr.bf16.mxu0 %v3563
        %4702 = vmatmul.mubr.bf16.gmra.mrb[0].mxu0 %v3562
        %v4703 = vpop.f32.mrb[0].mxu0
        %v4704 = vadd.f32 %v4511, %v4703
        %v4705 = vpop.f32.mrb[0].mxu0
        %v4706 = vadd.f32 %v4513, %v4705
        %v4707 = vpop.f32.mrb[0].mxu0
        %v4708 = vadd.f32 %v4515, %v4707
        %v4709 = vpop.f32.mrb[0].mxu0
        %v4710 = vadd.f32 %v4517, %v4709
        %4711 = vmatprep.mubr.bf16.mxu0 %v3567
        %4712 = vmatmul.mubr.bf16.gmra.mrb[0].mxu0 %v3566
        %v4713 = vpop.f32.mrb[0].mxu0
        %v4714 = vadd.f32 %v4521, %v4713
        %v4715 = vpop.f32.mrb[0].mxu0
        %v4716 = vadd.f32 %v4523, %v4715
        %v4717 = vpop.f32.mrb[0].mxu0
        %v4718 = vadd.f32 %v4525, %v4717
        %v4719 = vpop.f32.mrb[0].mxu0
        %v4720 = vadd.f32 %v4527, %v4719
        %4721 = vmatprep.mubr.bf16.mxu0 %v3571
        %4722 = vmatmul.mubr.bf16.gmra.mrb[0].mxu0 %v3570
        %v4723 = vpop.f32.mrb[0].mxu0
        %v4724 = vadd.f32 %v4531, %v4723
        %v4725 = vpop.f32.mrb[0].mxu0
        %v4726 = vadd.f32 %v4533, %v4725
        %v4727 = vpop.f32.mrb[0].mxu0
        %v4728 = vadd.f32 %v4535, %v4727
        %v4729 = vpop.f32.mrb[0].mxu0
        %v4730 = vadd.f32 %v4537, %v4729
        %4731 = vmatprep.mubr.bf16.mxu0 %v3575
        %4732 = vmatmul.mubr.bf16.gmra.mrb[0].mxu0 %v3574
        %v4733 = vpop.f32.mrb[0].mxu0
        %v4734 = vadd.f32 %v4541, %v4733
        %v4735 = vpop.f32.mrb[0].mxu0
        %v4736 = vadd.f32 %v4543, %v4735
        %v4737 = vpop.f32.mrb[0].mxu0
        %v4738 = vadd.f32 %v4545, %v4737
        %v4739 = vpop.f32.mrb[0].mxu0
        %v4740 = vadd.f32 %v4547, %v4739
        %4741 = vmatprep.mubr.bf16.mxu0 %v3579
        %4742 = vmatmul.mubr.bf16.gmra.mrb[0].mxu0 %v3578
        %v4743 = vpop.f32.mrb[0].mxu0
        %v4744 = vadd.f32 %v4551, %v4743
        %v4745 = vpop.f32.mrb[0].mxu0
        %v4746 = vadd.f32 %v4553, %v4745
        %v4747 = vpop.f32.mrb[0].mxu0
        %v4748 = vadd.f32 %v4555, %v4747
        %v4749 = vpop.f32.mrb[0].mxu0
        %v4750 = vadd.f32 %v4557, %v4749
        %4751 = vmatprep.mubr.bf16.mxu0 %v3583
        %4752 = vmatmul.mubr.bf16.gmra.mrb[0].mxu0 %v3582
        %v4753 = vpop.f32.mrb[0].mxu0
        %v4754 = vadd.f32 %v4561, %v4753
        %v4755 = vpop.f32.mrb[0].mxu0
        %v4756 = vadd.f32 %v4563, %v4755
        %v4757 = vpop.f32.mrb[0].mxu0
        %v4758 = vadd.f32 %v4565, %v4757
        %v4759 = vpop.f32.mrb[0].mxu0
        %v4760 = vadd.f32 %v4567, %v4759
        %4761 = vmatprep.mubr.bf16.mxu0 %v3587
        %4762 = vmatmul.mubr.bf16.gmra.mrb[0].mxu0 %v3586
        %v4763 = vpop.f32.mrb[0].mxu0
        %v4764 = vadd.f32 %v4571, %v4763
        %v4765 = vpop.f32.mrb[0].mxu0
        %v4766 = vadd.f32 %v4573, %v4765
        %v4767 = vpop.f32.mrb[0].mxu0
        %v4768 = vadd.f32 %v4575, %v4767
        %v4769 = vpop.f32.mrb[0].mxu0
        %v4770 = vadd.f32 %v4577, %v4769
        %4771 = vmatprep.mubr.bf16.mxu0 %v3591
        %4772 = vmatmul.mubr.bf16.gmra.mrb[0].mxu0 %v3590
        %v4773 = vpop.f32.mrb[0].mxu0
        %v4774 = vadd.f32 %v4581, %v4773
        %v4775 = vpop.f32.mrb[0].mxu0
        %v4776 = vadd.f32 %v4583, %v4775
        %v4777 = vpop.f32.mrb[0].mxu0
        %v4778 = vadd.f32 %v4585, %v4777
        %v4779 = vpop.f32.mrb[0].mxu0
        %v4780 = vadd.f32 %v4587, %v4779
        %4781 = vdwg.mxu0
        %4782 = vmatprep.subr.bf16.mxu0 %v4143
        %4783 = vmatpush1.bf16.msra.mxu0 %v4142
        %4784 = vmatprep.subr.bf16.mxu0 %v4147
        %4785 = vmatpush1.bf16.msra.mxu0 %v4146
        %4786 = vmatprep.subr.bf16.mxu0 %v4151
        %4787 = vmatpush1.bf16.msra.mxu0 %v4150
        %4788 = vmatprep.subr.bf16.mxu0 %v4155
        %4789 = vmatpush1.bf16.msra.mxu0 %v4154
        %4790 = vmatprep.subr.bf16.mxu0 %v4159
        %4791 = vmatpush1.bf16.msra.mxu0 %v4158
        %4792 = vmatprep.subr.bf16.mxu0 %v4163
        %4793 = vmatpush1.bf16.msra.mxu0 %v4162
        %4794 = vmatprep.subr.bf16.mxu0 %v4167
        %4795 = vmatpush1.bf16.msra.mxu0 %v4166
        %4796 = vmatprep.subr.bf16.mxu0 %v4171
        %4797 = vmatpush1.bf16.msra.mxu0 %v4170
        %4798 = vmatprep.subr.bf16.mxu0 %v4175
        %4799 = vmatpush1.bf16.msra.mxu0 %v4174
        %4800 = vmatprep.subr.bf16.mxu0 %v4179
        %4801 = vmatpush1.bf16.msra.mxu0 %v4178
        %4802 = vmatprep.subr.bf16.mxu0 %v4183
        %4803 = vmatpush1.bf16.msra.mxu0 %v4182
        %4804 = vmatprep.subr.bf16.mxu0 %v4187
        %4805 = vmatpush1.bf16.msra.mxu0 %v4186
        %4806 = vmatprep.subr.bf16.mxu0 %v4191
        %4807 = vmatpush1.bf16.msra.mxu0 %v4190
        %4808 = vmatprep.subr.bf16.mxu0 %v4195
        %4809 = vmatpush1.bf16.msra.mxu0 %v4194
        %4810 = vmatprep.subr.bf16.mxu0 %v4199
        %4811 = vmatpush1.bf16.msra.mxu0 %v4198
        %4812 = vmatprep.subr.bf16.mxu0 %v4203
        %4813 = vmatpush1.bf16.msra.mxu0 %v4202
        %4814 = vmatprep.mubr.bf16.mxu0 %v3529
        %4815 = vmatmul.mubr.bf16.gmra.mrb[0].mxu0 %v3528
        %v4816 = vpop.f32.mrb[0].mxu0
        %v4817 = vadd.f32 %v3751, %v4816
        %v4818 = vpop.f32.mrb[0].mxu0
        %v4819 = vadd.f32 %v3755, %v4818
        %v4820 = vpop.f32.mrb[0].mxu0
        %v4821 = vadd.f32 %v3751, %v4820
        %v4822 = vpop.f32.mrb[0].mxu0
        %v4823 = vadd.f32 %v3755, %v4822
        %4824 = vmatprep.mubr.bf16.mxu0 %v3533
        %4825 = vmatmul.mubr.bf16.gmra.mrb[0].mxu0 %v3532
        %v4826 = vpop.f32.mrb[0].mxu0
        %v4827 = vadd.f32 %v3751, %v4826
        %v4828 = vpop.f32.mrb[0].mxu0
        %v4829 = vadd.f32 %v3755, %v4828
        %v4830 = vpop.f32.mrb[0].mxu0
        %v4831 = vadd.f32 %v3751, %v4830
        %v4832 = vpop.f32.mrb[0].mxu0
        %v4833 = vadd.f32 %v3755, %v4832
        %4834 = vmatprep.mubr.bf16.mxu0 %v3537
        %4835 = vmatmul.mubr.bf16.gmra.mrb[0].mxu0 %v3536
        %v4836 = vpop.f32.mrb[0].mxu0
        %v4837 = vadd.f32 %v3751, %v4836
        %v4838 = vpop.f32.mrb[0].mxu0
        %v4839 = vadd.f32 %v3755, %v4838
        %v4840 = vpop.f32.mrb[0].mxu0
        %v4841 = vadd.f32 %v3751, %v4840
        %v4842 = vpop.f32.mrb[0].mxu0
        %v4843 = vadd.f32 %v3755, %v4842
        %4844 = vmatprep.mubr.bf16.mxu0 %v3541
        %4845 = vmatmul.mubr.bf16.gmra.mrb[0].mxu0 %v3540
        %v4846 = vpop.f32.mrb[0].mxu0
        %v4847 = vadd.f32 %v3751, %v4846
        %v4848 = vpop.f32.mrb[0].mxu0
        %v4849 = vadd.f32 %v3755, %v4848
        %v4850 = vpop.f32.mrb[0].mxu0
        %v4851 = vadd.f32 %v3751, %v4850
        %v4852 = vpop.f32.mrb[0].mxu0
        %v4853 = vadd.f32 %v3755, %v4852
        %4854 = vmatprep.mubr.bf16.mxu0 %v3545
        %4855 = vmatmul.mubr.bf16.gmra.mrb[0].mxu0 %v3544
        %v4856 = vpop.f32.mrb[0].mxu0
        %v4857 = vadd.f32 %v3751, %v4856
        %v4858 = vpop.f32.mrb[0].mxu0
        %v4859 = vadd.f32 %v3755, %v4858
        %v4860 = vpop.f32.mrb[0].mxu0
        %v4861 = vadd.f32 %v3751, %v4860
        %v4862 = vpop.f32.mrb[0].mxu0
        %v4863 = vadd.f32 %v3755, %v4862
        %4864 = vmatprep.mubr.bf16.mxu0 %v3549
        %4865 = vmatmul.mubr.bf16.gmra.mrb[0].mxu0 %v3548
        %v4866 = vpop.f32.mrb[0].mxu0
        %v4867 = vadd.f32 %v3751, %v4866
        %v4868 = vpop.f32.mrb[0].mxu0
        %v4869 = vadd.f32 %v3755, %v4868
        %v4870 = vpop.f32.mrb[0].mxu0
        %v4871 = vadd.f32 %v3751, %v4870
        %v4872 = vpop.f32.mrb[0].mxu0
        %v4873 = vadd.f32 %v3755, %v4872
        %4874 = vmatprep.mubr.bf16.mxu0 %v3553
        %4875 = vmatmul.mubr.bf16.gmra.mrb[0].mxu0 %v3552
        %v4876 = vpop.f32.mrb[0].mxu0
        %v4877 = vadd.f32 %v3751, %v4876
        %v4878 = vpop.f32.mrb[0].mxu0
        %v4879 = vadd.f32 %v3755, %v4878
        %v4880 = vpop.f32.mrb[0].mxu0
        %v4881 = vadd.f32 %v3751, %v4880
        %v4882 = vpop.f32.mrb[0].mxu0
        %v4883 = vadd.f32 %v3755, %v4882
        %4884 = vmatprep.mubr.bf16.mxu0 %v3557
        %4885 = vmatmul.mubr.bf16.gmra.mrb[0].mxu0 %v3556
        %v4886 = vpop.f32.mrb[0].mxu0
        %v4887 = vadd.f32 %v3751, %v4886
        %v4888 = vpop.f32.mrb[0].mxu0
        %v4889 = vadd.f32 %v3755, %v4888
        %v4890 = vpop.f32.mrb[0].mxu0
        %v4891 = vadd.f32 %v3751, %v4890
        %v4892 = vpop.f32.mrb[0].mxu0
        %v4893 = vadd.f32 %v3755, %v4892
        %4894 = vmatprep.mubr.bf16.mxu0 %v3561
        %4895 = vmatmul.mubr.bf16.gmra.mrb[0].mxu0 %v3560
        %v4896 = vpop.f32.mrb[0].mxu0
        %v4897 = vadd.f32 %v3751, %v4896
        %v4898 = vpop.f32.mrb[0].mxu0
        %v4899 = vadd.f32 %v3755, %v4898
        %v4900 = vpop.f32.mrb[0].mxu0
        %v4901 = vadd.f32 %v3751, %v4900
        %v4902 = vpop.f32.mrb[0].mxu0
        %v4903 = vadd.f32 %v3755, %v4902
        %4904 = vmatprep.mubr.bf16.mxu0 %v3565
        %4905 = vmatmul.mubr.bf16.gmra.mrb[0].mxu0 %v3564
        %v4906 = vpop.f32.mrb[0].mxu0
        %v4907 = vadd.f32 %v3751, %v4906
        %v4908 = vpop.f32.mrb[0].mxu0
        %v4909 = vadd.f32 %v3755, %v4908
        %v4910 = vpop.f32.mrb[0].mxu0
        %v4911 = vadd.f32 %v3751, %v4910
        %v4912 = vpop.f32.mrb[0].mxu0
        %v4913 = vadd.f32 %v3755, %v4912
        %4914 = vmatprep.mubr.bf16.mxu0 %v3569
        %4915 = vmatmul.mubr.bf16.gmra.mrb[0].mxu0 %v3568
        %v4916 = vpop.f32.mrb[0].mxu0
        %v4917 = vadd.f32 %v3751, %v4916
        %v4918 = vpop.f32.mrb[0].mxu0
        %v4919 = vadd.f32 %v3755, %v4918
        %v4920 = vpop.f32.mrb[0].mxu0
        %v4921 = vadd.f32 %v3751, %v4920
        %v4922 = vpop.f32.mrb[0].mxu0
        %v4923 = vadd.f32 %v3755, %v4922
        %4924 = vmatprep.mubr.bf16.mxu0 %v3573
        %4925 = vmatmul.mubr.bf16.gmra.mrb[0].mxu0 %v3572
        %v4926 = vpop.f32.mrb[0].mxu0
        %v4927 = vadd.f32 %v3751, %v4926
        %v4928 = vpop.f32.mrb[0].mxu0
        %v4929 = vadd.f32 %v3755, %v4928
        %v4930 = vpop.f32.mrb[0].mxu0
        %v4931 = vadd.f32 %v3751, %v4930
        %v4932 = vpop.f32.mrb[0].mxu0
        %v4933 = vadd.f32 %v3755, %v4932
        %4934 = vmatprep.mubr.bf16.mxu0 %v3577
        %4935 = vmatmul.mubr.bf16.gmra.mrb[0].mxu0 %v3576
        %v4936 = vpop.f32.mrb[0].mxu0
        %v4937 = vadd.f32 %v3751, %v4936
        %v4938 = vpop.f32.mrb[0].mxu0
        %v4939 = vadd.f32 %v3755, %v4938
        %v4940 = vpop.f32.mrb[0].mxu0
        %v4941 = vadd.f32 %v3751, %v4940
        %v4942 = vpop.f32.mrb[0].mxu0
        %v4943 = vadd.f32 %v3755, %v4942
        %4944 = vmatprep.mubr.bf16.mxu0 %v3581
        %4945 = vmatmul.mubr.bf16.gmra.mrb[0].mxu0 %v3580
        %v4946 = vpop.f32.mrb[0].mxu0
        %v4947 = vadd.f32 %v3751, %v4946
        %v4948 = vpop.f32.mrb[0].mxu0
        %v4949 = vadd.f32 %v3755, %v4948
        %v4950 = vpop.f32.mrb[0].mxu0
        %v4951 = vadd.f32 %v3751, %v4950
        %v4952 = vpop.f32.mrb[0].mxu0
        %v4953 = vadd.f32 %v3755, %v4952
        %4954 = vmatprep.mubr.bf16.mxu0 %v3585
        %4955 = vmatmul.mubr.bf16.gmra.mrb[0].mxu0 %v3584
        %v4956 = vpop.f32.mrb[0].mxu0
        %v4957 = vadd.f32 %v3751, %v4956
        %v4958 = vpop.f32.mrb[0].mxu0
        %v4959 = vadd.f32 %v3755, %v4958
        %v4960 = vpop.f32.mrb[0].mxu0
        %v4961 = vadd.f32 %v3751, %v4960
        %v4962 = vpop.f32.mrb[0].mxu0
        %v4963 = vadd.f32 %v3755, %v4962
        %4964 = vmatprep.mubr.bf16.mxu0 %v3589
        %4965 = vmatmul.mubr.bf16.gmra.mrb[0].mxu0 %v3588
        %v4966 = vpop.f32.mrb[0].mxu0
        %v4967 = vadd.f32 %v3751, %v4966
        %v4968 = vpop.f32.mrb[0].mxu0
        %v4969 = vadd.f32 %v3755, %v4968
        %v4970 = vpop.f32.mrb[0].mxu0
        %v4971 = vadd.f32 %v3751, %v4970
        %v4972 = vpop.f32.mrb[0].mxu0
        %v4973 = vadd.f32 %v3755, %v4972
        %4974 = vdwg.mxu0
        %4975 = vmatprep.subr.bf16.mxu0 %v4207
        %4976 = vmatpush1.bf16.msra.mxu0 %v4206
        %4977 = vmatprep.subr.bf16.mxu0 %v4211
        %4978 = vmatpush1.bf16.msra.mxu0 %v4210
        %4979 = vmatprep.subr.bf16.mxu0 %v4215
        %4980 = vmatpush1.bf16.msra.mxu0 %v4214
        %4981 = vmatprep.subr.bf16.mxu0 %v4219
        %4982 = vmatpush1.bf16.msra.mxu0 %v4218
        %4983 = vmatprep.subr.bf16.mxu0 %v4223
        %4984 = vmatpush1.bf16.msra.mxu0 %v4222
        %4985 = vmatprep.subr.bf16.mxu0 %v4227
        %4986 = vmatpush1.bf16.msra.mxu0 %v4226
        %4987 = vmatprep.subr.bf16.mxu0 %v4231
        %4988 = vmatpush1.bf16.msra.mxu0 %v4230
        %4989 = vmatprep.subr.bf16.mxu0 %v4235
        %4990 = vmatpush1.bf16.msra.mxu0 %v4234
        %4991 = vmatprep.subr.bf16.mxu0 %v4239
        %4992 = vmatpush1.bf16.msra.mxu0 %v4238
        %4993 = vmatprep.subr.bf16.mxu0 %v4243
        %4994 = vmatpush1.bf16.msra.mxu0 %v4242
        %4995 = vmatprep.subr.bf16.mxu0 %v4247
        %4996 = vmatpush1.bf16.msra.mxu0 %v4246
        %4997 = vmatprep.subr.bf16.mxu0 %v4251
        %4998 = vmatpush1.bf16.msra.mxu0 %v4250
        %4999 = vmatprep.subr.bf16.mxu0 %v4255
        %5000 = vmatpush1.bf16.msra.mxu0 %v4254
        %5001 = vmatprep.subr.bf16.mxu0 %v4259
        %5002 = vmatpush1.bf16.msra.mxu0 %v4258
        %5003 = vmatprep.subr.bf16.mxu0 %v4263
        %5004 = vmatpush1.bf16.msra.mxu0 %v4262
        %5005 = vmatprep.subr.bf16.mxu0 %v4267
        %5006 = vmatpush1.bf16.msra.mxu0 %v4266
        %5007 = vmatprep.mubr.bf16.mxu0 %v3531
        %5008 = vmatmul.mubr.bf16.gmra.mrb[0].mxu0 %v3530
        %v5009 = vpop.f32.mrb[0].mxu0
        %v5010 = vadd.f32 %v4817, %v5009
        %v5011 = vpop.f32.mrb[0].mxu0
        %v5012 = vadd.f32 %v4819, %v5011
        %v5013 = vpop.f32.mrb[0].mxu0
        %v5014 = vadd.f32 %v4821, %v5013
        %v5015 = vpop.f32.mrb[0].mxu0
        %v5016 = vadd.f32 %v4823, %v5015
        %5017 = vmatprep.mubr.bf16.mxu0 %v3535
        %5018 = vmatmul.mubr.bf16.gmra.mrb[0].mxu0 %v3534
        %v5019 = vpop.f32.mrb[0].mxu0
        %v5020 = vadd.f32 %v4827, %v5019
        %v5021 = vpop.f32.mrb[0].mxu0
        %v5022 = vadd.f32 %v4829, %v5021
        %v5023 = vpop.f32.mrb[0].mxu0
        %v5024 = vadd.f32 %v4831, %v5023
        %v5025 = vpop.f32.mrb[0].mxu0
        %v5026 = vadd.f32 %v4833, %v5025
        %5027 = vmatprep.mubr.bf16.mxu0 %v3539
        %5028 = vmatmul.mubr.bf16.gmra.mrb[0].mxu0 %v3538
        %v5029 = vpop.f32.mrb[0].mxu0
        %v5030 = vadd.f32 %v4837, %v5029
        %v5031 = vpop.f32.mrb[0].mxu0
        %v5032 = vadd.f32 %v4839, %v5031
        %v5033 = vpop.f32.mrb[0].mxu0
        %v5034 = vadd.f32 %v4841, %v5033
        %v5035 = vpop.f32.mrb[0].mxu0
        %v5036 = vadd.f32 %v4843, %v5035
        %5037 = vmatprep.mubr.bf16.mxu0 %v3543
        %5038 = vmatmul.mubr.bf16.gmra.mrb[0].mxu0 %v3542
        %v5039 = vpop.f32.mrb[0].mxu0
        %v5040 = vadd.f32 %v4847, %v5039
        %v5041 = vpop.f32.mrb[0].mxu0
        %v5042 = vadd.f32 %v4849, %v5041
        %v5043 = vpop.f32.mrb[0].mxu0
        %v5044 = vadd.f32 %v4851, %v5043
        %v5045 = vpop.f32.mrb[0].mxu0
        %v5046 = vadd.f32 %v4853, %v5045
        %5047 = vmatprep.mubr.bf16.mxu0 %v3547
        %5048 = vmatmul.mubr.bf16.gmra.mrb[0].mxu0 %v3546
        %v5049 = vpop.f32.mrb[0].mxu0
        %v5050 = vadd.f32 %v4857, %v5049
        %v5051 = vpop.f32.mrb[0].mxu0
        %v5052 = vadd.f32 %v4859, %v5051
        %v5053 = vpop.f32.mrb[0].mxu0
        %v5054 = vadd.f32 %v4861, %v5053
        %v5055 = vpop.f32.mrb[0].mxu0
        %v5056 = vadd.f32 %v4863, %v5055
        %5057 = vmatprep.mubr.bf16.mxu0 %v3551
        %5058 = vmatmul.mubr.bf16.gmra.mrb[0].mxu0 %v3550
        %v5059 = vpop.f32.mrb[0].mxu0
        %v5060 = vadd.f32 %v4867, %v5059
        %v5061 = vpop.f32.mrb[0].mxu0
        %v5062 = vadd.f32 %v4869, %v5061
        %v5063 = vpop.f32.mrb[0].mxu0
        %v5064 = vadd.f32 %v4871, %v5063
        %v5065 = vpop.f32.mrb[0].mxu0
        %v5066 = vadd.f32 %v4873, %v5065
        %5067 = vmatprep.mubr.bf16.mxu0 %v3555
        %5068 = vmatmul.mubr.bf16.gmra.mrb[0].mxu0 %v3554
        %v5069 = vpop.f32.mrb[0].mxu0
        %v5070 = vadd.f32 %v4877, %v5069
        %v5071 = vpop.f32.mrb[0].mxu0
        %v5072 = vadd.f32 %v4879, %v5071
        %v5073 = vpop.f32.mrb[0].mxu0
        %v5074 = vadd.f32 %v4881, %v5073
        %v5075 = vpop.f32.mrb[0].mxu0
        %v5076 = vadd.f32 %v4883, %v5075
        %5077 = vmatprep.mubr.bf16.mxu0 %v3559
        %5078 = vmatmul.mubr.bf16.gmra.mrb[0].mxu0 %v3558
        %v5079 = vpop.f32.mrb[0].mxu0
        %v5080 = vadd.f32 %v4887, %v5079
        %v5081 = vpop.f32.mrb[0].mxu0
        %v5082 = vadd.f32 %v4889, %v5081
        %v5083 = vpop.f32.mrb[0].mxu0
        %v5084 = vadd.f32 %v4891, %v5083
        %v5085 = vpop.f32.mrb[0].mxu0
        %v5086 = vadd.f32 %v4893, %v5085
        %5087 = vmatprep.mubr.bf16.mxu0 %v3563
        %5088 = vmatmul.mubr.bf16.gmra.mrb[0].mxu0 %v3562
        %v5089 = vpop.f32.mrb[0].mxu0
        %v5090 = vadd.f32 %v4897, %v5089
        %v5091 = vpop.f32.mrb[0].mxu0
        %v5092 = vadd.f32 %v4899, %v5091
        %v5093 = vpop.f32.mrb[0].mxu0
        %v5094 = vadd.f32 %v4901, %v5093
        %v5095 = vpop.f32.mrb[0].mxu0
        %v5096 = vadd.f32 %v4903, %v5095
        %5097 = vmatprep.mubr.bf16.mxu0 %v3567
        %5098 = vmatmul.mubr.bf16.gmra.mrb[0].mxu0 %v3566
        %v5099 = vpop.f32.mrb[0].mxu0
        %v5100 = vadd.f32 %v4907, %v5099
        %v5101 = vpop.f32.mrb[0].mxu0
        %v5102 = vadd.f32 %v4909, %v5101
        %v5103 = vpop.f32.mrb[0].mxu0
        %v5104 = vadd.f32 %v4911, %v5103
        %v5105 = vpop.f32.mrb[0].mxu0
        %v5106 = vadd.f32 %v4913, %v5105
        %5107 = vmatprep.mubr.bf16.mxu0 %v3571
        %5108 = vmatmul.mubr.bf16.gmra.mrb[0].mxu0 %v3570
        %v5109 = vpop.f32.mrb[0].mxu0
        %v5110 = vadd.f32 %v4917, %v5109
        %v5111 = vpop.f32.mrb[0].mxu0
        %v5112 = vadd.f32 %v4919, %v5111
        %v5113 = vpop.f32.mrb[0].mxu0
        %v5114 = vadd.f32 %v4921, %v5113
        %v5115 = vpop.f32.mrb[0].mxu0
        %v5116 = vadd.f32 %v4923, %v5115
        %5117 = vmatprep.mubr.bf16.mxu0 %v3575
        %5118 = vmatmul.mubr.bf16.gmra.mrb[0].mxu0 %v3574
        %v5119 = vpop.f32.mrb[0].mxu0
        %v5120 = vadd.f32 %v4927, %v5119
        %v5121 = vpop.f32.mrb[0].mxu0
        %v5122 = vadd.f32 %v4929, %v5121
        %v5123 = vpop.f32.mrb[0].mxu0
        %v5124 = vadd.f32 %v4931, %v5123
        %v5125 = vpop.f32.mrb[0].mxu0
        %v5126 = vadd.f32 %v4933, %v5125
        %5127 = vmatprep.mubr.bf16.mxu0 %v3579
        %5128 = vmatmul.mubr.bf16.gmra.mrb[0].mxu0 %v3578
        %v5129 = vpop.f32.mrb[0].mxu0
        %v5130 = vadd.f32 %v4937, %v5129
        %v5131 = vpop.f32.mrb[0].mxu0
        %v5132 = vadd.f32 %v4939, %v5131
        %v5133 = vpop.f32.mrb[0].mxu0
        %v5134 = vadd.f32 %v4941, %v5133
        %v5135 = vpop.f32.mrb[0].mxu0
        %v5136 = vadd.f32 %v4943, %v5135
        %5137 = vmatprep.mubr.bf16.mxu0 %v3583
        %5138 = vmatmul.mubr.bf16.gmra.mrb[0].mxu0 %v3582
        %v5139 = vpop.f32.mrb[0].mxu0
        %v5140 = vadd.f32 %v4947, %v5139
        %v5141 = vpop.f32.mrb[0].mxu0
        %v5142 = vadd.f32 %v4949, %v5141
        %v5143 = vpop.f32.mrb[0].mxu0
        %v5144 = vadd.f32 %v4951, %v5143
        %v5145 = vpop.f32.mrb[0].mxu0
        %v5146 = vadd.f32 %v4953, %v5145
        %5147 = vmatprep.mubr.bf16.mxu0 %v3587
        %5148 = vmatmul.mubr.bf16.gmra.mrb[0].mxu0 %v3586
        %v5149 = vpop.f32.mrb[0].mxu0
        %v5150 = vadd.f32 %v4957, %v5149
        %v5151 = vpop.f32.mrb[0].mxu0
        %v5152 = vadd.f32 %v4959, %v5151
        %v5153 = vpop.f32.mrb[0].mxu0
        %v5154 = vadd.f32 %v4961, %v5153
        %v5155 = vpop.f32.mrb[0].mxu0
        %v5156 = vadd.f32 %v4963, %v5155
        %5157 = vmatprep.mubr.bf16.mxu0 %v3591
        %5158 = vmatmul.mubr.bf16.gmra.mrb[0].mxu0 %v3590
        %v5159 = vpop.f32.mrb[0].mxu0
        %v5160 = vadd.f32 %v4967, %v5159
        %v5161 = vpop.f32.mrb[0].mxu0
        %v5162 = vadd.f32 %v4969, %v5161
        %v5163 = vpop.f32.mrb[0].mxu0
        %v5164 = vadd.f32 %v4971, %v5163
        %v5165 = vpop.f32.mrb[0].mxu0
        %v5166 = vadd.f32 %v4973, %v5165
        %5167 = vdwg.mxu0
        %v5168 = vtanh.pop %v4624
        %v5169 = vtanh.pop %v4626
        %v5170 = vtanh.pop %v5010
        %v5171 = vtanh.pop %v5012
        %v5172 = vtanh.pop %v4628
        %v5173 = vtanh.pop %v4630
        %v5174 = vtanh.pop %v5014
        %v5175 = vtanh.pop %v5016
        %v5176 = vtanh.pop %v4634
        %v5177 = vtanh.pop %v4636
        %v5178 = vtanh.pop %v5020
        %v5179 = vtanh.pop %v5022
        %v5180 = vtanh.pop %v4638
        %v5181 = vtanh.pop %v4640
        %v5182 = vtanh.pop %v5024
        %v5183 = vtanh.pop %v5026
        %v5184 = vtanh.pop %v4644
        %v5185 = vtanh.pop %v4646
        %v5186 = vtanh.pop %v5030
        %v5187 = vtanh.pop %v5032
        %v5188 = vtanh.pop %v4648
        %v5189 = vtanh.pop %v4650
        %v5190 = vtanh.pop %v5034
        %v5191 = vtanh.pop %v5036
        %v5192 = vtanh.pop %v4654
        %v5193 = vtanh.pop %v4656
        %v5194 = vtanh.pop %v5040
        %v5195 = vtanh.pop %v5042
        %v5196 = vtanh.pop %v4658
        %v5197 = vtanh.pop %v4660
        %v5198 = vtanh.pop %v5044
        %v5199 = vtanh.pop %v5046
        %v5200 = vtanh.pop %v4664
        %v5201 = vtanh.pop %v4666
        %v5202 = vtanh.pop %v5050
        %v5203 = vtanh.pop %v5052
        %v5204 = vtanh.pop %v4668
        %v5205 = vtanh.pop %v4670
        %v5206 = vtanh.pop %v5054
        %v5207 = vtanh.pop %v5056
        %v5208 = vtanh.pop %v4674
        %v5209 = vtanh.pop %v4676
        %v5210 = vtanh.pop %v5060
        %v5211 = vtanh.pop %v5062
        %v5212 = vtanh.pop %v4678
        %v5213 = vtanh.pop %v4680
        %v5214 = vtanh.pop %v5064
        %v5215 = vtanh.pop %v5066
        %v5216 = vtanh.pop %v4684
        %v5217 = vtanh.pop %v4686
        %v5218 = vtanh.pop %v5070
        %v5219 = vtanh.pop %v5072
        %v5220 = vtanh.pop %v4688
        %v5221 = vtanh.pop %v4690
        %v5222 = vtanh.pop %v5074
        %v5223 = vtanh.pop %v5076
        %v5224 = vtanh.pop %v4694
        %v5225 = vtanh.pop %v4696
        %v5226 = vtanh.pop %v5080
        %v5227 = vtanh.pop %v5082
        %v5228 = vtanh.pop %v4698
        %v5229 = vtanh.pop %v4700
        %v5230 = vtanh.pop %v5084
        %v5231 = vtanh.pop %v5086
        %v5232 = vtanh.pop %v4704
        %v5233 = vtanh.pop %v4706
        %v5234 = vtanh.pop %v5090
        %v5235 = vtanh.pop %v5092
        %v5236 = vtanh.pop %v4708
        %v5237 = vtanh.pop %v4710
        %v5238 = vtanh.pop %v5094
        %v5239 = vtanh.pop %v5096
        %v5240 = vtanh.pop %v4714
        %v5241 = vtanh.pop %v4716
        %v5242 = vtanh.pop %v5100
        %v5243 = vtanh.pop %v5102
        %v5244 = vtanh.pop %v4718
        %v5245 = vtanh.pop %v4720
        %v5246 = vtanh.pop %v5104
        %v5247 = vtanh.pop %v5106
        %v5248 = vtanh.pop %v4724
        %v5249 = vtanh.pop %v4726
        %v5250 = vtanh.pop %v5110
        %v5251 = vtanh.pop %v5112
        %v5252 = vtanh.pop %v4728
        %v5253 = vtanh.pop %v4730
        %v5254 = vtanh.pop %v5114
        %v5255 = vtanh.pop %v5116
        %v5256 = vtanh.pop %v4734
        %v5257 = vtanh.pop %v4736
        %v5258 = vtanh.pop %v5120
        %v5259 = vtanh.pop %v5122
        %v5260 = vtanh.pop %v4738
        %v5261 = vtanh.pop %v4740
        %v5262 = vtanh.pop %v5124
        %v5263 = vtanh.pop %v5126
        %v5264 = vtanh.pop %v4744
        %v5265 = vtanh.pop %v4746
        %v5266 = vtanh.pop %v5130
        %v5267 = vtanh.pop %v5132
        %v5268 = vtanh.pop %v4748
        %v5269 = vtanh.pop %v4750
        %v5270 = vtanh.pop %v5134
        %v5271 = vtanh.pop %v5136
        %v5272 = vtanh.pop %v4754
        %v5273 = vtanh.pop %v4756
        %v5274 = vtanh.pop %v5140
        %v5275 = vtanh.pop %v5142
        %v5276 = vtanh.pop %v4758
        %v5277 = vtanh.pop %v4760
        %v5278 = vtanh.pop %v5144
        %v5279 = vtanh.pop %v5146
        %v5280 = vtanh.pop %v4764
        %v5281 = vtanh.pop %v4766
        %v5282 = vtanh.pop %v5150
        %v5283 = vtanh.pop %v5152
        %v5284 = vtanh.pop %v4768
        %v5285 = vtanh.pop %v4770
        %v5286 = vtanh.pop %v5154
        %v5287 = vtanh.pop %v5156
        %v5288 = vtanh.pop %v4774
        %v5289 = vtanh.pop %v4776
        %v5290 = vtanh.pop %v5160
        %v5291 = vtanh.pop %v5162
        %v5292 = vtanh.pop %v4778
        %v5293 = vtanh.pop %v4780
        %v5294 = vtanh.pop %v5164
        %v5295 = vtanh.pop %v5166
        %v5296 = vpack.c.bf16 %v5172, %v5168
        %v5297 = vpack.c.bf16 %v5173, %v5169
        %v5298 = vpack.c.bf16 %v5174, %v5170
        %v5299 = vpack.c.bf16 %v5175, %v5171
        %v5300 = vpack.c.bf16 %v5180, %v5176
        %v5301 = vpack.c.bf16 %v5181, %v5177
        %v5302 = vpack.c.bf16 %v5182, %v5178
        %v5303 = vpack.c.bf16 %v5183, %v5179
        %v5304 = vpack.c.bf16 %v5188, %v5184
        %v5305 = vpack.c.bf16 %v5189, %v5185
        %v5306 = vpack.c.bf16 %v5190, %v5186
        %v5307 = vpack.c.bf16 %v5191, %v5187
        %v5308 = vpack.c.bf16 %v5196, %v5192
        %v5309 = vpack.c.bf16 %v5197, %v5193
        %v5310 = vpack.c.bf16 %v5198, %v5194
        %v5311 = vpack.c.bf16 %v5199, %v5195
        %v5312 = vpack.c.bf16 %v5204, %v5200
        %v5313 = vpack.c.bf16 %v5205, %v5201
        %v5314 = vpack.c.bf16 %v5206, %v5202
        %v5315 = vpack.c.bf16 %v5207, %v5203
        %v5316 = vpack.c.bf16 %v5212, %v5208
        %v5317 = vpack.c.bf16 %v5213, %v5209
        %v5318 = vpack.c.bf16 %v5214, %v5210
        %v5319 = vpack.c.bf16 %v5215, %v5211
        %v5320 = vpack.c.bf16 %v5220, %v5216
        %v5321 = vpack.c.bf16 %v5221, %v5217
        %v5322 = vpack.c.bf16 %v5222, %v5218
        %v5323 = vpack.c.bf16 %v5223, %v5219
        %v5324 = vpack.c.bf16 %v5228, %v5224
        %v5325 = vpack.c.bf16 %v5229, %v5225
        %v5326 = vpack.c.bf16 %v5230, %v5226
        %v5327 = vpack.c.bf16 %v5231, %v5227
        %v5328 = vpack.c.bf16 %v5236, %v5232
        %v5329 = vpack.c.bf16 %v5237, %v5233
        %v5330 = vpack.c.bf16 %v5238, %v5234
        %v5331 = vpack.c.bf16 %v5239, %v5235
        %v5332 = vpack.c.bf16 %v5244, %v5240
        %v5333 = vpack.c.bf16 %v5245, %v5241
        %v5334 = vpack.c.bf16 %v5246, %v5242
        %v5335 = vpack.c.bf16 %v5247, %v5243
        %v5336 = vpack.c.bf16 %v5252, %v5248
        %v5337 = vpack.c.bf16 %v5253, %v5249
        %v5338 = vpack.c.bf16 %v5254, %v5250
        %v5339 = vpack.c.bf16 %v5255, %v5251
        %v5340 = vpack.c.bf16 %v5260, %v5256
        %v5341 = vpack.c.bf16 %v5261, %v5257
        %v5342 = vpack.c.bf16 %v5262, %v5258
        %v5343 = vpack.c.bf16 %v5263, %v5259
        %v5344 = vpack.c.bf16 %v5268, %v5264
        %v5345 = vpack.c.bf16 %v5269, %v5265
        %v5346 = vpack.c.bf16 %v5270, %v5266
        %v5347 = vpack.c.bf16 %v5271, %v5267
        %v5348 = vpack.c.bf16 %v5276, %v5272
        %v5349 = vpack.c.bf16 %v5277, %v5273
        %v5350 = vpack.c.bf16 %v5278, %v5274
        %v5351 = vpack.c.bf16 %v5279, %v5275
        %v5352 = vpack.c.bf16 %v5284, %v5280
        %v5353 = vpack.c.bf16 %v5285, %v5281
        %v5354 = vpack.c.bf16 %v5286, %v5282
        %v5355 = vpack.c.bf16 %v5287, %v5283
        %v5356 = vpack.c.bf16 %v5292, %v5288
        %v5357 = vpack.c.bf16 %v5293, %v5289
        %v5358 = vpack.c.bf16 %v5294, %v5290
        %v5359 = vpack.c.bf16 %v5295, %v5291
        %v5360 = vld [vmem:[%s4] sm:$0xf]
        %v5361 = vld [vmem:[%s4 + $0x4] sm:$0xf]
        %v5362 = vld [vmem:[%s4 + $0x8] sm:$0xf]
        %v5363 = vld [vmem:[%s4 + $0xc] sm:$0xf]
        %v5364 = vld [vmem:[%s4 + $0x10] sm:$0xf]
        %v5365 = vld [vmem:[%s4 + $0x14] sm:$0xf]
        %v5366 = vld [vmem:[%s4 + $0x18] sm:$0xf]
        %v5367 = vld [vmem:[%s4 + $0x1c] sm:$0xf]
        %v5368 = vld [vmem:[%s4 + $0x20] sm:$0xf]
        %v5369 = vld [vmem:[%s4 + $0x24] sm:$0xf]
        %v5370 = vld [vmem:[%s4 + $0x28] sm:$0xf]
        %v5371 = vld [vmem:[%s4 + $0x2c] sm:$0xf]
        %v5372 = vld [vmem:[%s4 + $0x30] sm:$0xf]
        %v5373 = vld [vmem:[%s4 + $0x34] sm:$0xf]
        %v5374 = vld [vmem:[%s4 + $0x38] sm:$0xf]
        %v5375 = vld [vmem:[%s4 + $0x3c] sm:$0xf]
        %v5376 = vld [vmem:[%s4 + $0x40] sm:$0xf]
        %v5377 = vld [vmem:[%s4 + $0x44] sm:$0xf]
        %v5378 = vld [vmem:[%s4 + $0x48] sm:$0xf]
        %v5379 = vld [vmem:[%s4 + $0x4c] sm:$0xf]
        %v5380 = vld [vmem:[%s4 + $0x50] sm:$0xf]
        %v5381 = vld [vmem:[%s4 + $0x54] sm:$0xf]
        %v5382 = vld [vmem:[%s4 + $0x58] sm:$0xf]
        %v5383 = vld [vmem:[%s4 + $0x5c] sm:$0xf]
        %v5384 = vld [vmem:[%s4 + $0x60] sm:$0xf]
        %v5385 = vld [vmem:[%s4 + $0x64] sm:$0xf]
        %v5386 = vld [vmem:[%s4 + $0x68] sm:$0xf]
        %v5387 = vld [vmem:[%s4 + $0x6c] sm:$0xf]
        %v5388 = vld [vmem:[%s4 + $0x70] sm:$0xf]
        %v5389 = vld [vmem:[%s4 + $0x74] sm:$0xf]
        %v5390 = vld [vmem:[%s4 + $0x78] sm:$0xf]
        %v5391 = vld [vmem:[%s4 + $0x7c] sm:$0xf]
        %v5392 = vld [vmem:[%s4 + $0x80] sm:$0xf]
        %v5393 = vld [vmem:[%s4 + $0x84] sm:$0xf]
        %v5394 = vld [vmem:[%s4 + $0x88] sm:$0xf]
        %v5395 = vld [vmem:[%s4 + $0x8c] sm:$0xf]
        %v5396 = vld [vmem:[%s4 + $0x90] sm:$0xf]
        %v5397 = vld [vmem:[%s4 + $0x94] sm:$0xf]
        %v5398 = vld [vmem:[%s4 + $0x98] sm:$0xf]
        %v5399 = vld [vmem:[%s4 + $0x9c] sm:$0xf]
        %v5400 = vld [vmem:[%s4 + $0xa0] sm:$0xf]
        %v5401 = vld [vmem:[%s4 + $0xa4] sm:$0xf]
        %v5402 = vld [vmem:[%s4 + $0xa8] sm:$0xf]
        %v5403 = vld [vmem:[%s4 + $0xac] sm:$0xf]
        %v5404 = vld [vmem:[%s4 + $0xb0] sm:$0xf]
        %v5405 = vld [vmem:[%s4 + $0xb4] sm:$0xf]
        %v5406 = vld [vmem:[%s4 + $0xb8] sm:$0xf]
        %v5407 = vld [vmem:[%s4 + $0xbc] sm:$0xf]
        %v5408 = vld [vmem:[%s4 + $0xc0] sm:$0xf]
        %v5409 = vld [vmem:[%s4 + $0xc4] sm:$0xf]
        %v5410 = vld [vmem:[%s4 + $0xc8] sm:$0xf]
        %v5411 = vld [vmem:[%s4 + $0xcc] sm:$0xf]
        %v5412 = vld [vmem:[%s4 + $0xd0] sm:$0xf]
        %v5413 = vld [vmem:[%s4 + $0xd4] sm:$0xf]
        %v5414 = vld [vmem:[%s4 + $0xd8] sm:$0xf]
        %v5415 = vld [vmem:[%s4 + $0xdc] sm:$0xf]
        %v5416 = vld [vmem:[%s4 + $0xe0] sm:$0xf]
        %v5417 = vld [vmem:[%s4 + $0xe4] sm:$0xf]
        %v5418 = vld [vmem:[%s4 + $0xe8] sm:$0xf]
        %v5419 = vld [vmem:[%s4 + $0xec] sm:$0xf]
        %v5420 = vld [vmem:[%s4 + $0xf0] sm:$0xf]
        %v5421 = vld [vmem:[%s4 + $0xf4] sm:$0xf]
        %v5422 = vld [vmem:[%s4 + $0xf8] sm:$0xf]
        %v5423 = vld [vmem:[%s4 + $0xfc] sm:$0xf]
        %v5424 = vld [vmem:[%s5] sm:$0x1]
        %v5426 = vlaneseq
        %v5427 = vshrl.u32 %v5426, 7
        %v5428 = vsub.s32 0, %v5427
        %v5429 = vrot.slane %v5424, %v5428
        %v5495 = vunpack.c.l.b16 %v5360
        %v5496 = vunpack.c.l.b16 %v5361
        %v5497 = vunpack.c.l.b16 %v5362
        %v5498 = vunpack.c.l.b16 %v5363
        %v5499 = vunpack.c.l.b16 %v5364
        %v5500 = vunpack.c.l.b16 %v5365
        %v5501 = vunpack.c.l.b16 %v5366
        %v5502 = vunpack.c.l.b16 %v5367
        %v5503 = vunpack.c.l.b16 %v5368
        %v5504 = vunpack.c.l.b16 %v5369
        %v5505 = vunpack.c.l.b16 %v5370
        %v5506 = vunpack.c.l.b16 %v5371
        %v5507 = vunpack.c.l.b16 %v5372
        %v5508 = vunpack.c.l.b16 %v5373
        %v5509 = vunpack.c.l.b16 %v5374
        %v5510 = vunpack.c.l.b16 %v5375
        %v5511 = vunpack.c.l.b16 %v5376
        %v5512 = vunpack.c.l.b16 %v5377
        %v5513 = vunpack.c.l.b16 %v5378
        %v5514 = vunpack.c.l.b16 %v5379
        %v5515 = vunpack.c.l.b16 %v5380
        %v5516 = vunpack.c.l.b16 %v5381
        %v5517 = vunpack.c.l.b16 %v5382
        %v5518 = vunpack.c.l.b16 %v5383
        %v5519 = vunpack.c.l.b16 %v5384
        %v5520 = vunpack.c.l.b16 %v5385
        %v5521 = vunpack.c.l.b16 %v5386
        %v5522 = vunpack.c.l.b16 %v5387
        %v5523 = vunpack.c.l.b16 %v5388
        %v5524 = vunpack.c.l.b16 %v5389
        %v5525 = vunpack.c.l.b16 %v5390
        %v5526 = vunpack.c.l.b16 %v5391
        %v5527 = vunpack.c.l.b16 %v5392
        %v5528 = vunpack.c.l.b16 %v5393
        %v5529 = vunpack.c.l.b16 %v5394
        %v5530 = vunpack.c.l.b16 %v5395
        %v5531 = vunpack.c.l.b16 %v5396
        %v5532 = vunpack.c.l.b16 %v5397
        %v5533 = vunpack.c.l.b16 %v5398
        %v5534 = vunpack.c.l.b16 %v5399
        %v5535 = vunpack.c.l.b16 %v5400
        %v5536 = vunpack.c.l.b16 %v5401
        %v5537 = vunpack.c.l.b16 %v5402
        %v5538 = vunpack.c.l.b16 %v5403
        %v5539 = vunpack.c.l.b16 %v5404
        %v5540 = vunpack.c.l.b16 %v5405
        %v5541 = vunpack.c.l.b16 %v5406
        %v5542 = vunpack.c.l.b16 %v5407
        %v5543 = vunpack.c.l.b16 %v5408
        %v5544 = vunpack.c.l.b16 %v5409
        %v5545 = vunpack.c.l.b16 %v5410
        %v5546 = vunpack.c.l.b16 %v5411
        %v5547 = vunpack.c.l.b16 %v5412
        %v5548 = vunpack.c.l.b16 %v5413
        %v5549 = vunpack.c.l.b16 %v5414
        %v5550 = vunpack.c.l.b16 %v5415
        %v5551 = vunpack.c.l.b16 %v5416
        %v5552 = vunpack.c.l.b16 %v5417
        %v5553 = vunpack.c.l.b16 %v5418
        %v5554 = vunpack.c.l.b16 %v5419
        %v5555 = vunpack.c.l.b16 %v5420
        %v5556 = vunpack.c.l.b16 %v5421
        %v5557 = vunpack.c.l.b16 %v5422
        %v5558 = vunpack.c.l.b16 %v5423
        %v5559 = vpack.c.b16 %v5496, %v5495
        %v5560 = vpack.c.b16 %v5498, %v5497
        %v5561 = vpack.c.b16 %v5500, %v5499
        %v5562 = vpack.c.b16 %v5502, %v5501
        %v5563 = vpack.c.b16 %v5504, %v5503
        %v5564 = vpack.c.b16 %v5506, %v5505
        %v5565 = vpack.c.b16 %v5508, %v5507
        %v5566 = vpack.c.b16 %v5510, %v5509
        %v5567 = vpack.c.b16 %v5512, %v5511
        %v5568 = vpack.c.b16 %v5514, %v5513
        %v5569 = vpack.c.b16 %v5516, %v5515
        %v5570 = vpack.c.b16 %v5518, %v5517
        %v5571 = vpack.c.b16 %v5520, %v5519
        %v5572 = vpack.c.b16 %v5522, %v5521
        %v5573 = vpack.c.b16 %v5524, %v5523
        %v5574 = vpack.c.b16 %v5526, %v5525
        %v5575 = vpack.c.b16 %v5528, %v5527
        %v5576 = vpack.c.b16 %v5530, %v5529
        %v5577 = vpack.c.b16 %v5532, %v5531
        %v5578 = vpack.c.b16 %v5534, %v5533
        %v5579 = vpack.c.b16 %v5536, %v5535
        %v5580 = vpack.c.b16 %v5538, %v5537
        %v5581 = vpack.c.b16 %v5540, %v5539
        %v5582 = vpack.c.b16 %v5542, %v5541
        %v5583 = vpack.c.b16 %v5544, %v5543
        %v5584 = vpack.c.b16 %v5546, %v5545
        %v5585 = vpack.c.b16 %v5548, %v5547
        %v5586 = vpack.c.b16 %v5550, %v5549
        %v5587 = vpack.c.b16 %v5552, %v5551
        %v5588 = vpack.c.b16 %v5554, %v5553
        %v5589 = vpack.c.b16 %v5556, %v5555
        %v5590 = vpack.c.b16 %v5558, %v5557
        %5623 = vmatprep.subr.bf16.mxu0 0
        %5624 = vmatpush1.bf16.msra.mxu0 %v5559
        %5625 = vmatprep.subr.bf16.mxu0 0
        %5626 = vmatpush1.bf16.msra.mxu0 %v5560
        %5627 = vmatprep.subr.bf16.mxu0 0
        %5628 = vmatpush1.bf16.msra.mxu0 %v5561
        %5629 = vmatprep.subr.bf16.mxu0 0
        %5630 = vmatpush1.bf16.msra.mxu0 %v5562
        %5631 = vmatprep.subr.bf16.mxu0 0
        %5632 = vmatpush1.bf16.msra.mxu0 %v5563
        %5633 = vmatprep.subr.bf16.mxu0 0
        %5634 = vmatpush1.bf16.msra.mxu0 %v5564
        %5635 = vmatprep.subr.bf16.mxu0 0
        %5636 = vmatpush1.bf16.msra.mxu0 %v5565
        %5637 = vmatprep.subr.bf16.mxu0 0
        %5638 = vmatpush1.bf16.msra.mxu0 %v5566
        %5639 = vmatprep.subr.bf16.mxu0 0
        %5640 = vmatpush1.bf16.msra.mxu0 %v5567
        %5641 = vmatprep.subr.bf16.mxu0 0
        %5642 = vmatpush1.bf16.msra.mxu0 %v5568
        %5643 = vmatprep.subr.bf16.mxu0 0
        %5644 = vmatpush1.bf16.msra.mxu0 %v5569
        %5645 = vmatprep.subr.bf16.mxu0 0
        %5646 = vmatpush1.bf16.msra.mxu0 %v5570
        %5647 = vmatprep.subr.bf16.mxu0 0
        %5648 = vmatpush1.bf16.msra.mxu0 %v5571
        %5649 = vmatprep.subr.bf16.mxu0 0
        %5650 = vmatpush1.bf16.msra.mxu0 %v5572
        %5651 = vmatprep.subr.bf16.mxu0 0
        %5652 = vmatpush1.bf16.msra.mxu0 %v5573
        %5653 = vmatprep.subr.bf16.mxu0 0
        %5654 = vmatpush1.bf16.msra.mxu0 %v5574
        %5655 = vmatprep.mubr.bf16.mxu0 %v5297
        %5656 = vmatmul.mubr.bf16.gmra.mrb[0].mxu0 %v5296
        %v5657 = vpop.f32.mrb[0].mxu0
        %v5658 = vadd.f32 %v5429, %v5657
        %v5659 = vpop.f32.mrb[0].mxu0
        %v5660 = vpop.f32.mrb[0].mxu0
        %v5661 = vadd.f32 %v5429, %v5660
        %v5662 = vpop.f32.mrb[0].mxu0
        %5663 = vmatprep.mubr.bf16.mxu0 %v5301
        %5664 = vmatmul.mubr.bf16.gmra.mrb[0].mxu0 %v5300
        %v5665 = vpop.f32.mrb[0].mxu0
        %v5666 = vadd.f32 %v5429, %v5665
        %v5667 = vpop.f32.mrb[0].mxu0
        %v5668 = vpop.f32.mrb[0].mxu0
        %v5669 = vadd.f32 %v5429, %v5668
        %v5670 = vpop.f32.mrb[0].mxu0
        %5671 = vmatprep.mubr.bf16.mxu0 %v5305
        %5672 = vmatmul.mubr.bf16.gmra.mrb[0].mxu0 %v5304
        %v5673 = vpop.f32.mrb[0].mxu0
        %v5674 = vadd.f32 %v5429, %v5673
        %v5675 = vpop.f32.mrb[0].mxu0
        %v5676 = vpop.f32.mrb[0].mxu0
        %v5677 = vadd.f32 %v5429, %v5676
        %v5678 = vpop.f32.mrb[0].mxu0
        %5679 = vmatprep.mubr.bf16.mxu0 %v5309
        %5680 = vmatmul.mubr.bf16.gmra.mrb[0].mxu0 %v5308
        %v5681 = vpop.f32.mrb[0].mxu0
        %v5682 = vadd.f32 %v5429, %v5681
        %v5683 = vpop.f32.mrb[0].mxu0
        %v5684 = vpop.f32.mrb[0].mxu0
        %v5685 = vadd.f32 %v5429, %v5684
        %v5686 = vpop.f32.mrb[0].mxu0
        %5687 = vmatprep.mubr.bf16.mxu0 %v5313
        %5688 = vmatmul.mubr.bf16.gmra.mrb[0].mxu0 %v5312
        %v5689 = vpop.f32.mrb[0].mxu0
        %v5690 = vadd.f32 %v5429, %v5689
        %v5691 = vpop.f32.mrb[0].mxu0
        %v5692 = vpop.f32.mrb[0].mxu0
        %v5693 = vadd.f32 %v5429, %v5692
        %v5694 = vpop.f32.mrb[0].mxu0
        %5695 = vmatprep.mubr.bf16.mxu0 %v5317
        %5696 = vmatmul.mubr.bf16.gmra.mrb[0].mxu0 %v5316
        %v5697 = vpop.f32.mrb[0].mxu0
        %v5698 = vadd.f32 %v5429, %v5697
        %v5699 = vpop.f32.mrb[0].mxu0
        %v5700 = vpop.f32.mrb[0].mxu0
        %v5701 = vadd.f32 %v5429, %v5700
        %v5702 = vpop.f32.mrb[0].mxu0
        %5703 = vmatprep.mubr.bf16.mxu0 %v5321
        %5704 = vmatmul.mubr.bf16.gmra.mrb[0].mxu0 %v5320
        %v5705 = vpop.f32.mrb[0].mxu0
        %v5706 = vadd.f32 %v5429, %v5705
        %v5707 = vpop.f32.mrb[0].mxu0
        %v5708 = vpop.f32.mrb[0].mxu0
        %v5709 = vadd.f32 %v5429, %v5708
        %v5710 = vpop.f32.mrb[0].mxu0
        %5711 = vmatprep.mubr.bf16.mxu0 %v5325
        %5712 = vmatmul.mubr.bf16.gmra.mrb[0].mxu0 %v5324
        %v5713 = vpop.f32.mrb[0].mxu0
        %v5714 = vadd.f32 %v5429, %v5713
        %v5715 = vpop.f32.mrb[0].mxu0
        %v5716 = vpop.f32.mrb[0].mxu0
        %v5717 = vadd.f32 %v5429, %v5716
        %v5718 = vpop.f32.mrb[0].mxu0
        %5719 = vmatprep.mubr.bf16.mxu0 %v5329
        %5720 = vmatmul.mubr.bf16.gmra.mrb[0].mxu0 %v5328
        %v5721 = vpop.f32.mrb[0].mxu0
        %v5722 = vadd.f32 %v5429, %v5721
        %v5723 = vpop.f32.mrb[0].mxu0
        %v5724 = vpop.f32.mrb[0].mxu0
        %v5725 = vadd.f32 %v5429, %v5724
        %v5726 = vpop.f32.mrb[0].mxu0
        %5727 = vmatprep.mubr.bf16.mxu0 %v5333
        %5728 = vmatmul.mubr.bf16.gmra.mrb[0].mxu0 %v5332
        %v5729 = vpop.f32.mrb[0].mxu0
        %v5730 = vadd.f32 %v5429, %v5729
        %v5731 = vpop.f32.mrb[0].mxu0
        %v5732 = vpop.f32.mrb[0].mxu0
        %v5733 = vadd.f32 %v5429, %v5732
        %v5734 = vpop.f32.mrb[0].mxu0
        %5735 = vmatprep.mubr.bf16.mxu0 %v5337
        %5736 = vmatmul.mubr.bf16.gmra.mrb[0].mxu0 %v5336
        %v5737 = vpop.f32.mrb[0].mxu0
        %v5738 = vadd.f32 %v5429, %v5737
        %v5739 = vpop.f32.mrb[0].mxu0
        %v5740 = vpop.f32.mrb[0].mxu0
        %v5741 = vadd.f32 %v5429, %v5740
        %v5742 = vpop.f32.mrb[0].mxu0
        %5743 = vmatprep.mubr.bf16.mxu0 %v5341
        %5744 = vmatmul.mubr.bf16.gmra.mrb[0].mxu0 %v5340
        %v5745 = vpop.f32.mrb[0].mxu0
        %v5746 = vadd.f32 %v5429, %v5745
        %v5747 = vpop.f32.mrb[0].mxu0
        %v5748 = vpop.f32.mrb[0].mxu0
        %v5749 = vadd.f32 %v5429, %v5748
        %v5750 = vpop.f32.mrb[0].mxu0
        %5751 = vmatprep.mubr.bf16.mxu0 %v5345
        %5752 = vmatmul.mubr.bf16.gmra.mrb[0].mxu0 %v5344
        %v5753 = vpop.f32.mrb[0].mxu0
        %v5754 = vadd.f32 %v5429, %v5753
        %v5755 = vpop.f32.mrb[0].mxu0
        %v5756 = vpop.f32.mrb[0].mxu0
        %v5757 = vadd.f32 %v5429, %v5756
        %v5758 = vpop.f32.mrb[0].mxu0
        %5759 = vmatprep.mubr.bf16.mxu0 %v5349
        %5760 = vmatmul.mubr.bf16.gmra.mrb[0].mxu0 %v5348
        %v5761 = vpop.f32.mrb[0].mxu0
        %v5762 = vadd.f32 %v5429, %v5761
        %v5763 = vpop.f32.mrb[0].mxu0
        %v5764 = vpop.f32.mrb[0].mxu0
        %v5765 = vadd.f32 %v5429, %v5764
        %v5766 = vpop.f32.mrb[0].mxu0
        %5767 = vmatprep.mubr.bf16.mxu0 %v5353
        %5768 = vmatmul.mubr.bf16.gmra.mrb[0].mxu0 %v5352
        %v5769 = vpop.f32.mrb[0].mxu0
        %v5770 = vadd.f32 %v5429, %v5769
        %v5771 = vpop.f32.mrb[0].mxu0
        %v5772 = vpop.f32.mrb[0].mxu0
        %v5773 = vadd.f32 %v5429, %v5772
        %v5774 = vpop.f32.mrb[0].mxu0
        %5775 = vmatprep.mubr.bf16.mxu0 %v5357
        %5776 = vmatmul.mubr.bf16.gmra.mrb[0].mxu0 %v5356
        %v5777 = vpop.f32.mrb[0].mxu0
        %v5778 = vadd.f32 %v5429, %v5777
        %v5779 = vpop.f32.mrb[0].mxu0
        %v5780 = vpop.f32.mrb[0].mxu0
        %v5781 = vadd.f32 %v5429, %v5780
        %v5782 = vpop.f32.mrb[0].mxu0
        %5783 = vdwg.mxu0
        %5784 = vmatprep.subr.bf16.mxu0 0
        %5785 = vmatpush1.bf16.msra.mxu0 %v5575
        %5786 = vmatprep.subr.bf16.mxu0 0
        %5787 = vmatpush1.bf16.msra.mxu0 %v5576
        %5788 = vmatprep.subr.bf16.mxu0 0
        %5789 = vmatpush1.bf16.msra.mxu0 %v5577
        %5790 = vmatprep.subr.bf16.mxu0 0
        %5791 = vmatpush1.bf16.msra.mxu0 %v5578
        %5792 = vmatprep.subr.bf16.mxu0 0
        %5793 = vmatpush1.bf16.msra.mxu0 %v5579
        %5794 = vmatprep.subr.bf16.mxu0 0
        %5795 = vmatpush1.bf16.msra.mxu0 %v5580
        %5796 = vmatprep.subr.bf16.mxu0 0
        %5797 = vmatpush1.bf16.msra.mxu0 %v5581
        %5798 = vmatprep.subr.bf16.mxu0 0
        %5799 = vmatpush1.bf16.msra.mxu0 %v5582
        %5800 = vmatprep.subr.bf16.mxu0 0
        %5801 = vmatpush1.bf16.msra.mxu0 %v5583
        %5802 = vmatprep.subr.bf16.mxu0 0
        %5803 = vmatpush1.bf16.msra.mxu0 %v5584
        %5804 = vmatprep.subr.bf16.mxu0 0
        %5805 = vmatpush1.bf16.msra.mxu0 %v5585
        %5806 = vmatprep.subr.bf16.mxu0 0
        %5807 = vmatpush1.bf16.msra.mxu0 %v5586
        %5808 = vmatprep.subr.bf16.mxu0 0
        %5809 = vmatpush1.bf16.msra.mxu0 %v5587
        %5810 = vmatprep.subr.bf16.mxu0 0
        %5811 = vmatpush1.bf16.msra.mxu0 %v5588
        %5812 = vmatprep.subr.bf16.mxu0 0
        %5813 = vmatpush1.bf16.msra.mxu0 %v5589
        %5814 = vmatprep.subr.bf16.mxu0 0
        %5815 = vmatpush1.bf16.msra.mxu0 %v5590
        %5816 = vmatprep.mubr.bf16.mxu0 %v5299
        %5817 = vmatmul.mubr.bf16.gmra.mrb[0].mxu0 %v5298
        %v5818 = vpop.f32.mrb[0].mxu0
        %v5819 = vadd.f32 %v5658, %v5818
        %v5820 = vpop.f32.mrb[0].mxu0
        %v5821 = vpop.f32.mrb[0].mxu0
        %v5822 = vadd.f32 %v5661, %v5821
        %v5823 = vpop.f32.mrb[0].mxu0
        %5824 = vmatprep.mubr.bf16.mxu0 %v5303
        %5825 = vmatmul.mubr.bf16.gmra.mrb[0].mxu0 %v5302
        %v5826 = vpop.f32.mrb[0].mxu0
        %v5827 = vadd.f32 %v5666, %v5826
        %v5828 = vpop.f32.mrb[0].mxu0
        %v5829 = vpop.f32.mrb[0].mxu0
        %v5830 = vadd.f32 %v5669, %v5829
        %v5831 = vpop.f32.mrb[0].mxu0
        %5832 = vmatprep.mubr.bf16.mxu0 %v5307
        %5833 = vmatmul.mubr.bf16.gmra.mrb[0].mxu0 %v5306
        %v5834 = vpop.f32.mrb[0].mxu0
        %v5835 = vadd.f32 %v5674, %v5834
        %v5836 = vpop.f32.mrb[0].mxu0
        %v5837 = vpop.f32.mrb[0].mxu0
        %v5838 = vadd.f32 %v5677, %v5837
        %v5839 = vpop.f32.mrb[0].mxu0
        %5840 = vmatprep.mubr.bf16.mxu0 %v5311
        %5841 = vmatmul.mubr.bf16.gmra.mrb[0].mxu0 %v5310
        %v5842 = vpop.f32.mrb[0].mxu0
        %v5843 = vadd.f32 %v5682, %v5842
        %v5844 = vpop.f32.mrb[0].mxu0
        %v5845 = vpop.f32.mrb[0].mxu0
        %v5846 = vadd.f32 %v5685, %v5845
        %v5847 = vpop.f32.mrb[0].mxu0
        %5848 = vmatprep.mubr.bf16.mxu0 %v5315
        %5849 = vmatmul.mubr.bf16.gmra.mrb[0].mxu0 %v5314
        %v5850 = vpop.f32.mrb[0].mxu0
        %v5851 = vadd.f32 %v5690, %v5850
        %v5852 = vpop.f32.mrb[0].mxu0
        %v5853 = vpop.f32.mrb[0].mxu0
        %v5854 = vadd.f32 %v5693, %v5853
        %v5855 = vpop.f32.mrb[0].mxu0
        %5856 = vmatprep.mubr.bf16.mxu0 %v5319
        %5857 = vmatmul.mubr.bf16.gmra.mrb[0].mxu0 %v5318
        %v5858 = vpop.f32.mrb[0].mxu0
        %v5859 = vadd.f32 %v5698, %v5858
        %v5860 = vpop.f32.mrb[0].mxu0
        %v5861 = vpop.f32.mrb[0].mxu0
        %v5862 = vadd.f32 %v5701, %v5861
        %v5863 = vpop.f32.mrb[0].mxu0
        %5864 = vmatprep.mubr.bf16.mxu0 %v5323
        %5865 = vmatmul.mubr.bf16.gmra.mrb[0].mxu0 %v5322
        %v5866 = vpop.f32.mrb[0].mxu0
        %v5867 = vadd.f32 %v5706, %v5866
        %v5868 = vpop.f32.mrb[0].mxu0
        %v5869 = vpop.f32.mrb[0].mxu0
        %v5870 = vadd.f32 %v5709, %v5869
        %v5871 = vpop.f32.mrb[0].mxu0
        %5872 = vmatprep.mubr.bf16.mxu0 %v5327
        %5873 = vmatmul.mubr.bf16.gmra.mrb[0].mxu0 %v5326
        %v5874 = vpop.f32.mrb[0].mxu0
        %v5875 = vadd.f32 %v5714, %v5874
        %v5876 = vpop.f32.mrb[0].mxu0
        %v5877 = vpop.f32.mrb[0].mxu0
        %v5878 = vadd.f32 %v5717, %v5877
        %v5879 = vpop.f32.mrb[0].mxu0
        %5880 = vmatprep.mubr.bf16.mxu0 %v5331
        %5881 = vmatmul.mubr.bf16.gmra.mrb[0].mxu0 %v5330
        %v5882 = vpop.f32.mrb[0].mxu0
        %v5883 = vadd.f32 %v5722, %v5882
        %v5884 = vpop.f32.mrb[0].mxu0
        %v5885 = vpop.f32.mrb[0].mxu0
        %v5886 = vadd.f32 %v5725, %v5885
        %v5887 = vpop.f32.mrb[0].mxu0
        %5888 = vmatprep.mubr.bf16.mxu0 %v5335
        %5889 = vmatmul.mubr.bf16.gmra.mrb[0].mxu0 %v5334
        %v5890 = vpop.f32.mrb[0].mxu0
        %v5891 = vadd.f32 %v5730, %v5890
        %v5892 = vpop.f32.mrb[0].mxu0
        %v5893 = vpop.f32.mrb[0].mxu0
        %v5894 = vadd.f32 %v5733, %v5893
        %v5895 = vpop.f32.mrb[0].mxu0
        %5896 = vmatprep.mubr.bf16.mxu0 %v5339
        %5897 = vmatmul.mubr.bf16.gmra.mrb[0].mxu0 %v5338
        %v5898 = vpop.f32.mrb[0].mxu0
        %v5899 = vadd.f32 %v5738, %v5898
        %v5900 = vpop.f32.mrb[0].mxu0
        %v5901 = vpop.f32.mrb[0].mxu0
        %v5902 = vadd.f32 %v5741, %v5901
        %v5903 = vpop.f32.mrb[0].mxu0
        %5904 = vmatprep.mubr.bf16.mxu0 %v5343
        %5905 = vmatmul.mubr.bf16.gmra.mrb[0].mxu0 %v5342
        %v5906 = vpop.f32.mrb[0].mxu0
        %v5907 = vadd.f32 %v5746, %v5906
        %v5908 = vpop.f32.mrb[0].mxu0
        %v5909 = vpop.f32.mrb[0].mxu0
        %v5910 = vadd.f32 %v5749, %v5909
        %v5911 = vpop.f32.mrb[0].mxu0
        %5912 = vmatprep.mubr.bf16.mxu0 %v5347
        %5913 = vmatmul.mubr.bf16.gmra.mrb[0].mxu0 %v5346
        %v5914 = vpop.f32.mrb[0].mxu0
        %v5915 = vadd.f32 %v5754, %v5914
        %v5916 = vpop.f32.mrb[0].mxu0
        %v5917 = vpop.f32.mrb[0].mxu0
        %v5918 = vadd.f32 %v5757, %v5917
        %v5919 = vpop.f32.mrb[0].mxu0
        %5920 = vmatprep.mubr.bf16.mxu0 %v5351
        %5921 = vmatmul.mubr.bf16.gmra.mrb[0].mxu0 %v5350
        %v5922 = vpop.f32.mrb[0].mxu0
        %v5923 = vadd.f32 %v5762, %v5922
        %v5924 = vpop.f32.mrb[0].mxu0
        %v5925 = vpop.f32.mrb[0].mxu0
        %v5926 = vadd.f32 %v5765, %v5925
        %v5927 = vpop.f32.mrb[0].mxu0
        %5928 = vmatprep.mubr.bf16.mxu0 %v5355
        %5929 = vmatmul.mubr.bf16.gmra.mrb[0].mxu0 %v5354
        %v5930 = vpop.f32.mrb[0].mxu0
        %v5931 = vadd.f32 %v5770, %v5930
        %v5932 = vpop.f32.mrb[0].mxu0
        %v5933 = vpop.f32.mrb[0].mxu0
        %v5934 = vadd.f32 %v5773, %v5933
        %v5935 = vpop.f32.mrb[0].mxu0
        %5936 = vmatprep.mubr.bf16.mxu0 %v5359
        %5937 = vmatmul.mubr.bf16.gmra.mrb[0].mxu0 %v5358
        %v5938 = vpop.f32.mrb[0].mxu0
        %v5939 = vadd.f32 %v5778, %v5938
        %v5940 = vpop.f32.mrb[0].mxu0
        %v5941 = vpop.f32.mrb[0].mxu0
        %v5942 = vadd.f32 %v5781, %v5941
        %v5943 = vpop.f32.mrb[0].mxu0
        %5944 = vdwg.mxu0
        %v5945 = vxor.u32 %v5819, 2147483648
        %v5946 = vxor.u32 %v5822, 2147483648
        %v5947 = vxor.u32 %v5827, 2147483648
        %v5948 = vxor.u32 %v5830, 2147483648
        %v5949 = vxor.u32 %v5835, 2147483648
        %v5950 = vxor.u32 %v5838, 2147483648
        %v5951 = vxor.u32 %v5843, 2147483648
        %v5952 = vxor.u32 %v5846, 2147483648
        %v5953 = vxor.u32 %v5851, 2147483648
        %v5954 = vxor.u32 %v5854, 2147483648
        %v5955 = vxor.u32 %v5859, 2147483648
        %v5956 = vxor.u32 %v5862, 2147483648
        %v5957 = vxor.u32 %v5867, 2147483648
        %v5958 = vxor.u32 %v5870, 2147483648
        %v5959 = vxor.u32 %v5875, 2147483648
        %v5960 = vxor.u32 %v5878, 2147483648
        %v5961 = vxor.u32 %v5883, 2147483648
        %v5962 = vxor.u32 %v5886, 2147483648
        %v5963 = vxor.u32 %v5891, 2147483648
        %v5964 = vxor.u32 %v5894, 2147483648
        %v5965 = vxor.u32 %v5899, 2147483648
        %v5966 = vxor.u32 %v5902, 2147483648
        %v5967 = vxor.u32 %v5907, 2147483648
        %v5968 = vxor.u32 %v5910, 2147483648
        %v5969 = vxor.u32 %v5915, 2147483648
        %v5970 = vxor.u32 %v5918, 2147483648
        %v5971 = vxor.u32 %v5923, 2147483648
        %v5972 = vxor.u32 %v5926, 2147483648
        %v5973 = vxor.u32 %v5931, 2147483648
        %v5974 = vxor.u32 %v5934, 2147483648
        %v5975 = vxor.u32 %v5939, 2147483648
        %v5976 = vxor.u32 %v5942, 2147483648
        %v5977 = vmul.f32 %v5945, 1.442695
        %v5978 = vpow.pop %v5977
        %v5979 = vmul.f32 %v5946, 1.442695
        %v5980 = vpow.pop %v5979
        %v5981 = vmul.f32 %v5947, 1.442695
        %v5982 = vpow.pop %v5981
        %v5983 = vmul.f32 %v5948, 1.442695
        %v5984 = vpow.pop %v5983
        %v5985 = vmul.f32 %v5949, 1.442695
        %v5986 = vpow.pop %v5985
        %v5987 = vmul.f32 %v5950, 1.442695
        %v5988 = vpow.pop %v5987
        %v5989 = vmul.f32 %v5951, 1.442695
        %v5990 = vpow.pop %v5989
        %v5991 = vmul.f32 %v5952, 1.442695
        %v5992 = vpow.pop %v5991
        %v5993 = vmul.f32 %v5953, 1.442695
        %v5994 = vpow.pop %v5993
        %v5995 = vmul.f32 %v5954, 1.442695
        %v5996 = vpow.pop %v5995
        %v5997 = vmul.f32 %v5955, 1.442695
        %v5998 = vpow.pop %v5997
        %v5999 = vmul.f32 %v5956, 1.442695
        %v6000 = vpow.pop %v5999
        %v6001 = vmul.f32 %v5957, 1.442695
        %v6002 = vpow.pop %v6001
        %v6003 = vmul.f32 %v5958, 1.442695
        %v6004 = vpow.pop %v6003
        %v6005 = vmul.f32 %v5959, 1.442695
        %v6006 = vpow.pop %v6005
        %v6007 = vmul.f32 %v5960, 1.442695
        %v6008 = vpow.pop %v6007
        %v6009 = vmul.f32 %v5961, 1.442695
        %v6010 = vpow.pop %v6009
        %v6011 = vmul.f32 %v5962, 1.442695
        %v6012 = vpow.pop %v6011
        %v6013 = vmul.f32 %v5963, 1.442695
        %v6014 = vpow.pop %v6013
        %v6015 = vmul.f32 %v5964, 1.442695
        %v6016 = vpow.pop %v6015
        %v6017 = vmul.f32 %v5965, 1.442695
        %v6018 = vpow.pop %v6017
        %v6019 = vmul.f32 %v5966, 1.442695
        %v6020 = vpow.pop %v6019
        %v6021 = vmul.f32 %v5967, 1.442695
        %v6022 = vpow.pop %v6021
        %v6023 = vmul.f32 %v5968, 1.442695
        %v6024 = vpow.pop %v6023
        %v6025 = vmul.f32 %v5969, 1.442695
        %v6026 = vpow.pop %v6025
        %v6027 = vmul.f32 %v5970, 1.442695
        %v6028 = vpow.pop %v6027
        %v6029 = vmul.f32 %v5971, 1.442695
        %v6030 = vpow.pop %v6029
        %v6031 = vmul.f32 %v5972, 1.442695
        %v6032 = vpow.pop %v6031
        %v6033 = vmul.f32 %v5973, 1.442695
        %v6034 = vpow.pop %v6033
        %v6035 = vmul.f32 %v5974, 1.442695
        %v6036 = vpow.pop %v6035
        %v6037 = vmul.f32 %v5975, 1.442695
        %v6038 = vpow.pop %v6037
        %v6039 = vmul.f32 %v5976, 1.442695
        %v6040 = vpow.pop %v6039
        %v6041 = vadd.f32 %v5978, 1.0
        %v6042 = vadd.f32 %v5980, 1.0
        %v6043 = vadd.f32 %v5982, 1.0
        %v6044 = vadd.f32 %v5984, 1.0
        %v6045 = vadd.f32 %v5986, 1.0
        %v6046 = vadd.f32 %v5988, 1.0
        %v6047 = vadd.f32 %v5990, 1.0
        %v6048 = vadd.f32 %v5992, 1.0
        %v6049 = vadd.f32 %v5994, 1.0
        %v6050 = vadd.f32 %v5996, 1.0
        %v6051 = vadd.f32 %v5998, 1.0
        %v6052 = vadd.f32 %v6000, 1.0
        %v6053 = vadd.f32 %v6002, 1.0
        %v6054 = vadd.f32 %v6004, 1.0
        %v6055 = vadd.f32 %v6006, 1.0
        %v6056 = vadd.f32 %v6008, 1.0
        %v6057 = vadd.f32 %v6010, 1.0
        %v6058 = vadd.f32 %v6012, 1.0
        %v6059 = vadd.f32 %v6014, 1.0
        %v6060 = vadd.f32 %v6016, 1.0
        %v6061 = vadd.f32 %v6018, 1.0
        %v6062 = vadd.f32 %v6020, 1.0
        %v6063 = vadd.f32 %v6022, 1.0
        %v6064 = vadd.f32 %v6024, 1.0
        %v6065 = vadd.f32 %v6026, 1.0
        %v6066 = vadd.f32 %v6028, 1.0
        %v6067 = vadd.f32 %v6030, 1.0
        %v6068 = vadd.f32 %v6032, 1.0
        %v6069 = vadd.f32 %v6034, 1.0
        %v6070 = vadd.f32 %v6036, 1.0
        %v6071 = vadd.f32 %v6038, 1.0
        %v6072 = vadd.f32 %v6040, 1.0
        %v6073 = vrcp.pop %v6041
        %v6074 = vmul.f32 1.0, %v6073
        %v6075 = vrcp.pop %v6042
        %v6076 = vmul.f32 1.0, %v6075
        %v6077 = vrcp.pop %v6043
        %v6078 = vmul.f32 1.0, %v6077
        %v6079 = vrcp.pop %v6044
        %v6080 = vmul.f32 1.0, %v6079
        %v6081 = vrcp.pop %v6045
        %v6082 = vmul.f32 1.0, %v6081
        %v6083 = vrcp.pop %v6046
        %v6084 = vmul.f32 1.0, %v6083
        %v6085 = vrcp.pop %v6047
        %v6086 = vmul.f32 1.0, %v6085
        %v6087 = vrcp.pop %v6048
        %v6088 = vmul.f32 1.0, %v6087
        %v6089 = vrcp.pop %v6049
        %v6090 = vmul.f32 1.0, %v6089
        %v6091 = vrcp.pop %v6050
        %v6092 = vmul.f32 1.0, %v6091
        %v6093 = vrcp.pop %v6051
        %v6094 = vmul.f32 1.0, %v6093
        %v6095 = vrcp.pop %v6052
        %v6096 = vmul.f32 1.0, %v6095
        %v6097 = vrcp.pop %v6053
        %v6098 = vmul.f32 1.0, %v6097
        %v6099 = vrcp.pop %v6054
        %v6100 = vmul.f32 1.0, %v6099
        %v6101 = vrcp.pop %v6055
        %v6102 = vmul.f32 1.0, %v6101
        %v6103 = vrcp.pop %v6056
        %v6104 = vmul.f32 1.0, %v6103
        %v6105 = vrcp.pop %v6057
        %v6106 = vmul.f32 1.0, %v6105
        %v6107 = vrcp.pop %v6058
        %v6108 = vmul.f32 1.0, %v6107
        %v6109 = vrcp.pop %v6059
        %v6110 = vmul.f32 1.0, %v6109
        %v6111 = vrcp.pop %v6060
        %v6112 = vmul.f32 1.0, %v6111
        %v6113 = vrcp.pop %v6061
        %v6114 = vmul.f32 1.0, %v6113
        %v6115 = vrcp.pop %v6062
        %v6116 = vmul.f32 1.0, %v6115
        %v6117 = vrcp.pop %v6063
        %v6118 = vmul.f32 1.0, %v6117
        %v6119 = vrcp.pop %v6064
        %v6120 = vmul.f32 1.0, %v6119
        %v6121 = vrcp.pop %v6065
        %v6122 = vmul.f32 1.0, %v6121
        %v6123 = vrcp.pop %v6066
        %v6124 = vmul.f32 1.0, %v6123
        %v6125 = vrcp.pop %v6067
        %v6126 = vmul.f32 1.0, %v6125
        %v6127 = vrcp.pop %v6068
        %v6128 = vmul.f32 1.0, %v6127
        %v6129 = vrcp.pop %v6069
        %v6130 = vmul.f32 1.0, %v6129
        %v6131 = vrcp.pop %v6070
        %v6132 = vmul.f32 1.0, %v6131
        %v6133 = vrcp.pop %v6071
        %v6134 = vmul.f32 1.0, %v6133
        %v6135 = vrcp.pop %v6072
        %v6136 = vmul.f32 1.0, %v6135
        %6137 = vst [vmem:[%s247] sm:$0xff] %v6074
        %6138 = vst [vmem:[%s247 + $0x8] sm:$0xff] %v6076
        %6139 = vst [vmem:[%s247 + $0x10] sm:$0xff] %v6078
        %6140 = vst [vmem:[%s247 + $0x18] sm:$0xff] %v6080
        %6141 = vst [vmem:[%s247 + $0x20] sm:$0xff] %v6082
        %6142 = vst [vmem:[%s247 + $0x28] sm:$0xff] %v6084
        %6143 = vst [vmem:[%s247 + $0x30] sm:$0xff] %v6086
        %6144 = vst [vmem:[%s247 + $0x38] sm:$0xff] %v6088
        %6145 = vst [vmem:[%s247 + $0x40] sm:$0xff] %v6090
        %6146 = vst [vmem:[%s247 + $0x48] sm:$0xff] %v6092
        %6147 = vst [vmem:[%s247 + $0x50] sm:$0xff] %v6094
        %6148 = vst [vmem:[%s247 + $0x58] sm:$0xff] %v6096
        %6149 = vst [vmem:[%s247 + $0x60] sm:$0xff] %v6098
        %6150 = vst [vmem:[%s247 + $0x68] sm:$0xff] %v6100
        %6151 = vst [vmem:[%s247 + $0x70] sm:$0xff] %v6102
        %6152 = vst [vmem:[%s247 + $0x78] sm:$0xff] %v6104
        %6153 = vst [vmem:[%s247 + $0x80] sm:$0xff] %v6106
        %6154 = vst [vmem:[%s247 + $0x88] sm:$0xff] %v6108
        %6155 = vst [vmem:[%s247 + $0x90] sm:$0xff] %v6110
        %6156 = vst [vmem:[%s247 + $0x98] sm:$0xff] %v6112
        %6157 = vst [vmem:[%s247 + $0xa0] sm:$0xff] %v6114
        %6158 = vst [vmem:[%s247 + $0xa8] sm:$0xff] %v6116
        %6159 = vst [vmem:[%s247 + $0xb0] sm:$0xff] %v6118
        %6160 = vst [vmem:[%s247 + $0xb8] sm:$0xff] %v6120
        %6161 = vst [vmem:[%s247 + $0xc0] sm:$0xff] %v6122
        %6162 = vst [vmem:[%s247 + $0xc8] sm:$0xff] %v6124
        %6163 = vst [vmem:[%s247 + $0xd0] sm:$0xff] %v6126
        %6164 = vst [vmem:[%s247 + $0xd8] sm:$0xff] %v6128
        %6165 = vst [vmem:[%s247 + $0xe0] sm:$0xff] %v6130
        %6166 = vst [vmem:[%s247 + $0xe8] sm:$0xff] %v6132
        %6167 = vst [vmem:[%s247 + $0xf0] sm:$0xff] %v6134
        %6168 = vst [vmem:[%s247 + $0xf8] sm:$0xff] %v6136
        %s6169 = sand.u32 %s159, 1
        %s6170 = scalar_lea.sflag [#allocation3], %s6169
        %s6171 = sand.u32 %s159, 1
        %s6172 = smul.addr %s6171, 256
        %s6173 = scalar_lea.vmem [#allocation2], %s6172
        // Predicated region
        $region45: #{tpu_custom_call.1} parent=43 // pred_check
          %p6174 = pneg %p169
        $region46: #{tpu_custom_call.1} parent=43 // pred_check_branch
          %6176 = sbr.rel (%p6174) target = $region48
        $region47: #{tpu_custom_call.1} parent=43 // pred_region
          %s6177 = smul.u32 32, %s20
          %s6179 = ssub.s32 4096, 4096
          %6180 = vsyncadd %s6170, %s6179
          %s6181 = smul.addr %s6177, 128
          %s6182 = scalar_lea.hbm %s6, %s6181
          %s6183 = sshll.u32 %s6173, 4
          %s6184 = int_to_ptr.vmem [resolvable:$true] %s6183
          %6189 = dma.vmem_to_hbm [thread:$0]  %s6184, 4096, %s6182, %s6170, 128, 128, 8
        $region48: #{tpu_custom_call.1} parent=43 // pred_fallthru
          _
      $region44: #{tpu_custom_call.1} parent=5 // pred_fallthru
        _
      %p6190 = scmp.le.s32.totalorder 2, %s15
      // Predicated region
      $region49: #{tpu_custom_call.1} parent=5 // pred_check
        %p6191 = pneg %p6190
      $region50: #{tpu_custom_call.1} parent=5 // pred_check_branch
        %6193 = sbr.rel (%p6191) target = $region52
      $region51: #{tpu_custom_call.1} parent=5 // pred_region
        %s6194 = ssub.s32 %s15, 2
        // Predicated region
        $region53: #{tpu_custom_call.1} parent=51 // pred_check
          %p6195 = pneg %p175
        $region54: #{tpu_custom_call.1} parent=51 // pred_check_branch
          %6197 = sbr.rel (%p6195) target = $region56
        $region55: #{tpu_custom_call.1} parent=51 // pred_region
          %s6198 = sand.u32 %s160, 1
          %s6199 = scalar_lea.sflag [#allocation3], %s6198
          %s6200 = sand.u32 %s160, 1
          %s6201 = smul.addr %s6200, 256
          %s6202 = scalar_lea.vmem [#allocation2], %s6201
          %6203 = dma.done %s6199, 4096
        $region56: #{tpu_custom_call.1} parent=51 // pred_fallthru
          _
      $region52: #{tpu_custom_call.1} parent=5 // pred_fallthru
        _
    $region6: #{tpu_custom_call.1} parent=1 // loop_footer
      %s19 = sadd.s32 1, %s15
    $region7: #{tpu_custom_call.1} parent=1 // loop_footer_branch
      %14 = sbr.rel target = $region3
    $region8: #{tpu_custom_call.1} parent=1 // loop_exit
      _
    %6204 = vsyncpa [#allocation3], 1
    %s6205 = scalar_lea.sflag [#allocation3], 1
    %6206 = vsyncpa %s6205, 1

</llo_original>
